<compile_context>
chip_gen: v7x
topology: tpu7x:2x2x1
jax: 0.10.0
libtpu: 0.0.40
codegen_flags: <defaults>
</compile_context>

<pallas_src>
import functools

import jax
import jax.numpy as jnp
from jax.experimental import pallas as pl
from jax.experimental.pallas import tpu as pltpu

LANE = 128


def _round_up(x, m):
    return ((x + m - 1) // m) * m


def _pad_to(a, shape):
    return jnp.pad(a, [(0, t - s) for s, t in zip(a.shape, shape)])


def _vmem_cap_bytes():
    try:
        return int(pltpu.get_tpu_info().vmem_capacity_bytes)
    except Exception:
        return 64 << 20


# ---------------------------------------------------------------------------
# Fused temporal block + AvgPool1d(2) + BN partial sums (one sample per step).
#
# inputs  : x (1,L,C) bf16 | scale,shift (1,C) f32 | w1,w2 (Keff*C,C) bf16 |
#           b1,b2 (1,C) f32 | [wd (C,C) bf16, bd (1,C) f32]
# outputs : pooled (1,L//2,C) bf16 | stats (1,2,C) f32 (sum, sum-of-squares)
# scratch : xpad (base+L,C) bf16|f32 halo slab | [out (L,C) f32 on bf16 levels]
# ---------------------------------------------------------------------------
def _fused_block_kernel(*refs, k_eff, dilation, length, l2, base, tap0,
                        has_downsample, slab_bf16, use_slab_matmul):
    n_in = 9 if has_downsample else 7
    x_ref, scale_ref, shift_ref, w1_ref, b1_ref, w2_ref, b2_ref = refs[:7]
    wd_ref, bd_ref = (refs[7], refs[8]) if has_downsample else (None, None)
    pooled_ref, stats_ref = refs[n_in], refs[n_in + 1]
    scratch = refs[n_in + 2:]
    xpad_sc = scratch[0]
    # On bf16-slab levels the pre-pool output needs its own f32 buffer; on
    # f32-slab levels the halo slab is reused for it (no extra VMEM).
    out_sc = scratch[1] if slab_bf16 else xpad_sc
    pool_base = 0 if slab_bf16 else base

    c = x_ref.shape[-1]

    # Zero the causal left halo.  Done every step: with "parallel" megacore
    # sharding the scratch is per-core and program_id(0)==0 may never run on a
    # given core, so gating this on step 0 would be unsafe.
    if base > 0:
        xpad_sc[pl.ds(0, base), :] = jnp.zeros((base, c), xpad_sc.dtype)

    def fill(h):
        xpad_sc[pl.ds(base, length), :] = h.astype(xpad_sc.dtype)

    def conv(w_ref, b_ref):
        if use_slab_matmul and k_eff > 1:
            # All surviving taps gathered into one (L, Keff*C) slab ->
            # single MXU matmul with Keff*C contraction depth (v6e/v7x).
            taps = [xpad_sc[pl.ds(tap0 + jj * dilation, length), :]
                    for jj in range(k_eff)]
            slab = jnp.concatenate(taps, axis=-1).astype(jnp.bfloat16)
            acc = jnp.dot(slab, w_ref[...], preferred_element_type=jnp.float32)
        else:
            # v5e-friendly path: Keff accumulated C-deep matmuls, no slab copy
            # (spares the single vector-store slot).
            acc = None
            for jj in range(k_eff):
                tap = xpad_sc[pl.ds(tap0 + jj * dilation, length), :]
                part = jnp.dot(tap.astype(jnp.bfloat16),
                               w_ref[pl.ds(jj * c, c), :],
                               preferred_element_type=jnp.float32)
                acc = part if acc is None else acc + part
        return acc + b_ref[...]

    # Prologue: previous level's BatchNorm as a per-channel scale/shift.
    x = x_ref[0].astype(jnp.float32) * scale_ref[...] + shift_ref[...]
    if has_downsample:
        # Compute the residual immediately so x's f32 copy dies before conv1.
        res = (jnp.dot(x.astype(jnp.bfloat16), wd_ref[...],
                       preferred_element_type=jnp.float32) + bd_ref[...])

    fill(x)
    h1 = jnp.maximum(conv(w1_ref, b1_ref), 0.0)
    fill(h1)
    h2 = jnp.maximum(conv(w2_ref, b2_ref), 0.0)

    if not has_downsample:
        # Recompute x (cheap VPU) instead of keeping an (L,C) f32 value live
        # across both matmuls.
        res = x_ref[0].astype(jnp.float32) * scale_ref[...] + shift_ref[...]
    # TODO(synk): dropout is identity here (p=0.0 / eval-mode dropout).

    # Residual add + ReLU, then AvgPool1d(2) via stride-2 VMEM reads (f32).
    out_sc[pl.ds(pool_base, length), :] = jnp.maximum(h2 + res, 0.0)
    pooled = 0.5 * (out_sc[pl.ds(pool_base, l2, stride=2), :]
                    + out_sc[pl.ds(pool_base + 1, l2, stride=2), :])

    pooled_bf = pooled.astype(pooled_ref.dtype)
    pooled_ref[0] = pooled_bf

    # BN partial sums from the bf16-rounded activation the next level sees.
    pf = pooled_bf.astype(jnp.float32)
    stats_ref[0, pl.ds(0, 1), :] = jnp.sum(pf, axis=0, keepdims=True)
    stats_ref[0, pl.ds(1, 1), :] = jnp.sum(pf * pf, axis=0, keepdims=True)


def fused_temporal_block(x_nlc, scale, shift, p, *, use_slab_matmul=True):
    """(N,L,C_pad) bf16 -> (pooled (N,L//2,C_pad) bf16, stats (N,2,C_pad) f32)."""
    n, length, c = x_nlc.shape
    l2 = length // 2
    k, d = p["kernel_size"], p["dilation"]

    # Dead-tap skipping: tap j is all-zero (entirely in the halo) when
    # length <= (k-1-j)*d.  Surviving taps are a contiguous suffix.
    j0 = 0
    while length <= (k - 1 - j0) * d:
        j0 += 1
    k_eff = k - j0
    pad_eff = (k_eff - 1) * d                     # capped halo, always < length
    # bf16 slab only when every store/load row offset is even (packed dtype).
    slab_bf16 = (d % 2 == 0) or (k_eff == 1)
    # Tile-align the bf16 data-store offset (16 = bf16 sublane tile rows).
    base = _round_up(pad_eff, 16) if slab_bf16 else pad_eff
    tap0 = base - pad_eff

    has_ds = p["wd_flat"] is not None
    w1 = p["w1_flat"][j0 * c:] if j0 else p["w1_flat"]
    w2 = p["w2_flat"][j0 * c:] if j0 else p["w2_flat"]

    kern = functools.partial(
        _fused_block_kernel, k_eff=k_eff, dilation=d, length=length, l2=l2,
        base=base, tap0=tap0, has_downsample=has_ds, slab_bf16=slab_bf16,
        use_slab_matmul=use_slab_matmul)

    def _wspec(rows):
        # Weights are grid-invariant; single-buffer once they get big (v7x).
        if c >= 512:
            return pl.BlockSpec((rows, c), lambda b: (0, 0),
                                pipeline_mode=pl.Buffered(1))
        return pl.BlockSpec((rows, c), lambda b: (0, 0))

    ins = [x_nlc, scale, shift, w1, p["b1_pad"], w2, p["b2_pad"]]
    in_specs = [
        pl.BlockSpec((1, length, c), lambda b: (b, 0, 0)),
        pl.BlockSpec((1, c), lambda b: (0, 0)),
        pl.BlockSpec((1, c), lambda b: (0, 0)),
        _wspec(k_eff * c),
        pl.BlockSpec((1, c), lambda b: (0, 0)),
        _wspec(k_eff * c),
        pl.BlockSpec((1, c), lambda b: (0, 0)),
    ]
    if has_ds:
        ins += [p["wd_flat"], p["bd_pad"]]
        in_specs += [_wspec(c), pl.BlockSpec((1, c), lambda b: (0, 0))]

    scratch = [pltpu.VMEM((base + length, c),
                          jnp.bfloat16 if slab_bf16 else jnp.float32)]
    if slab_bf16:
        scratch.append(pltpu.VMEM((length, c), jnp.float32))

    # VMEM budget hint, clamped to the actual chip capacity (v6e 128 MiB,
    # v7x 64 MiB).  TODO(synk): add an L-tile grid axis with a (K-1)*dilation
    # halo for sequences whose working set exceeds this.
    wbuf = 1 if c >= 512 else 2
    wbytes = 2 * (k_eff * c * c * 2) + (c * c * 2 if has_ds else 0)
    est = (2 * (length * c * 2)                     # double-buffered input
           + 2 * (l2 * c * 2 + 2 * c * 4)           # double-buffered outputs
           + wbuf * wbytes                          # weights
           + (base + length) * c * (2 if slab_bf16 else 4)
           + (length * c * 4 if slab_bf16 else 0)   # pre-pool buffer
           + (4 + k_eff) * length * c * 4)          # live f32 values headroom
    vmem_limit = int(min(0.9 * _vmem_cap_bytes(), max(32 << 20, 2 * est)))

    return pl.pallas_call(
        kern,
        out_shape=(jax.ShapeDtypeStruct((n, l2, c), jnp.bfloat16),
                   jax.ShapeDtypeStruct((n, 2, c), jnp.float32)),
        grid=(n,),
        in_specs=in_specs,
        out_specs=(pl.BlockSpec((1, l2, c), lambda b: (b, 0, 0)),
                   pl.BlockSpec((1, 2, c), lambda b: (b, 0, 0))),
        scratch_shapes=scratch,
        compiler_params=pltpu.CompilerParams(
            dimension_semantics=("parallel",),
            vmem_limit_bytes=vmem_limit),
    )(*ins)


# ---------------------------------------------------------------------------
# Final-level BatchNorm apply with the channel un-padding fused in (all other
# levels have BN fused into the next level's prologue).
# ---------------------------------------------------------------------------
def _bn_apply_kernel(x_ref, scale_ref, shift_ref, o_ref, *, c_out):
    y = x_ref[0].astype(jnp.float32) * scale_ref[...] + shift_ref[...]
    o_ref[0] = y[:, :c_out]


def bn_apply(x_nlc, scale, shift, c_out):
    n, length, c = x_nlc.shape
    return pl.pallas_call(
        functools.partial(_bn_apply_kernel, c_out=c_out),
        out_shape=jax.ShapeDtypeStruct((n, length, c_out), jnp.float32),
        grid=(n,),
        in_specs=[pl.BlockSpec((1, length, c), lambda b: (b, 0, 0)),
                  pl.BlockSpec((1, c), lambda b: (0, 0)),
                  pl.BlockSpec((1, c), lambda b: (0, 0))],
        out_specs=pl.BlockSpec((1, length, c_out), lambda b: (b, 0, 0)),
        compiler_params=pltpu.CompilerParams(dimension_semantics=("parallel",)),
    )(x_nlc, scale, shift)


def _bn_affine(stats, count, gamma_pad, beta_pad, eps=1e-5):
    """Fold training-mode BatchNorm1d into per-channel scale/shift.
    Tiny (N,2,C) reduction -> plain JAX."""
    tot = jnp.sum(stats, axis=0)                               # (2, C)
    mean = tot[0] / count
    var = jnp.maximum(tot[1] / count - mean * mean, 0.0)       # biased variance
    scale = gamma_pad * jax.lax.rsqrt(var + eps)
    shift = beta_pad - mean * scale
    return scale.reshape(1, -1), shift.reshape(1, -1)


# ---------------------------------------------------------------------------
# Parameters (lane-padded, matmul weights pre-flattened to (K*C, C) bf16).
# ---------------------------------------------------------------------------
def init_params(key, input_channel, hidden_layers, kernel_size):
    maxc = max([input_channel] + list(hidden_layers))
    # 128 lanes for small models; multiples of 256 once real channels exceed
    # 128 so the 256-wide MXU (v6e/v7x) is filled.
    # TODO(synk): a VPU conv path would avoid the padding waste for tiny C.
    c_pad = _round_up(maxc, LANE) if maxc <= LANE else _round_up(maxc, 2 * LANE)
    params = []
    in_c = input_channel
    for i, out_c in enumerate(hidden_layers):
        key, k1, k2, k3, k4, k5, k6 = jax.random.split(key, 7)
        w1 = 0.1 * jax.random.normal(k1, (kernel_size, in_c, out_c), jnp.float32)
        b1 = 0.1 * jax.random.normal(k2, (out_c,), jnp.float32)
        w2 = 0.1 * jax.random.normal(k3, (kernel_size, out_c, out_c), jnp.float32)
        b2 = 0.1 * jax.random.normal(k4, (out_c,), jnp.float32)
        p = dict(
            dilation=2 ** i, kernel_size=kernel_size, in_c=in_c, out_c=out_c,
            w1_flat=_pad_to(w1, (kernel_size, c_pad, c_pad))
                    .reshape(kernel_size * c_pad, c_pad).astype(jnp.bfloat16),
            b1_pad=_pad_to(b1.reshape(1, -1), (1, c_pad)),
            w2_flat=_pad_to(w2, (kernel_size, c_pad, c_pad))
                    .reshape(kernel_size * c_pad, c_pad).astype(jnp.bfloat16),
            b2_pad=_pad_to(b2.reshape(1, -1), (1, c_pad)),
            wd_flat=None, bd_pad=None,
            gamma_pad=_pad_to(jnp.ones((out_c,), jnp.float32), (c_pad,)),
            beta_pad=jnp.zeros((c_pad,), jnp.float32),
        )
        if in_c != out_c:
            wd = 0.1 * jax.random.normal(k5, (in_c, out_c), jnp.float32)
            bd = 0.1 * jax.random.normal(k6, (out_c,), jnp.float32)
            p["wd_flat"] = _pad_to(wd, (c_pad, c_pad)).astype(jnp.bfloat16)
            p["bd_pad"] = _pad_to(bd.reshape(1, -1), (1, c_pad))
        params.append(p)
        in_c = out_c
    return params, c_pad


# ---------------------------------------------------------------------------
# Module-level forward.
# ---------------------------------------------------------------------------
def encoder_s_forward(x_ncl, params, c_pad, *, use_slab_matmul=True):
    n, _, length = x_ncl.shape
    # NCL -> NLC (channels on lanes), lane-pad once, bf16 activations.  Single
    # fused XLA transpose+pad+convert; folding it into level 0 is a TODO.
    h = _pad_to(jnp.transpose(x_ncl, (0, 2, 1)),
                (n, length, c_pad)).astype(jnp.bfloat16)

    scale = jnp.ones((1, c_pad), jnp.float32)    # level 0: no preceding BN
    shift = jnp.zeros((1, c_pad), jnp.float32)
    for p in params:
        h, stats = fused_temporal_block(h, scale, shift, p,
                                        use_slab_matmul=use_slab_matmul)
        length = length // 2
        # TODO(synk): BatchNorm uses training-mode batch statistics (module in
        # .train()); use running stats for eval() parity.
        scale, shift = _bn_affine(stats, n * length,
                                  p["gamma_pad"], p["beta_pad"])

    out = bn_apply(h, scale, shift, params[-1]["out_c"])   # BN + un-pad, f32
    # TODO(synk): fold this final NLC->NCL transpose into bn_apply if the tail
    # ever shows up in profiles (needs an in-kernel transpose).
    return jnp.transpose(out, (0, 2, 1))


# ---------------------------------------------------------------------------
# Pure-JAX reference mirroring the kernel's bf16 cast points (for validation).
# ---------------------------------------------------------------------------
def _ref_forward(x_ncl, params, c_pad):
    n, _, length = x_ncl.shape
    h = _pad_to(jnp.transpose(x_ncl, (0, 2, 1)),
                (n, length, c_pad)).astype(jnp.bfloat16)
    scale = jnp.ones((c_pad,), jnp.float32)
    shift = jnp.zeros((c_pad,), jnp.float32)
    for p in params:
        k, d = p["kernel_size"], p["dilation"]
        pad = (k - 1) * d
        x = h.astype(jnp.float32) * scale + shift

        def conv(hh, w_flat, b):
            hp = jnp.pad(hh.astype(jnp.bfloat16), ((0, 0), (pad, 0), (0, 0)))
            slab = jnp.concatenate([hp[:, j * d:j * d + length, :]
                                    for j in range(k)], axis=-1)
            y = jax.lax.dot_general(slab, w_flat, (((2,), (0,)), ((), ())),
                                    preferred_element_type=jnp.float32)
            return y + b

        h1 = jnp.maximum(conv(x, p["w1_flat"], p["b1_pad"]), 0.0)
        h2 = jnp.maximum(conv(h1, p["w2_flat"], p["b2_pad"]), 0.0)
        if p["wd_flat"] is not None:
            res = jax.lax.dot_general(x.astype(jnp.bfloat16), p["wd_flat"],
                                      (((2,), (0,)), ((), ())),
                                      preferred_element_type=jnp.float32)
            res = res + p["bd_pad"]
        else:
            res = x
        out = jnp.maximum(h2 + res, 0.0)
        l2 = length // 2
        pooled = 0.5 * (out[:, 0:2 * l2:2, :] + out[:, 1:2 * l2:2, :])
        pooled_bf = pooled.astype(jnp.bfloat16)
        pf = pooled_bf.astype(jnp.float32)
        count = n * l2
        mean = jnp.sum(pf, axis=(0, 1)) / count
        var = jnp.maximum(jnp.sum(pf * pf, axis=(0, 1)) / count - mean * mean, 0.0)
        scale = p["gamma_pad"] * jax.lax.rsqrt(var + 1e-5)
        shift = p["beta_pad"] - mean * scale
        h, length = pooled_bf, l2
    out = h.astype(jnp.float32) * scale + shift
    return jnp.transpose(out[:, :, :params[-1]["out_c"]], (0, 2, 1))


if __name__ == "__main__":
    # Small shapes: batch=2, input_channel=4, hidden_layers=[8, 8, 8],
    # kernel_size=3, seq_len=16, dropout=0.0.  Three levels exercise the f32
    # slab (d=1), the bf16 slab (d=2) and the dead-tap-skip (d=4, L=4) paths.
    key = jax.random.PRNGKey(0)
    key, kx = jax.random.split(key)
    x = jax.random.normal(kx, (2, 4, 16), jnp.float32)       # (N, C, L)

    params, c_pad = init_params(key, input_channel=4, hidden_layers=[8, 8, 8],
                                kernel_size=3)

    ref = _ref_forward(x, params, c_pad)

    for use_slab in (True, False):   # slab matmul (v6e/v7x) and the v5e path
        fwd = jax.jit(functools.partial(encoder_s_forward, params=params,
                                        c_pad=c_pad, use_slab_matmul=use_slab))
        out = jax.block_until_ready(fwd(x))
        # Three levels, each halves L: 16 -> 8 -> 4 -> 2; final channels = 8.
        assert out.shape == (2, 8, 2), out.shape
        assert bool(jnp.all(jnp.isfinite(out)))
        assert bool(jnp.allclose(out, ref, rtol=5e-2, atol=5e-2)), \
            float(jnp.max(jnp.abs(out - ref)))

    print("KERNEL_OK")
</pallas_src>

<mosaic_0001>
module attributes {stable_mosaic.version = 11 : i64} {
  func.func @_fused_block_kernel(%arg0: i32, %arg1: memref<1x8x128xbf16, #tpu.memory_space<vmem>>, %arg2: memref<1x128xf32, #tpu.memory_space<vmem>>, %arg3: memref<1x128xf32, #tpu.memory_space<vmem>>, %arg4: memref<384x128xbf16, #tpu.memory_space<vmem>>, %arg5: memref<1x128xf32, #tpu.memory_space<vmem>>, %arg6: memref<384x128xbf16, #tpu.memory_space<vmem>>, %arg7: memref<1x128xf32, #tpu.memory_space<vmem>>, %arg8: memref<1x4x128xbf16, #tpu.memory_space<vmem>>, %arg9: memref<1x2x128xf32, #tpu.memory_space<vmem>>, %arg10: memref<24x128xbf16, #tpu.memory_space<vmem>>, %arg11: memref<8x128xf32, #tpu.memory_space<vmem>>) attributes {dimension_semantics = [#tpu.dimension_semantics<parallel>], iteration_bounds = array<i64: 2>, scalar_prefetch = 0 : i64, scratch_operands = 2 : i64, tpu.core_type = #tpu.core_type<tc>, window_params = [{transform_indices = @transform_0, window_bounds = array<i64: 1, 8, 128>}, {pipeline_mode = #tpu.pipeline_mode<synchronous>, transform_indices = @transform_1, window_bounds = array<i64: 1, 128>}, {pipeline_mode = #tpu.pipeline_mode<synchronous>, transform_indices = @transform_2, window_bounds = array<i64: 1, 128>}, {pipeline_mode = #tpu.pipeline_mode<synchronous>, transform_indices = @transform_3, window_bounds = array<i64: 384, 128>}, {pipeline_mode = #tpu.pipeline_mode<synchronous>, transform_indices = @transform_4, window_bounds = array<i64: 1, 128>}, {pipeline_mode = #tpu.pipeline_mode<synchronous>, transform_indices = @transform_5, window_bounds = array<i64: 384, 128>}, {pipeline_mode = #tpu.pipeline_mode<synchronous>, transform_indices = @transform_6, window_bounds = array<i64: 1, 128>}, {transform_indices = @transform_7, window_bounds = array<i64: 1, 4, 128>}, {transform_indices = @transform_8, window_bounds = array<i64: 1, 2, 128>}]} {
    %cst = arith.constant 0.000000e+00 : bf16
    %0 = vector.broadcast %cst : bf16 to vector<16x128xbf16>
    %c0 = arith.constant 0 : index
    %c0_0 = arith.constant 0 : index
    %1 = vector.load %arg10[%c0, %c0_0] : memref<24x128xbf16, #tpu.memory_space<vmem>>, vector<16x128xbf16>
    tpu.vector_store %arg10[%c0, %c0_0], %0 {strides = array<i32>} : memref<24x128xbf16, #tpu.memory_space<vmem>>, vector<16x128xbf16>,
    %c0_1 = arith.constant 0 : index
    %c0_2 = arith.constant 0 : index
    %c0_3 = arith.constant 0 : index
    %2 = vector.load %arg1[%c0_1, %c0_2, %c0_3] : memref<1x8x128xbf16, #tpu.memory_space<vmem>>, vector<1x8x128xbf16>
    %3 = vector.shape_cast %2 : vector<1x8x128xbf16> to vector<8x128xbf16>
    %4 = arith.extf %3 : vector<8x128xbf16> to vector<8x128xf32>
    %c0_4 = arith.constant 0 : index
    %c0_5 = arith.constant 0 : index
    %5 = vector.load %arg2[%c0_4, %c0_5] : memref<1x128xf32, #tpu.memory_space<vmem>>, vector<1x128xf32>
    %6 = vector.broadcast %5 : vector<1x128xf32> to vector<8x128xf32>
    %7 = arith.mulf %4, %6 : vector<8x128xf32>
    %c0_6 = arith.constant 0 : index
    %c0_7 = arith.constant 0 : index
    %8 = vector.load %arg3[%c0_6, %c0_7] : memref<1x128xf32, #tpu.memory_space<vmem>>, vector<1x128xf32>
    %9 = vector.broadcast %8 : vector<1x128xf32> to vector<8x128xf32>
    %10 = arith.addf %7, %9 : vector<8x128xf32>
    %11 = arith.truncf %10 : vector<8x128xf32> to vector<8x128xbf16>
    %c16 = arith.constant 16 : index
    %c0_8 = arith.constant 0 : index
    %12 = vector.load %arg10[%c16, %c0_8] : memref<24x128xbf16, #tpu.memory_space<vmem>>, vector<8x128xbf16>
    tpu.vector_store %arg10[%c16, %c0_8], %11 {strides = array<i32>} : memref<24x128xbf16, #tpu.memory_space<vmem>>, vector<8x128xbf16>,
    %c12 = arith.constant 12 : index
    %c0_9 = arith.constant 0 : index
    %13 = vector.load %arg10[%c12, %c0_9] : memref<24x128xbf16, #tpu.memory_space<vmem>>, vector<8x128xbf16>
    %c14 = arith.constant 14 : index
    %c0_10 = arith.constant 0 : index
    %14 = vector.load %arg10[%c14, %c0_10] : memref<24x128xbf16, #tpu.memory_space<vmem>>, vector<8x128xbf16>
    %c16_11 = arith.constant 16 : index
    %c0_12 = arith.constant 0 : index
    %15 = vector.load %arg10[%c16_11, %c0_12] : memref<24x128xbf16, #tpu.memory_space<vmem>>, vector<8x128xbf16>
    %16 = tpu.concatenate %13, %14, %15 in 1 : vector<8x128xbf16>, vector<8x128xbf16>, vector<8x128xbf16> -> vector<8x384xbf16>
    %c0_13 = arith.constant 0 : index
    %c0_14 = arith.constant 0 : index
    %17 = vector.load %arg4[%c0_13, %c0_14] : memref<384x128xbf16, #tpu.memory_space<vmem>>, vector<384x128xbf16>
    %cst_15 = arith.constant dense<0.000000e+00> : vector<8x128xf32>
    %18 = tpu.matmul %16, %17, %cst_15 {dimension_numbers = #tpu.dot_dimension_numbers<[1], [0], [0], [1], [0, 0, 1, 1], [], []>} : vector<8x384xbf16>, vector<384x128xbf16>, vector<8x128xf32> -> vector<8x128xf32>
    %c0_16 = arith.constant 0 : index
    %c0_17 = arith.constant 0 : index
    %19 = vector.load %arg5[%c0_16, %c0_17] : memref<1x128xf32, #tpu.memory_space<vmem>>, vector<1x128xf32>
    %20 = vector.broadcast %19 : vector<1x128xf32> to vector<8x128xf32>
    %21 = arith.addf %18, %20 : vector<8x128xf32>
    %cst_18 = arith.constant 0.000000e+00 : f32
    %22 = vector.broadcast %cst_18 : f32 to vector<8x128xf32>
    %23 = arith.maximumf %21, %22 : vector<8x128xf32>
    %24 = arith.truncf %23 : vector<8x128xf32> to vector<8x128xbf16>
    %c16_19 = arith.constant 16 : index
    %c0_20 = arith.constant 0 : index
    %25 = vector.load %arg10[%c16_19, %c0_20] : memref<24x128xbf16, #tpu.memory_space<vmem>>, vector<8x128xbf16>
    tpu.vector_store %arg10[%c16_19, %c0_20], %24 {strides = array<i32>} : memref<24x128xbf16, #tpu.memory_space<vmem>>, vector<8x128xbf16>,
    %c12_21 = arith.constant 12 : index
    %c0_22 = arith.constant 0 : index
    %26 = vector.load %arg10[%c12_21, %c0_22] : memref<24x128xbf16, #tpu.memory_space<vmem>>, vector<8x128xbf16>
    %c14_23 = arith.constant 14 : index
    %c0_24 = arith.constant 0 : index
    %27 = vector.load %arg10[%c14_23, %c0_24] : memref<24x128xbf16, #tpu.memory_space<vmem>>, vector<8x128xbf16>
    %c16_25 = arith.constant 16 : index
    %c0_26 = arith.constant 0 : index
    %28 = vector.load %arg10[%c16_25, %c0_26] : memref<24x128xbf16, #tpu.memory_space<vmem>>, vector<8x128xbf16>
    %29 = tpu.concatenate %26, %27, %28 in 1 : vector<8x128xbf16>, vector<8x128xbf16>, vector<8x128xbf16> -> vector<8x384xbf16>
    %c0_27 = arith.constant 0 : index
    %c0_28 = arith.constant 0 : index
    %30 = vector.load %arg6[%c0_27, %c0_28] : memref<384x128xbf16, #tpu.memory_space<vmem>>, vector<384x128xbf16>
    %cst_29 = arith.constant dense<0.000000e+00> : vector<8x128xf32>
    %31 = tpu.matmul %29, %30, %cst_29 {dimension_numbers = #tpu.dot_dimension_numbers<[1], [0], [0], [1], [0, 0, 1, 1], [], []>} : vector<8x384xbf16>, vector<384x128xbf16>, vector<8x128xf32> -> vector<8x128xf32>
    %c0_30 = arith.constant 0 : index
    %c0_31 = arith.constant 0 : index
    %32 = vector.load %arg7[%c0_30, %c0_31] : memref<1x128xf32, #tpu.memory_space<vmem>>, vector<1x128xf32>
    %33 = vector.broadcast %32 : vector<1x128xf32> to vector<8x128xf32>
    %34 = arith.addf %31, %33 : vector<8x128xf32>
    %cst_32 = arith.constant 0.000000e+00 : f32
    %35 = vector.broadcast %cst_32 : f32 to vector<8x128xf32>
    %36 = arith.maximumf %34, %35 : vector<8x128xf32>
    %c0_33 = arith.constant 0 : index
    %c0_34 = arith.constant 0 : index
    %c0_35 = arith.constant 0 : index
    %37 = vector.load %arg1[%c0_33, %c0_34, %c0_35] : memref<1x8x128xbf16, #tpu.memory_space<vmem>>, vector<1x8x128xbf16>
    %38 = vector.shape_cast %37 : vector<1x8x128xbf16> to vector<8x128xbf16>
    %39 = arith.extf %38 : vector<8x128xbf16> to vector<8x128xf32>
    %c0_36 = arith.constant 0 : index
    %c0_37 = arith.constant 0 : index
    %40 = vector.load %arg2[%c0_36, %c0_37] : memref<1x128xf32, #tpu.memory_space<vmem>>, vector<1x128xf32>
    %41 = vector.broadcast %40 : vector<1x128xf32> to vector<8x128xf32>
    %42 = arith.mulf %39, %41 : vector<8x128xf32>
    %c0_38 = arith.constant 0 : index
    %c0_39 = arith.constant 0 : index
    %43 = vector.load %arg3[%c0_38, %c0_39] : memref<1x128xf32, #tpu.memory_space<vmem>>, vector<1x128xf32>
    %44 = vector.broadcast %43 : vector<1x128xf32> to vector<8x128xf32>
    %45 = arith.addf %42, %44 : vector<8x128xf32>
    %46 = arith.addf %36, %45 : vector<8x128xf32>
    %cst_40 = arith.constant 0.000000e+00 : f32
    %47 = vector.broadcast %cst_40 : f32 to vector<8x128xf32>
    %48 = arith.maximumf %46, %47 : vector<8x128xf32>
    %c0_41 = arith.constant 0 : index
    %c0_42 = arith.constant 0 : index
    %49 = vector.load %arg11[%c0_41, %c0_42] : memref<8x128xf32, #tpu.memory_space<vmem>>, vector<8x128xf32>
    tpu.vector_store %arg11[%c0_41, %c0_42], %48 {strides = array<i32>} : memref<8x128xf32, #tpu.memory_space<vmem>>, vector<8x128xf32>,
    %c0_43 = arith.constant 0 : index
    %c0_44 = arith.constant 0 : index
    %50 = tpu.strided_load %arg11[%c0_43, %c0_44] {strides = array<i32: 2, 1>} : memref<8x128xf32, #tpu.memory_space<vmem>>, vector<4x128xf32>
    %c1 = arith.constant 1 : index
    %c0_45 = arith.constant 0 : index
    %51 = tpu.strided_load %arg11[%c1, %c0_45] {strides = array<i32: 2, 1>} : memref<8x128xf32, #tpu.memory_space<vmem>>, vector<4x128xf32>
    %52 = arith.addf %50, %51 : vector<4x128xf32>
    %cst_46 = arith.constant 5.000000e-01 : f32
    %53 = vector.broadcast %cst_46 : f32 to vector<4x128xf32>
    %54 = arith.mulf %53, %52 : vector<4x128xf32>
    %55 = arith.truncf %54 : vector<4x128xf32> to vector<4x128xbf16>
    %c0_47 = arith.constant 0 : index
    %c0_48 = arith.constant 0 : index
    %c0_49 = arith.constant 0 : index
    %56 = vector.load %arg8[%c0_47, %c0_48, %c0_49] : memref<1x4x128xbf16, #tpu.memory_space<vmem>>, vector<1x4x128xbf16>
    %57 = vector.shape_cast %56 : vector<1x4x128xbf16> to vector<4x128xbf16>
    %58 = vector.shape_cast %55 : vector<4x128xbf16> to vector<1x4x128xbf16>
    tpu.vector_store %arg8[%c0_47, %c0_48, %c0_49], %58 {strides = array<i32>} : memref<1x4x128xbf16, #tpu.memory_space<vmem>>, vector<1x4x128xbf16>,
    %59 = arith.extf %55 : vector<4x128xbf16> to vector<4x128xf32>
    %cst_50 = arith.constant dense<0.000000e+00> : vector<128xf32>
    %60 = vector.multi_reduction <add>, %59, %cst_50 [0] : vector<4x128xf32> to vector<128xf32>
    %61 = vector.shape_cast %60 : vector<128xf32> to vector<1x128xf32>
    %c0_51 = arith.constant 0 : index
    %c0_52 = arith.constant 0 : index
    %c0_53 = arith.constant 0 : index
    %62 = vector.load %arg9[%c0_51, %c0_52, %c0_53] : memref<1x2x128xf32, #tpu.memory_space<vmem>>, vector<1x1x128xf32>
    %63 = vector.shape_cast %62 : vector<1x1x128xf32> to vector<1x128xf32>
    %64 = vector.shape_cast %61 : vector<1x128xf32> to vector<1x1x128xf32>
    tpu.vector_store %arg9[%c0_51, %c0_52, %c0_53], %64 {strides = array<i32>} : memref<1x2x128xf32, #tpu.memory_space<vmem>>, vector<1x1x128xf32>,
    %65 = arith.mulf %59, %59 : vector<4x128xf32>
    %cst_54 = arith.constant dense<0.000000e+00> : vector<128xf32>
    %66 = vector.multi_reduction <add>, %65, %cst_54 [0] : vector<4x128xf32> to vector<128xf32>
    %67 = vector.shape_cast %66 : vector<128xf32> to vector<1x128xf32>
    %c0_55 = arith.constant 0 : index
    %c1_56 = arith.constant 1 : index
    %c0_57 = arith.constant 0 : index
    %68 = vector.load %arg9[%c0_55, %c1_56, %c0_57] : memref<1x2x128xf32, #tpu.memory_space<vmem>>, vector<1x1x128xf32>
    %69 = vector.shape_cast %68 : vector<1x1x128xf32> to vector<1x128xf32>
    %70 = vector.shape_cast %67 : vector<1x128xf32> to vector<1x1x128xf32>
    tpu.vector_store %arg9[%c0_55, %c1_56, %c0_57], %70 {strides = array<i32>} : memref<1x2x128xf32, #tpu.memory_space<vmem>>, vector<1x1x128xf32>,
    return
  }
  func.func @transform_0(%arg0: i32) -> (i32, i32, i32) {
    %c0_i32 = arith.constant 0 : i32
    %c0_i32_0 = arith.constant 0 : i32
    %c0_i32_1 = arith.constant 0 : i32
    return %arg0, %c0_i32, %c0_i32_0 : i32, i32, i32
  }
  func.func @transform_1(%arg0: i32) -> (i32, i32) {
    %c0_i32 = arith.constant 0 : i32
    %c0_i32_0 = arith.constant 0 : i32
    %c0_i32_1 = arith.constant 0 : i32
    return %c0_i32, %c0_i32_0 : i32, i32
  }
  func.func @transform_2(%arg0: i32) -> (i32, i32) {
    %c0_i32 = arith.constant 0 : i32
    %c0_i32_0 = arith.constant 0 : i32
    %c0_i32_1 = arith.constant 0 : i32
    return %c0_i32, %c0_i32_0 : i32, i32
  }
  func.func @transform_3(%arg0: i32) -> (i32, i32) {
    %c0_i32 = arith.constant 0 : i32
    %c0_i32_0 = arith.constant 0 : i32
    %c0_i32_1 = arith.constant 0 : i32
    return %c0_i32, %c0_i32_0 : i32, i32
  }
  func.func @transform_4(%arg0: i32) -> (i32, i32) {
    %c0_i32 = arith.constant 0 : i32
    %c0_i32_0 = arith.constant 0 : i32
    %c0_i32_1 = arith.constant 0 : i32
    return %c0_i32, %c0_i32_0 : i32, i32
  }
  func.func @transform_5(%arg0: i32) -> (i32, i32) {
    %c0_i32 = arith.constant 0 : i32
    %c0_i32_0 = arith.constant 0 : i32
    %c0_i32_1 = arith.constant 0 : i32
    return %c0_i32, %c0_i32_0 : i32, i32
  }
  func.func @transform_6(%arg0: i32) -> (i32, i32) {
    %c0_i32 = arith.constant 0 : i32
    %c0_i32_0 = arith.constant 0 : i32
    %c0_i32_1 = arith.constant 0 : i32
    return %c0_i32, %c0_i32_0 : i32, i32
  }
  func.func @transform_7(%arg0: i32) -> (i32, i32, i32) {
    %c0_i32 = arith.constant 0 : i32
    %c0_i32_0 = arith.constant 0 : i32
    %c0_i32_1 = arith.constant 0 : i32
    return %arg0, %c0_i32, %c0_i32_0 : i32, i32, i32
  }
  func.func @transform_8(%arg0: i32) -> (i32, i32, i32) {
    %c0_i32 = arith.constant 0 : i32
    %c0_i32_0 = arith.constant 0 : i32
    %c0_i32_1 = arith.constant 0 : i32
    return %arg0, %c0_i32, %c0_i32_0 : i32, i32, i32
  }
}

module attributes {stable_mosaic.version = 11 : i64} {
  func.func @_fused_block_kernel(%arg0: i32, %arg1: memref<1x16x128xbf16, #tpu.memory_space<vmem>>, %arg2: memref<1x128xf32, #tpu.memory_space<vmem>>, %arg3: memref<1x128xf32, #tpu.memory_space<vmem>>, %arg4: memref<384x128xbf16, #tpu.memory_space<vmem>>, %arg5: memref<1x128xf32, #tpu.memory_space<vmem>>, %arg6: memref<384x128xbf16, #tpu.memory_space<vmem>>, %arg7: memref<1x128xf32, #tpu.memory_space<vmem>>, %arg8: memref<128x128xbf16, #tpu.memory_space<vmem>>, %arg9: memref<1x128xf32, #tpu.memory_space<vmem>>, %arg10: memref<1x8x128xbf16, #tpu.memory_space<vmem>>, %arg11: memref<1x2x128xf32, #tpu.memory_space<vmem>>, %arg12: memref<18x128xf32, #tpu.memory_space<vmem>>) attributes {dimension_semantics = [#tpu.dimension_semantics<parallel>], iteration_bounds = array<i64: 2>, scalar_prefetch = 0 : i64, scratch_operands = 1 : i64, tpu.core_type = #tpu.core_type<tc>, window_params = [{transform_indices = @transform_0, window_bounds = array<i64: 1, 16, 128>}, {pipeline_mode = #tpu.pipeline_mode<synchronous>, transform_indices = @transform_1, window_bounds = array<i64: 1, 128>}, {pipeline_mode = #tpu.pipeline_mode<synchronous>, transform_indices = @transform_2, window_bounds = array<i64: 1, 128>}, {pipeline_mode = #tpu.pipeline_mode<synchronous>, transform_indices = @transform_3, window_bounds = array<i64: 384, 128>}, {pipeline_mode = #tpu.pipeline_mode<synchronous>, transform_indices = @transform_4, window_bounds = array<i64: 1, 128>}, {pipeline_mode = #tpu.pipeline_mode<synchronous>, transform_indices = @transform_5, window_bounds = array<i64: 384, 128>}, {pipeline_mode = #tpu.pipeline_mode<synchronous>, transform_indices = @transform_6, window_bounds = array<i64: 1, 128>}, {pipeline_mode = #tpu.pipeline_mode<synchronous>, transform_indices = @transform_7, window_bounds = array<i64: 128, 128>}, {pipeline_mode = #tpu.pipeline_mode<synchronous>, transform_indices = @transform_8, window_bounds = array<i64: 1, 128>}, {transform_indices = @transform_9, window_bounds = array<i64: 1, 8, 128>}, {transform_indices = @transform_10, window_bounds = array<i64: 1, 2, 128>}]} {
    %cst = arith.constant 0.000000e+00 : f32
    %0 = vector.broadcast %cst : f32 to vector<2x128xf32>
    %c0 = arith.constant 0 : index
    %c0_0 = arith.constant 0 : index
    %1 = vector.load %arg12[%c0, %c0_0] : memref<18x128xf32, #tpu.memory_space<vmem>>, vector<2x128xf32>
    tpu.vector_store %arg12[%c0, %c0_0], %0 {strides = array<i32>} : memref<18x128xf32, #tpu.memory_space<vmem>>, vector<2x128xf32>,
    %c0_1 = arith.constant 0 : index
    %c0_2 = arith.constant 0 : index
    %c0_3 = arith.constant 0 : index
    %2 = vector.load %arg1[%c0_1, %c0_2, %c0_3] : memref<1x16x128xbf16, #tpu.memory_space<vmem>>, vector<1x16x128xbf16>
    %3 = vector.shape_cast %2 : vector<1x16x128xbf16> to vector<16x128xbf16>
    %4 = arith.extf %3 : vector<16x128xbf16> to vector<16x128xf32>
    %c0_4 = arith.constant 0 : index
    %c0_5 = arith.constant 0 : index
    %5 = vector.load %arg2[%c0_4, %c0_5] : memref<1x128xf32, #tpu.memory_space<vmem>>, vector<1x128xf32>
    %6 = vector.broadcast %5 : vector<1x128xf32> to vector<16x128xf32>
    %7 = arith.mulf %4, %6 : vector<16x128xf32>
    %c0_6 = arith.constant 0 : index
    %c0_7 = arith.constant 0 : index
    %8 = vector.load %arg3[%c0_6, %c0_7] : memref<1x128xf32, #tpu.memory_space<vmem>>, vector<1x128xf32>
    %9 = vector.broadcast %8 : vector<1x128xf32> to vector<16x128xf32>
    %10 = arith.addf %7, %9 : vector<16x128xf32>
    %11 = arith.truncf %10 : vector<16x128xf32> to vector<16x128xbf16>
    %c0_8 = arith.constant 0 : index
    %c0_9 = arith.constant 0 : index
    %12 = vector.load %arg8[%c0_8, %c0_9] : memref<128x128xbf16, #tpu.memory_space<vmem>>, vector<128x128xbf16>
    %cst_10 = arith.constant dense<0.000000e+00> : vector<16x128xf32>
    %13 = tpu.matmul %11, %12, %cst_10 {dimension_numbers = #tpu.dot_dimension_numbers<[1], [0], [0], [1], [0, 0, 1, 1], [], []>} : vector<16x128xbf16>, vector<128x128xbf16>, vector<16x128xf32> -> vector<16x128xf32>
    %c0_11 = arith.constant 0 : index
    %c0_12 = arith.constant 0 : index
    %14 = vector.load %arg9[%c0_11, %c0_12] : memref<1x128xf32, #tpu.memory_space<vmem>>, vector<1x128xf32>
    %15 = vector.broadcast %14 : vector<1x128xf32> to vector<16x128xf32>
    %16 = arith.addf %13, %15 : vector<16x128xf32>
    %c2 = arith.constant 2 : index
    %c0_13 = arith.constant 0 : index
    %17 = vector.load %arg12[%c2, %c0_13] : memref<18x128xf32, #tpu.memory_space<vmem>>, vector<16x128xf32>
    tpu.vector_store %arg12[%c2, %c0_13], %10 {strides = array<i32>} : memref<18x128xf32, #tpu.memory_space<vmem>>, vector<16x128xf32>,
    %c0_14 = arith.constant 0 : index
    %c0_15 = arith.constant 0 : index
    %18 = vector.load %arg12[%c0_14, %c0_15] : memref<18x128xf32, #tpu.memory_space<vmem>>, vector<16x128xf32>
    %c1 = arith.constant 1 : index
    %c0_16 = arith.constant 0 : index
    %19 = vector.load %arg12[%c1, %c0_16] : memref<18x128xf32, #tpu.memory_space<vmem>>, vector<16x128xf32>
    %c2_17 = arith.constant 2 : index
    %c0_18 = arith.constant 0 : index
    %20 = vector.load %arg12[%c2_17, %c0_18] : memref<18x128xf32, #tpu.memory_space<vmem>>, vector<16x128xf32>
    %21 = tpu.concatenate %18, %19, %20 in 1 : vector<16x128xf32>, vector<16x128xf32>, vector<16x128xf32> -> vector<16x384xf32>
    %22 = arith.truncf %21 : vector<16x384xf32> to vector<16x384xbf16>
    %c0_19 = arith.constant 0 : index
    %c0_20 = arith.constant 0 : index
    %23 = vector.load %arg4[%c0_19, %c0_20] : memref<384x128xbf16, #tpu.memory_space<vmem>>, vector<384x128xbf16>
    %cst_21 = arith.constant dense<0.000000e+00> : vector<16x128xf32>
    %24 = tpu.matmul %22, %23, %cst_21 {dimension_numbers = #tpu.dot_dimension_numbers<[1], [0], [0], [1], [0, 0, 1, 1], [], []>} : vector<16x384xbf16>, vector<384x128xbf16>, vector<16x128xf32> -> vector<16x128xf32>
    %c0_22 = arith.constant 0 : index
    %c0_23 = arith.constant 0 : index
    %25 = vector.load %arg5[%c0_22, %c0_23] : memref<1x128xf32, #tpu.memory_space<vmem>>, vector<1x128xf32>
    %26 = vector.broadcast %25 : vector<1x128xf32> to vector<16x128xf32>
    %27 = arith.addf %24, %26 : vector<16x128xf32>
    %cst_24 = arith.constant 0.000000e+00 : f32
    %28 = vector.broadcast %cst_24 : f32 to vector<16x128xf32>
    %29 = arith.maximumf %27, %28 : vector<16x128xf32>
    %c2_25 = arith.constant 2 : index
    %c0_26 = arith.constant 0 : index
    %30 = vector.load %arg12[%c2_25, %c0_26] : memref<18x128xf32, #tpu.memory_space<vmem>>, vector<16x128xf32>
    tpu.vector_store %arg12[%c2_25, %c0_26], %29 {strides = array<i32>} : memref<18x128xf32, #tpu.memory_space<vmem>>, vector<16x128xf32>,
    %c0_27 = arith.constant 0 : index
    %c0_28 = arith.constant 0 : index
    %31 = vector.load %arg12[%c0_27, %c0_28] : memref<18x128xf32, #tpu.memory_space<vmem>>, vector<16x128xf32>
    %c1_29 = arith.constant 1 : index
    %c0_30 = arith.constant 0 : index
    %32 = vector.load %arg12[%c1_29, %c0_30] : memref<18x128xf32, #tpu.memory_space<vmem>>, vector<16x128xf32>
    %c2_31 = arith.constant 2 : index
    %c0_32 = arith.constant 0 : index
    %33 = vector.load %arg12[%c2_31, %c0_32] : memref<18x128xf32, #tpu.memory_space<vmem>>, vector<16x128xf32>
    %34 = tpu.concatenate %31, %32, %33 in 1 : vector<16x128xf32>, vector<16x128xf32>, vector<16x128xf32> -> vector<16x384xf32>
    %35 = arith.truncf %34 : vector<16x384xf32> to vector<16x384xbf16>
    %c0_33 = arith.constant 0 : index
    %c0_34 = arith.constant 0 : index
    %36 = vector.load %arg6[%c0_33, %c0_34] : memref<384x128xbf16, #tpu.memory_space<vmem>>, vector<384x128xbf16>
    %cst_35 = arith.constant dense<0.000000e+00> : vector<16x128xf32>
    %37 = tpu.matmul %35, %36, %cst_35 {dimension_numbers = #tpu.dot_dimension_numbers<[1], [0], [0], [1], [0, 0, 1, 1], [], []>} : vector<16x384xbf16>, vector<384x128xbf16>, vector<16x128xf32> -> vector<16x128xf32>
    %c0_36 = arith.constant 0 : index
    %c0_37 = arith.constant 0 : index
    %38 = vector.load %arg7[%c0_36, %c0_37] : memref<1x128xf32, #tpu.memory_space<vmem>>, vector<1x128xf32>
    %39 = vector.broadcast %38 : vector<1x128xf32> to vector<16x128xf32>
    %40 = arith.addf %37, %39 : vector<16x128xf32>
    %cst_38 = arith.constant 0.000000e+00 : f32
    %41 = vector.broadcast %cst_38 : f32 to vector<16x128xf32>
    %42 = arith.maximumf %40, %41 : vector<16x128xf32>
    %43 = arith.addf %42, %16 : vector<16x128xf32>
    %cst_39 = arith.constant 0.000000e+00 : f32
    %44 = vector.broadcast %cst_39 : f32 to vector<16x128xf32>
    %45 = arith.maximumf %43, %44 : vector<16x128xf32>
    %c2_40 = arith.constant 2 : index
    %c0_41 = arith.constant 0 : index
    %46 = vector.load %arg12[%c2_40, %c0_41] : memref<18x128xf32, #tpu.memory_space<vmem>>, vector<16x128xf32>
    tpu.vector_store %arg12[%c2_40, %c0_41], %45 {strides = array<i32>} : memref<18x128xf32, #tpu.memory_space<vmem>>, vector<16x128xf32>,
    %c2_42 = arith.constant 2 : index
    %c0_43 = arith.constant 0 : index
    %47 = tpu.strided_load %arg12[%c2_42, %c0_43] {strides = array<i32: 2, 1>} : memref<18x128xf32, #tpu.memory_space<vmem>>, vector<8x128xf32>
    %c3 = arith.constant 3 : index
    %c0_44 = arith.constant 0 : index
    %48 = tpu.strided_load %arg12[%c3, %c0_44] {strides = array<i32: 2, 1>} : memref<18x128xf32, #tpu.memory_space<vmem>>, vector<8x128xf32>
    %49 = arith.addf %47, %48 : vector<8x128xf32>
    %cst_45 = arith.constant 5.000000e-01 : f32
    %50 = vector.broadcast %cst_45 : f32 to vector<8x128xf32>
    %51 = arith.mulf %50, %49 : vector<8x128xf32>
    %52 = arith.truncf %51 : vector<8x128xf32> to vector<8x128xbf16>
    %c0_46 = arith.constant 0 : index
    %c0_47 = arith.constant 0 : index
    %c0_48 = arith.constant 0 : index
    %53 = vector.load %arg10[%c0_46, %c0_47, %c0_48] : memref<1x8x128xbf16, #tpu.memory_space<vmem>>, vector<1x8x128xbf16>
    %54 = vector.shape_cast %53 : vector<1x8x128xbf16> to vector<8x128xbf16>
    %55 = vector.shape_cast %52 : vector<8x128xbf16> to vector<1x8x128xbf16>
    tpu.vector_store %arg10[%c0_46, %c0_47, %c0_48], %55 {strides = array<i32>} : memref<1x8x128xbf16, #tpu.memory_space<vmem>>, vector<1x8x128xbf16>,
    %56 = arith.extf %52 : vector<8x128xbf16> to vector<8x128xf32>
    %cst_49 = arith.constant dense<0.000000e+00> : vector<128xf32>
    %57 = vector.multi_reduction <add>, %56, %cst_49 [0] : vector<8x128xf32> to vector<128xf32>
    %58 = vector.shape_cast %57 : vector<128xf32> to vector<1x128xf32>
    %c0_50 = arith.constant 0 : index
    %c0_51 = arith.constant 0 : index
    %c0_52 = arith.constant 0 : index
    %59 = vector.load %arg11[%c0_50, %c0_51, %c0_52] : memref<1x2x128xf32, #tpu.memory_space<vmem>>, vector<1x1x128xf32>
    %60 = vector.shape_cast %59 : vector<1x1x128xf32> to vector<1x128xf32>
    %61 = vector.shape_cast %58 : vector<1x128xf32> to vector<1x1x128xf32>
    tpu.vector_store %arg11[%c0_50, %c0_51, %c0_52], %61 {strides = array<i32>} : memref<1x2x128xf32, #tpu.memory_space<vmem>>, vector<1x1x128xf32>,
    %62 = arith.mulf %56, %56 : vector<8x128xf32>
    %cst_53 = arith.constant dense<0.000000e+00> : vector<128xf32>
    %63 = vector.multi_reduction <add>, %62, %cst_53 [0] : vector<8x128xf32> to vector<128xf32>
    %64 = vector.shape_cast %63 : vector<128xf32> to vector<1x128xf32>
    %c0_54 = arith.constant 0 : index
    %c1_55 = arith.constant 1 : index
    %c0_56 = arith.constant 0 : index
    %65 = vector.load %arg11[%c0_54, %c1_55, %c0_56] : memref<1x2x128xf32, #tpu.memory_space<vmem>>, vector<1x1x128xf32>
    %66 = vector.shape_cast %65 : vector<1x1x128xf32> to vector<1x128xf32>
    %67 = vector.shape_cast %64 : vector<1x128xf32> to vector<1x1x128xf32>
    tpu.vector_store %arg11[%c0_54, %c1_55, %c0_56], %67 {strides = array<i32>} : memref<1x2x128xf32, #tpu.memory_space<vmem>>, vector<1x1x128xf32>,
    return
  }
  func.func @transform_0(%arg0: i32) -> (i32, i32, i32) {
    %c0_i32 = arith.constant 0 : i32
    %c0_i32_0 = arith.constant 0 : i32
    %c0_i32_1 = arith.constant 0 : i32
    return %arg0, %c0_i32, %c0_i32_0 : i32, i32, i32
  }
  func.func @transform_1(%arg0: i32) -> (i32, i32) {
    %c0_i32 = arith.constant 0 : i32
    %c0_i32_0 = arith.constant 0 : i32
    %c0_i32_1 = arith.constant 0 : i32
    return %c0_i32, %c0_i32_0 : i32, i32
  }
  func.func @transform_2(%arg0: i32) -> (i32, i32) {
    %c0_i32 = arith.constant 0 : i32
    %c0_i32_0 = arith.constant 0 : i32
    %c0_i32_1 = arith.constant 0 : i32
    return %c0_i32, %c0_i32_0 : i32, i32
  }
  func.func @transform_3(%arg0: i32) -> (i32, i32) {
    %c0_i32 = arith.constant 0 : i32
    %c0_i32_0 = arith.constant 0 : i32
    %c0_i32_1 = arith.constant 0 : i32
    return %c0_i32, %c0_i32_0 : i32, i32
  }
  func.func @transform_4(%arg0: i32) -> (i32, i32) {
    %c0_i32 = arith.constant 0 : i32
    %c0_i32_0 = arith.constant 0 : i32
    %c0_i32_1 = arith.constant 0 : i32
    return %c0_i32, %c0_i32_0 : i32, i32
  }
  func.func @transform_5(%arg0: i32) -> (i32, i32) {
    %c0_i32 = arith.constant 0 : i32
    %c0_i32_0 = arith.constant 0 : i32
    %c0_i32_1 = arith.constant 0 : i32
    return %c0_i32, %c0_i32_0 : i32, i32
  }
  func.func @transform_6(%arg0: i32) -> (i32, i32) {
    %c0_i32 = arith.constant 0 : i32
    %c0_i32_0 = arith.constant 0 : i32
    %c0_i32_1 = arith.constant 0 : i32
    return %c0_i32, %c0_i32_0 : i32, i32
  }
  func.func @transform_7(%arg0: i32) -> (i32, i32) {
    %c0_i32 = arith.constant 0 : i32
    %c0_i32_0 = arith.constant 0 : i32
    %c0_i32_1 = arith.constant 0 : i32
    return %c0_i32, %c0_i32_0 : i32, i32
  }
  func.func @transform_8(%arg0: i32) -> (i32, i32) {
    %c0_i32 = arith.constant 0 : i32
    %c0_i32_0 = arith.constant 0 : i32
    %c0_i32_1 = arith.constant 0 : i32
    return %c0_i32, %c0_i32_0 : i32, i32
  }
  func.func @transform_9(%arg0: i32) -> (i32, i32, i32) {
    %c0_i32 = arith.constant 0 : i32
    %c0_i32_0 = arith.constant 0 : i32
    %c0_i32_1 = arith.constant 0 : i32
    return %arg0, %c0_i32, %c0_i32_0 : i32, i32, i32
  }
  func.func @transform_10(%arg0: i32) -> (i32, i32, i32) {
    %c0_i32 = arith.constant 0 : i32
    %c0_i32_0 = arith.constant 0 : i32
    %c0_i32_1 = arith.constant 0 : i32
    return %arg0, %c0_i32, %c0_i32_0 : i32, i32, i32
  }
}

module attributes {stable_mosaic.version = 11 : i64} {
  func.func @_bn_apply_kernel(%arg0: i32, %arg1: memref<1x2x128xbf16, #tpu.memory_space<vmem>>, %arg2: memref<1x128xf32, #tpu.memory_space<vmem>>, %arg3: memref<1x128xf32, #tpu.memory_space<vmem>>, %arg4: memref<1x2x8xf32, #tpu.memory_space<vmem>>) attributes {dimension_semantics = [#tpu.dimension_semantics<parallel>], iteration_bounds = array<i64: 2>, scalar_prefetch = 0 : i64, scratch_operands = 0 : i64, tpu.core_type = #tpu.core_type<tc>, window_params = [{transform_indices = @transform_0, window_bounds = array<i64: 1, 2, 128>}, {pipeline_mode = #tpu.pipeline_mode<synchronous>, transform_indices = @transform_1, window_bounds = array<i64: 1, 128>}, {pipeline_mode = #tpu.pipeline_mode<synchronous>, transform_indices = @transform_2, window_bounds = array<i64: 1, 128>}, {transform_indices = @transform_3, window_bounds = array<i64: 1, 2, 8>}]} {
    %c0 = arith.constant 0 : index
    %c0_0 = arith.constant 0 : index
    %c0_1 = arith.constant 0 : index
    %0 = vector.load %arg1[%c0, %c0_0, %c0_1] : memref<1x2x128xbf16, #tpu.memory_space<vmem>>, vector<1x2x128xbf16>
    %1 = vector.shape_cast %0 : vector<1x2x128xbf16> to vector<2x128xbf16>
    %2 = arith.extf %1 : vector<2x128xbf16> to vector<2x128xf32>
    %c0_2 = arith.constant 0 : index
    %c0_3 = arith.constant 0 : index
    %3 = vector.load %arg2[%c0_2, %c0_3] : memref<1x128xf32, #tpu.memory_space<vmem>>, vector<1x128xf32>
    %4 = vector.broadcast %3 : vector<1x128xf32> to vector<2x128xf32>
    %5 = arith.mulf %2, %4 : vector<2x128xf32>
    %c0_4 = arith.constant 0 : index
    %c0_5 = arith.constant 0 : index
    %6 = vector.load %arg3[%c0_4, %c0_5] : memref<1x128xf32, #tpu.memory_space<vmem>>, vector<1x128xf32>
    %7 = vector.broadcast %6 : vector<1x128xf32> to vector<2x128xf32>
    %8 = arith.addf %5, %7 : vector<2x128xf32>
    %9 = vector.extract_strided_slice %8 {offsets = [0, 0], sizes = [2, 8], strides = [1, 1]} : vector<2x128xf32> to vector<2x8xf32>
    %c0_6 = arith.constant 0 : index
    %c0_7 = arith.constant 0 : index
    %c0_8 = arith.constant 0 : index
    %10 = vector.load %arg4[%c0_6, %c0_7, %c0_8] : memref<1x2x8xf32, #tpu.memory_space<vmem>>, vector<1x2x8xf32>
    %11 = vector.shape_cast %10 : vector<1x2x8xf32> to vector<2x8xf32>
    %12 = vector.shape_cast %9 : vector<2x8xf32> to vector<1x2x8xf32>
    tpu.vector_store %arg4[%c0_6, %c0_7, %c0_8], %12 {strides = array<i32>} : memref<1x2x8xf32, #tpu.memory_space<vmem>>, vector<1x2x8xf32>,
    return
  }
  func.func @transform_0(%arg0: i32) -> (i32, i32, i32) {
    %c0_i32 = arith.constant 0 : i32
    %c0_i32_0 = arith.constant 0 : i32
    %c0_i32_1 = arith.constant 0 : i32
    return %arg0, %c0_i32, %c0_i32_0 : i32, i32, i32
  }
  func.func @transform_1(%arg0: i32) -> (i32, i32) {
    %c0_i32 = arith.constant 0 : i32
    %c0_i32_0 = arith.constant 0 : i32
    %c0_i32_1 = arith.constant 0 : i32
    return %c0_i32, %c0_i32_0 : i32, i32
  }
  func.func @transform_2(%arg0: i32) -> (i32, i32) {
    %c0_i32 = arith.constant 0 : i32
    %c0_i32_0 = arith.constant 0 : i32
    %c0_i32_1 = arith.constant 0 : i32
    return %c0_i32, %c0_i32_0 : i32, i32
  }
  func.func @transform_3(%arg0: i32) -> (i32, i32, i32) {
    %c0_i32 = arith.constant 0 : i32
    %c0_i32_0 = arith.constant 0 : i32
    %c0_i32_1 = arith.constant 0 : i32
    return %arg0, %c0_i32, %c0_i32_0 : i32, i32, i32
  }
}

module attributes {stable_mosaic.version = 11 : i64} {
  func.func @_fused_block_kernel(%arg0: i32, %arg1: memref<1x4x128xbf16, #tpu.memory_space<vmem>>, %arg2: memref<1x128xf32, #tpu.memory_space<vmem>>, %arg3: memref<1x128xf32, #tpu.memory_space<vmem>>, %arg4: memref<128x128xbf16, #tpu.memory_space<vmem>>, %arg5: memref<1x128xf32, #tpu.memory_space<vmem>>, %arg6: memref<128x128xbf16, #tpu.memory_space<vmem>>, %arg7: memref<1x128xf32, #tpu.memory_space<vmem>>, %arg8: memref<1x2x128xbf16, #tpu.memory_space<vmem>>, %arg9: memref<1x2x128xf32, #tpu.memory_space<vmem>>, %arg10: memref<4x128xbf16, #tpu.memory_space<vmem>>, %arg11: memref<4x128xf32, #tpu.memory_space<vmem>>) attributes {dimension_semantics = [#tpu.dimension_semantics<parallel>], iteration_bounds = array<i64: 2>, scalar_prefetch = 0 : i64, scratch_operands = 2 : i64, tpu.core_type = #tpu.core_type<tc>, window_params = [{transform_indices = @transform_0, window_bounds = array<i64: 1, 4, 128>}, {pipeline_mode = #tpu.pipeline_mode<synchronous>, transform_indices = @transform_1, window_bounds = array<i64: 1, 128>}, {pipeline_mode = #tpu.pipeline_mode<synchronous>, transform_indices = @transform_2, window_bounds = array<i64: 1, 128>}, {pipeline_mode = #tpu.pipeline_mode<synchronous>, transform_indices = @transform_3, window_bounds = array<i64: 128, 128>}, {pipeline_mode = #tpu.pipeline_mode<synchronous>, transform_indices = @transform_4, window_bounds = array<i64: 1, 128>}, {pipeline_mode = #tpu.pipeline_mode<synchronous>, transform_indices = @transform_5, window_bounds = array<i64: 128, 128>}, {pipeline_mode = #tpu.pipeline_mode<synchronous>, transform_indices = @transform_6, window_bounds = array<i64: 1, 128>}, {transform_indices = @transform_7, window_bounds = array<i64: 1, 2, 128>}, {transform_indices = @transform_8, window_bounds = array<i64: 1, 2, 128>}]} {
    %c0 = arith.constant 0 : index
    %c0_0 = arith.constant 0 : index
    %c0_1 = arith.constant 0 : index
    %0 = vector.load %arg1[%c0, %c0_0, %c0_1] : memref<1x4x128xbf16, #tpu.memory_space<vmem>>, vector<1x4x128xbf16>
    %1 = vector.shape_cast %0 : vector<1x4x128xbf16> to vector<4x128xbf16>
    %2 = arith.extf %1 : vector<4x128xbf16> to vector<4x128xf32>
    %c0_2 = arith.constant 0 : index
    %c0_3 = arith.constant 0 : index
    %3 = vector.load %arg2[%c0_2, %c0_3] : memref<1x128xf32, #tpu.memory_space<vmem>>, vector<1x128xf32>
    %4 = vector.broadcast %3 : vector<1x128xf32> to vector<4x128xf32>
    %5 = arith.mulf %2, %4 : vector<4x128xf32>
    %c0_4 = arith.constant 0 : index
    %c0_5 = arith.constant 0 : index
    %6 = vector.load %arg3[%c0_4, %c0_5] : memref<1x128xf32, #tpu.memory_space<vmem>>, vector<1x128xf32>
    %7 = vector.broadcast %6 : vector<1x128xf32> to vector<4x128xf32>
    %8 = arith.addf %5, %7 : vector<4x128xf32>
    %9 = arith.truncf %8 : vector<4x128xf32> to vector<4x128xbf16>
    %c0_6 = arith.constant 0 : index
    %c0_7 = arith.constant 0 : index
    %10 = vector.load %arg10[%c0_6, %c0_7] : memref<4x128xbf16, #tpu.memory_space<vmem>>, vector<4x128xbf16>
    tpu.vector_store %arg10[%c0_6, %c0_7], %9 {strides = array<i32>} : memref<4x128xbf16, #tpu.memory_space<vmem>>, vector<4x128xbf16>,
    %c0_8 = arith.constant 0 : index
    %c0_9 = arith.constant 0 : index
    %11 = vector.load %arg10[%c0_8, %c0_9] : memref<4x128xbf16, #tpu.memory_space<vmem>>, vector<4x128xbf16>
    %c0_10 = arith.constant 0 : index
    %c0_11 = arith.constant 0 : index
    %12 = vector.load %arg4[%c0_10, %c0_11] : memref<128x128xbf16, #tpu.memory_space<vmem>>, vector<128x128xbf16>
    %cst = arith.constant dense<0.000000e+00> : vector<4x128xf32>
    %13 = tpu.matmul %11, %12, %cst {dimension_numbers = #tpu.dot_dimension_numbers<[1], [0], [0], [1], [0, 0, 1, 1], [], []>} : vector<4x128xbf16>, vector<128x128xbf16>, vector<4x128xf32> -> vector<4x128xf32>
    %c0_12 = arith.constant 0 : index
    %c0_13 = arith.constant 0 : index
    %14 = vector.load %arg5[%c0_12, %c0_13] : memref<1x128xf32, #tpu.memory_space<vmem>>, vector<1x128xf32>
    %15 = vector.broadcast %14 : vector<1x128xf32> to vector<4x128xf32>
    %16 = arith.addf %13, %15 : vector<4x128xf32>
    %cst_14 = arith.constant 0.000000e+00 : f32
    %17 = vector.broadcast %cst_14 : f32 to vector<4x128xf32>
    %18 = arith.maximumf %16, %17 : vector<4x128xf32>
    %19 = arith.truncf %18 : vector<4x128xf32> to vector<4x128xbf16>
    %c0_15 = arith.constant 0 : index
    %c0_16 = arith.constant 0 : index
    %20 = vector.load %arg10[%c0_15, %c0_16] : memref<4x128xbf16, #tpu.memory_space<vmem>>, vector<4x128xbf16>
    tpu.vector_store %arg10[%c0_15, %c0_16], %19 {strides = array<i32>} : memref<4x128xbf16, #tpu.memory_space<vmem>>, vector<4x128xbf16>,
    %c0_17 = arith.constant 0 : index
    %c0_18 = arith.constant 0 : index
    %21 = vector.load %arg10[%c0_17, %c0_18] : memref<4x128xbf16, #tpu.memory_space<vmem>>, vector<4x128xbf16>
    %c0_19 = arith.constant 0 : index
    %c0_20 = arith.constant 0 : index
    %22 = vector.load %arg6[%c0_19, %c0_20] : memref<128x128xbf16, #tpu.memory_space<vmem>>, vector<128x128xbf16>
    %cst_21 = arith.constant dense<0.000000e+00> : vector<4x128xf32>
    %23 = tpu.matmul %21, %22, %cst_21 {dimension_numbers = #tpu.dot_dimension_numbers<[1], [0], [0], [1], [0, 0, 1, 1], [], []>} : vector<4x128xbf16>, vector<128x128xbf16>, vector<4x128xf32> -> vector<4x128xf32>
    %c0_22 = arith.constant 0 : index
    %c0_23 = arith.constant 0 : index
    %24 = vector.load %arg7[%c0_22, %c0_23] : memref<1x128xf32, #tpu.memory_space<vmem>>, vector<1x128xf32>
    %25 = vector.broadcast %24 : vector<1x128xf32> to vector<4x128xf32>
    %26 = arith.addf %23, %25 : vector<4x128xf32>
    %cst_24 = arith.constant 0.000000e+00 : f32
    %27 = vector.broadcast %cst_24 : f32 to vector<4x128xf32>
    %28 = arith.maximumf %26, %27 : vector<4x128xf32>
    %c0_25 = arith.constant 0 : index
    %c0_26 = arith.constant 0 : index
    %c0_27 = arith.constant 0 : index
    %29 = vector.load %arg1[%c0_25, %c0_26, %c0_27] : memref<1x4x128xbf16, #tpu.memory_space<vmem>>, vector<1x4x128xbf16>
    %30 = vector.shape_cast %29 : vector<1x4x128xbf16> to vector<4x128xbf16>
    %31 = arith.extf %30 : vector<4x128xbf16> to vector<4x128xf32>
    %c0_28 = arith.constant 0 : index
    %c0_29 = arith.constant 0 : index
    %32 = vector.load %arg2[%c0_28, %c0_29] : memref<1x128xf32, #tpu.memory_space<vmem>>, vector<1x128xf32>
    %33 = vector.broadcast %32 : vector<1x128xf32> to vector<4x128xf32>
    %34 = arith.mulf %31, %33 : vector<4x128xf32>
    %c0_30 = arith.constant 0 : index
    %c0_31 = arith.constant 0 : index
    %35 = vector.load %arg3[%c0_30, %c0_31] : memref<1x128xf32, #tpu.memory_space<vmem>>, vector<1x128xf32>
    %36 = vector.broadcast %35 : vector<1x128xf32> to vector<4x128xf32>
    %37 = arith.addf %34, %36 : vector<4x128xf32>
    %38 = arith.addf %28, %37 : vector<4x128xf32>
    %cst_32 = arith.constant 0.000000e+00 : f32
    %39 = vector.broadcast %cst_32 : f32 to vector<4x128xf32>
    %40 = arith.maximumf %38, %39 : vector<4x128xf32>
    %c0_33 = arith.constant 0 : index
    %c0_34 = arith.constant 0 : index
    %41 = vector.load %arg11[%c0_33, %c0_34] : memref<4x128xf32, #tpu.memory_space<vmem>>, vector<4x128xf32>
    tpu.vector_store %arg11[%c0_33, %c0_34], %40 {strides = array<i32>} : memref<4x128xf32, #tpu.memory_space<vmem>>, vector<4x128xf32>,
    %c0_35 = arith.constant 0 : index
    %c0_36 = arith.constant 0 : index
    %42 = tpu.strided_load %arg11[%c0_35, %c0_36] {strides = array<i32: 2, 1>} : memref<4x128xf32, #tpu.memory_space<vmem>>, vector<2x128xf32>
    %c1 = arith.constant 1 : index
    %c0_37 = arith.constant 0 : index
    %43 = tpu.strided_load %arg11[%c1, %c0_37] {strides = array<i32: 2, 1>} : memref<4x128xf32, #tpu.memory_space<vmem>>, vector<2x128xf32>
    %44 = arith.addf %42, %43 : vector<2x128xf32>
    %cst_38 = arith.constant 5.000000e-01 : f32
    %45 = vector.broadcast %cst_38 : f32 to vector<2x128xf32>
    %46 = arith.mulf %45, %44 : vector<2x128xf32>
    %47 = arith.truncf %46 : vector<2x128xf32> to vector<2x128xbf16>
    %c0_39 = arith.constant 0 : index
    %c0_40 = arith.constant 0 : index
    %c0_41 = arith.constant 0 : index
    %48 = vector.load %arg8[%c0_39, %c0_40, %c0_41] : memref<1x2x128xbf16, #tpu.memory_space<vmem>>, vector<1x2x128xbf16>
    %49 = vector.shape_cast %48 : vector<1x2x128xbf16> to vector<2x128xbf16>
    %50 = vector.shape_cast %47 : vector<2x128xbf16> to vector<1x2x128xbf16>
    tpu.vector_store %arg8[%c0_39, %c0_40, %c0_41], %50 {strides = array<i32>} : memref<1x2x128xbf16, #tpu.memory_space<vmem>>, vector<1x2x128xbf16>,
    %51 = arith.extf %47 : vector<2x128xbf16> to vector<2x128xf32>
    %cst_42 = arith.constant dense<0.000000e+00> : vector<128xf32>
    %52 = vector.multi_reduction <add>, %51, %cst_42 [0] : vector<2x128xf32> to vector<128xf32>
    %53 = vector.shape_cast %52 : vector<128xf32> to vector<1x128xf32>
    %c0_43 = arith.constant 0 : index
    %c0_44 = arith.constant 0 : index
    %c0_45 = arith.constant 0 : index
    %54 = vector.load %arg9[%c0_43, %c0_44, %c0_45] : memref<1x2x128xf32, #tpu.memory_space<vmem>>, vector<1x1x128xf32>
    %55 = vector.shape_cast %54 : vector<1x1x128xf32> to vector<1x128xf32>
    %56 = vector.shape_cast %53 : vector<1x128xf32> to vector<1x1x128xf32>
    tpu.vector_store %arg9[%c0_43, %c0_44, %c0_45], %56 {strides = array<i32>} : memref<1x2x128xf32, #tpu.memory_space<vmem>>, vector<1x1x128xf32>,
    %57 = arith.mulf %51, %51 : vector<2x128xf32>
    %cst_46 = arith.constant dense<0.000000e+00> : vector<128xf32>
    %58 = vector.multi_reduction <add>, %57, %cst_46 [0] : vector<2x128xf32> to vector<128xf32>
    %59 = vector.shape_cast %58 : vector<128xf32> to vector<1x128xf32>
    %c0_47 = arith.constant 0 : index
    %c1_48 = arith.constant 1 : index
    %c0_49 = arith.constant 0 : index
    %60 = vector.load %arg9[%c0_47, %c1_48, %c0_49] : memref<1x2x128xf32, #tpu.memory_space<vmem>>, vector<1x1x128xf32>
    %61 = vector.shape_cast %60 : vector<1x1x128xf32> to vector<1x128xf32>
    %62 = vector.shape_cast %59 : vector<1x128xf32> to vector<1x1x128xf32>
    tpu.vector_store %arg9[%c0_47, %c1_48, %c0_49], %62 {strides = array<i32>} : memref<1x2x128xf32, #tpu.memory_space<vmem>>, vector<1x1x128xf32>,
    return
  }
  func.func @transform_0(%arg0: i32) -> (i32, i32, i32) {
    %c0_i32 = arith.constant 0 : i32
    %c0_i32_0 = arith.constant 0 : i32
    %c0_i32_1 = arith.constant 0 : i32
    return %arg0, %c0_i32, %c0_i32_0 : i32, i32, i32
  }
  func.func @transform_1(%arg0: i32) -> (i32, i32) {
    %c0_i32 = arith.constant 0 : i32
    %c0_i32_0 = arith.constant 0 : i32
    %c0_i32_1 = arith.constant 0 : i32
    return %c0_i32, %c0_i32_0 : i32, i32
  }
  func.func @transform_2(%arg0: i32) -> (i32, i32) {
    %c0_i32 = arith.constant 0 : i32
    %c0_i32_0 = arith.constant 0 : i32
    %c0_i32_1 = arith.constant 0 : i32
    return %c0_i32, %c0_i32_0 : i32, i32
  }
  func.func @transform_3(%arg0: i32) -> (i32, i32) {
    %c0_i32 = arith.constant 0 : i32
    %c0_i32_0 = arith.constant 0 : i32
    %c0_i32_1 = arith.constant 0 : i32
    return %c0_i32, %c0_i32_0 : i32, i32
  }
  func.func @transform_4(%arg0: i32) -> (i32, i32) {
    %c0_i32 = arith.constant 0 : i32
    %c0_i32_0 = arith.constant 0 : i32
    %c0_i32_1 = arith.constant 0 : i32
    return %c0_i32, %c0_i32_0 : i32, i32
  }
  func.func @transform_5(%arg0: i32) -> (i32, i32) {
    %c0_i32 = arith.constant 0 : i32
    %c0_i32_0 = arith.constant 0 : i32
    %c0_i32_1 = arith.constant 0 : i32
    return %c0_i32, %c0_i32_0 : i32, i32
  }
  func.func @transform_6(%arg0: i32) -> (i32, i32) {
    %c0_i32 = arith.constant 0 : i32
    %c0_i32_0 = arith.constant 0 : i32
    %c0_i32_1 = arith.constant 0 : i32
    return %c0_i32, %c0_i32_0 : i32, i32
  }
  func.func @transform_7(%arg0: i32) -> (i32, i32, i32) {
    %c0_i32 = arith.constant 0 : i32
    %c0_i32_0 = arith.constant 0 : i32
    %c0_i32_1 = arith.constant 0 : i32
    return %arg0, %c0_i32, %c0_i32_0 : i32, i32, i32
  }
  func.func @transform_8(%arg0: i32) -> (i32, i32, i32) {
    %c0_i32 = arith.constant 0 : i32
    %c0_i32_0 = arith.constant 0 : i32
    %c0_i32_1 = arith.constant 0 : i32
    return %arg0, %c0_i32, %c0_i32_0 : i32, i32, i32
  }
}

</mosaic_0001>

<llo_original>
// kernel: encoder_s_forward.7
$region0: #{encoder_s_forward.7}
  #allocation0 [shape = 'u32[]', space=smem, size = 0x4, offset = 0x4, fixed_abs, tag = 'smem constant byte address 0x4 - core index']
  #allocation1 [shape = 'u32[144,128]{1,0:T(1,128)}', space=vmem, size = 0x12000, scoped, tag = 'internal scratch']
  %s0 = inlined_call_operand.vmem [shape: bf16[2,2,128], index: 0, kind: input, shape index: {}]
  %s1 = inlined_call_operand.vmem [shape: f32[1,128], index: 1, kind: input, shape index: {}]
  %s2 = inlined_call_operand.vmem [shape: f32[1,128], index: 2, kind: input, shape index: {}]
  %s3 = inlined_call_operand.hbm [shape: f32[2,2,8], index: 3, kind: output, shape index: {}]
  %s4 = sld [smem:[#allocation0]]
  $region45: #{encoder_s_forward.7} parent=0
    _
  %s6 = ssub.s32 1, %s4
  %s7 = scalar_select 0, %s6, %s4
  $region1: #{encoder_s_forward.7} parent=0
    #allocation2 [shape = 'u8[2048]{0}', space=vmem, size = 0x800, scoped, tag = 'output window, operand 0']
    #allocation3 [shape = 's32[2]{0}', space=sflag, size = 0x8, scoped, tag = 'scoped memory for encoder_s_forward.7']
    %8 = vsyncpa [#allocation3], 0
    %s9 = scalar_lea.sflag [#allocation3], 1
    %10 = vsyncpa %s9, 0
    loop: start=0, step=1, limit=4
    $region2: #{encoder_s_forward.7} parent=1 // loop_pre_header
      _
    $region3: #{encoder_s_forward.7} parent=1 // loop_header
      %s12 = sphi 0, %s16
      %p13 = scmp.ge.s32.totalorder %s12, 4
      %s22 = sphi 0, %s24
      %s25 = sphi 0, %s22
      %s26 = sphi 0, %s25
      %s42 = sphi 0, %s26
      %s46 = sphi 0, %s46
      %s48 = sphi 0, %s46
      %s49 = sphi 0, %s48
      %s63 = sphi 0, %s49
      %s67 = sphi 0, %s67
      %s69 = sphi 0, %s67
      %s70 = sphi 0, %s69
      %s84 = sphi 0, %s70
      %s90 = sphi 0, %s92
      %s93 = sphi 0, %s90
      %s94 = sphi 0, %s93
      %s110 = sphi 0, %s94
    $region4: #{encoder_s_forward.7} parent=1 // loop_header_branch
      %15 = sbr.rel (%p13) target = $region8
    $region5: #{encoder_s_forward.7} parent=1 // loop_body
      %s17 = ssub.s32 %s12, 1
      %s18 = ssub.s32 %s12, 2
      %s19 = sadd.s32 %s12, 1
      %s20 = ssub.s32 %s12, %s19
      %p21 = scmp.eq.s32.totalorder %s20, 0
      %s23 = sadd.s32 %s22, 1
      %s24 = scalar_select %p21, %s22, %s23
      %p27 = pneg %p21
      %p28 = scmp.eq.s32.totalorder %s12, 1
      %p29 = por %p27, %p28
      %p30 = scmp.ne.s32.totalorder %s22, %s25
      %p31 = scmp.eq.s32.totalorder %s12, 0
      %p32 = por %p30, %p31
      %p33 = scmp.ne.s32.totalorder %s22, %s25
      %p34 = scmp.eq.s32.totalorder %s17, 1
      %p35 = por %p33, %p34
      %p36 = scmp.ne.s32.totalorder %s25, %s26
      %p37 = scmp.eq.s32.totalorder %s17, 0
      %p38 = por %p36, %p37
      %p39 = scmp.ne.s32.totalorder %s25, %s26
      %p40 = scmp.eq.s32.totalorder %s18, 1
      %p41 = por %p39, %p40
      %p43 = scmp.ne.s32.totalorder %s26, %s42
      %p44 = scmp.eq.s32.totalorder %s18, 0
      %p45 = por %p43, %p44
      %s47 = sadd.s32 %s46, 1
      %p50 = scmp.eq.s32.totalorder %s12, 1
      %p51 = scmp.ne.s32.totalorder %s46, %s48
      %p52 = scmp.eq.s32.totalorder %s12, 0
      %p53 = por %p51, %p52
      %p54 = scmp.ne.s32.totalorder %s46, %s48
      %p55 = scmp.eq.s32.totalorder %s17, 1
      %p56 = por %p54, %p55
      %p57 = scmp.ne.s32.totalorder %s48, %s49
      %p58 = scmp.eq.s32.totalorder %s17, 0
      %p59 = por %p57, %p58
      %p60 = scmp.ne.s32.totalorder %s48, %s49
      %p61 = scmp.eq.s32.totalorder %s18, 1
      %p62 = por %p60, %p61
      %p64 = scmp.ne.s32.totalorder %s49, %s63
      %p65 = scmp.eq.s32.totalorder %s18, 0
      %p66 = por %p64, %p65
      %s68 = sadd.s32 %s67, 1
      %p71 = scmp.eq.s32.totalorder %s12, 1
      %p72 = scmp.ne.s32.totalorder %s67, %s69
      %p73 = scmp.eq.s32.totalorder %s12, 0
      %p74 = por %p72, %p73
      %p75 = scmp.ne.s32.totalorder %s67, %s69
      %p76 = scmp.eq.s32.totalorder %s17, 1
      %p77 = por %p75, %p76
      %p78 = scmp.ne.s32.totalorder %s69, %s70
      %p79 = scmp.eq.s32.totalorder %s17, 0
      %p80 = por %p78, %p79
      %p81 = scmp.ne.s32.totalorder %s69, %s70
      %p82 = scmp.eq.s32.totalorder %s18, 1
      %p83 = por %p81, %p82
      %p85 = scmp.ne.s32.totalorder %s70, %s84
      %p86 = scmp.eq.s32.totalorder %s18, 0
      %p87 = por %p85, %p86
      %s88 = ssub.s32 %s12, %s19
      %p89 = scmp.eq.s32.totalorder %s88, 0
      %s91 = sadd.s32 %s90, 1
      %s92 = scalar_select %p89, %s90, %s91
      %p95 = pneg %p89
      %p96 = scmp.eq.s32.totalorder %s12, 1
      %p97 = por %p95, %p96
      %p98 = scmp.ne.s32.totalorder %s90, %s93
      %p99 = scmp.eq.s32.totalorder %s12, 0
      %p100 = por %p98, %p99
      %p101 = scmp.ne.s32.totalorder %s90, %s93
      %p102 = scmp.eq.s32.totalorder %s17, 1
      %p103 = por %p101, %p102
      %p104 = scmp.ne.s32.totalorder %s93, %s94
      %p105 = scmp.eq.s32.totalorder %s17, 0
      %p106 = por %p104, %p105
      %p107 = scmp.ne.s32.totalorder %s93, %s94
      %p108 = scmp.eq.s32.totalorder %s18, 1
      %p109 = por %p107, %p108
      %p111 = scmp.ne.s32.totalorder %s94, %s110
      %p112 = scmp.eq.s32.totalorder %s18, 0
      %p113 = por %p111, %p112
      %p114 = scmp.le.s32.totalorder 1, %s12
      %p115 = scmp.lt.s32.totalorder %s12, 3
      %p116 = pnand %p114, %p115
      %p117 = pneg %p116
      // Predicated region
      $region9: #{encoder_s_forward.7} parent=5 // pred_check
        _
      $region10: #{encoder_s_forward.7} parent=5 // pred_check_branch
        %119 = sbr.rel (%p116) target = $region12
      $region11: #{encoder_s_forward.7} parent=5 // pred_region
        %s120 = ssub.s32 %s12, 1
        // Predicated region
        $region13: #{encoder_s_forward.7} parent=11 // pred_check
          %p121 = pneg %p59
        $region14: #{encoder_s_forward.7} parent=11 // pred_check_branch
          %123 = sbr.rel (%p121) target = $region16
        $region15: #{encoder_s_forward.7} parent=11 // pred_region
          _
        $region16: #{encoder_s_forward.7} parent=11 // pred_fallthru
          _
        // Predicated region
        $region17: #{encoder_s_forward.7} parent=11 // pred_check
          %p124 = pneg %p80
        $region18: #{encoder_s_forward.7} parent=11 // pred_check_branch
          %126 = sbr.rel (%p124) target = $region20
        $region19: #{encoder_s_forward.7} parent=11 // pred_region
          _
        $region20: #{encoder_s_forward.7} parent=11 // pred_fallthru
          _
      $region12: #{encoder_s_forward.7} parent=5 // pred_fallthru
        _
      %p127 = scmp.lt.s32.totalorder %s12, 2
      // Predicated region
      $region21: #{encoder_s_forward.7} parent=5 // pred_check
        %p128 = pneg %p127
      $region22: #{encoder_s_forward.7} parent=5 // pred_check_branch
        %130 = sbr.rel (%p128) target = $region24
      $region23: #{encoder_s_forward.7} parent=5 // pred_region
        // Predicated region
        $region25: #{encoder_s_forward.7} parent=23 // pred_check
          %p131 = pneg %p32
        $region26: #{encoder_s_forward.7} parent=23 // pred_check_branch
          %133 = sbr.rel (%p131) target = $region28
        $region27: #{encoder_s_forward.7} parent=23 // pred_region
          %p134 = scmp.lt.s32.totalorder %s12, 1
          %s135 = scalar_select %p134, %s12, 1
          %s136 = scalar_lea.vmem %s0, %s135
        $region28: #{encoder_s_forward.7} parent=23 // pred_fallthru
          _
      $region24: #{encoder_s_forward.7} parent=5 // pred_fallthru
        _
      %p137 = scmp.le.s32.totalorder 1, %s12
      %p138 = scmp.lt.s32.totalorder %s12, 3
      %p139 = pnand %p137, %p138
      %p140 = pneg %p139
      // Predicated region
      $region29: #{encoder_s_forward.7} parent=5 // pred_check
        _
      $region30: #{encoder_s_forward.7} parent=5 // pred_check_branch
        %142 = sbr.rel (%p139) target = $region32
      $region31: #{encoder_s_forward.7} parent=5 // pred_region
        %s143 = ssub.s32 %s12, 1
        %p144 = scmp.lt.s32.totalorder %s17, 1
        %s145 = scalar_select %p144, %s17, 1
        %s146 = scalar_lea.vmem %s0, %s145
        %p147 = pneg %p38
        %p148 = pneg %p35
        %p149 = pneg %p59
        %p150 = pneg %p56
        %p151 = pneg %p80
        %p152 = pneg %p77
        %p153 = pneg %p106
        %p154 = pneg %p103
        %s155 = sand.u32 %s93, 1
        %s156 = scalar_lea.sflag [#allocation3], %s155
        %s157 = sand.u32 %s93, 1
        %s158 = smul.addr %s157, 2
        %s159 = scalar_lea.vmem [#allocation2], %s158
        %p160 = scmp.lt.s32.totalorder %s17, 1
        %s161 = scalar_select %p160, %s17, 1
        %s162 = scalar_lea.vmem %s0, %s161
        %v163 = vld [vmem:[%s162] sm:$0x1]
        %v164 = vunpack.c.l.bf16 %v163
        %v165 = vld [vmem:[%s1] sm:$0x1]
        %v167 = vlaneseq
        %v168 = vshrl.u32 %v167, 7
        %v169 = vsub.s32 0, %v168
        %v170 = vrot.slane %v165, %v169
        %v172 = vmul.f32 %v164, %v170
        %v173 = vld [vmem:[%s2] sm:$0x1]
        %v175 = vlaneseq
        %v176 = vshrl.u32 %v175, 7
        %v177 = vsub.s32 0, %v176
        %v178 = vrot.slane %v173, %v177
        %v180 = vadd.f32 %v172, %v178
        %vm181 = vcmask 58368
        %182 = vst.msk [vmem:[%s159] sm:$0x3] %vm181, %v180
        %s183 = sand.u32 %s93, 1
        %s184 = scalar_lea.sflag [#allocation3], %s183
        %s185 = sand.u32 %s93, 1
        %s186 = smul.addr %s185, 2
        %s187 = scalar_lea.vmem [#allocation2], %s186
        // Predicated region
        $region33: #{encoder_s_forward.7} parent=31 // pred_check
          %p188 = pneg %p103
        $region34: #{encoder_s_forward.7} parent=31 // pred_check_branch
          %190 = sbr.rel (%p188) target = $region36
        $region35: #{encoder_s_forward.7} parent=31 // pred_region
          %s192 = ssub.s32 32, 32
          %193 = vsyncadd %s184, %s192
          %s194 = smul.addr %s17, 32
          %s195 = scalar_lea.hbm %s3, %s194
          %s197 = sshll.u32 %s187, 4
          %s198 = int_to_ptr.vmem [resolvable:$true] %s197
          %200 = dma.vmem_to_hbm [thread:$0]  %s198, 32, %s195, %s184
        $region36: #{encoder_s_forward.7} parent=31 // pred_fallthru
          _
      $region32: #{encoder_s_forward.7} parent=5 // pred_fallthru
        _
      %p201 = scmp.le.s32.totalorder 2, %s12
      // Predicated region
      $region37: #{encoder_s_forward.7} parent=5 // pred_check
        %p202 = pneg %p201
      $region38: #{encoder_s_forward.7} parent=5 // pred_check_branch
        %204 = sbr.rel (%p202) target = $region40
      $region39: #{encoder_s_forward.7} parent=5 // pred_region
        %s205 = ssub.s32 %s12, 2
        // Predicated region
        $region41: #{encoder_s_forward.7} parent=39 // pred_check
          %p206 = pneg %p109
        $region42: #{encoder_s_forward.7} parent=39 // pred_check_branch
          %208 = sbr.rel (%p206) target = $region44
        $region43: #{encoder_s_forward.7} parent=39 // pred_region
          %s209 = sand.u32 %s94, 1
          %s210 = scalar_lea.sflag [#allocation3], %s209
          %s211 = sand.u32 %s94, 1
          %s212 = smul.addr %s211, 2
          %s213 = scalar_lea.vmem [#allocation2], %s212
          %214 = dma.done %s210, 32
        $region44: #{encoder_s_forward.7} parent=39 // pred_fallthru
          _
      $region40: #{encoder_s_forward.7} parent=5 // pred_fallthru
        _
    $region6: #{encoder_s_forward.7} parent=1 // loop_footer
      %s16 = sadd.s32 1, %s12
    $region7: #{encoder_s_forward.7} parent=1 // loop_footer_branch
      %11 = sbr.rel target = $region3
    $region8: #{encoder_s_forward.7} parent=1 // loop_exit
      _
    %215 = vsyncpa [#allocation3], 1
    %s216 = scalar_lea.sflag [#allocation3], 1
    %217 = vsyncpa %s216, 1

// kernel: encoder_s_forward.6
$region0: #{encoder_s_forward.6}
  #allocation0 [shape = 'u32[]', space=smem, size = 0x4, offset = 0x4, fixed_abs, tag = 'smem constant byte address 0x4 - core index']
  #allocation1 [shape = 'u32[144,128]{1,0:T(1,128)}', space=vmem, size = 0x12000, scoped, tag = 'internal scratch']
  #allocation2 [shape = 'bf16[4,128]{1,0:T(4,128)(2,1)}', space=vmem, size = 0x400, scoped, tag = 'scratch operand']
  #allocation3 [shape = 'f32[4,128]{1,0:T(4,128)}', space=vmem, size = 0x800, scoped, tag = 'scratch operand']
  %s0 = inlined_call_operand.vmem [shape: bf16[2,4,128], index: 0, kind: input, shape index: {}]
  %s1 = inlined_call_operand.vmem [shape: f32[1,128], index: 1, kind: input, shape index: {}]
  %s2 = inlined_call_operand.vmem [shape: f32[1,128], index: 2, kind: input, shape index: {}]
  %s3 = inlined_call_operand.vmem [shape: bf16[128,128], index: 3, kind: input, shape index: {}]
  %s4 = inlined_call_operand.vmem [shape: f32[1,128], index: 4, kind: input, shape index: {}]
  %s5 = inlined_call_operand.vmem [shape: bf16[128,128], index: 5, kind: input, shape index: {}]
  %s6 = inlined_call_operand.vmem [shape: f32[1,128], index: 6, kind: input, shape index: {}]
  %s7 = inlined_call_operand.vmem [shape: bf16[2,2,128], index: 7, kind: output, shape index: {0}]
  %s8 = inlined_call_operand.vmem [shape: f32[2,2,128], index: 8, kind: output, shape index: {1}]
  %9 = xla_tuple %s7, %s8
  %s10 = sld [smem:[#allocation0]]
  $region69: #{encoder_s_forward.6} parent=0
    _
  %s12 = ssub.s32 1, %s10
  %s13 = scalar_select 0, %s12, %s10
  loop: start=0, step=1, limit=4
  $region2: #{encoder_s_forward.6} parent=0 // loop_pre_header
    _
  $region3: #{encoder_s_forward.6} parent=0 // loop_header
    %s15 = sphi 0, %s19
    %p16 = scmp.ge.s32.totalorder %s15, 4
    %s25 = sphi 0, %s27
    %s28 = sphi 0, %s25
    %s29 = sphi 0, %s28
    %s45 = sphi 0, %s29
    %s49 = sphi 0, %s49
    %s51 = sphi 0, %s49
    %s52 = sphi 0, %s51
    %s66 = sphi 0, %s52
    %s70 = sphi 0, %s70
    %s72 = sphi 0, %s70
    %s73 = sphi 0, %s72
    %s87 = sphi 0, %s73
    %s91 = sphi 0, %s91
    %s93 = sphi 0, %s91
    %s94 = sphi 0, %s93
    %s108 = sphi 0, %s94
    %s112 = sphi 0, %s112
    %s114 = sphi 0, %s112
    %s115 = sphi 0, %s114
    %s129 = sphi 0, %s115
    %s133 = sphi 0, %s133
    %s135 = sphi 0, %s133
    %s136 = sphi 0, %s135
    %s150 = sphi 0, %s136
    %s154 = sphi 0, %s154
    %s156 = sphi 0, %s154
    %s157 = sphi 0, %s156
    %s171 = sphi 0, %s157
    %s177 = sphi 0, %s179
    %s180 = sphi 0, %s177
    %s181 = sphi 0, %s180
    %s197 = sphi 0, %s181
    %s203 = sphi 0, %s205
    %s206 = sphi 0, %s203
    %s207 = sphi 0, %s206
    %s223 = sphi 0, %s207
  $region4: #{encoder_s_forward.6} parent=0 // loop_header_branch
    %18 = sbr.rel (%p16) target = $region8
  $region5: #{encoder_s_forward.6} parent=0 // loop_body
    %s20 = ssub.s32 %s15, 1
    %s21 = ssub.s32 %s15, 2
    %s22 = sadd.s32 %s15, 1
    %s23 = ssub.s32 %s15, %s22
    %p24 = scmp.eq.s32.totalorder %s23, 0
    %s26 = sadd.s32 %s25, 1
    %s27 = scalar_select %p24, %s25, %s26
    %p30 = pneg %p24
    %p31 = scmp.eq.s32.totalorder %s15, 1
    %p32 = por %p30, %p31
    %p33 = scmp.ne.s32.totalorder %s25, %s28
    %p34 = scmp.eq.s32.totalorder %s15, 0
    %p35 = por %p33, %p34
    %p36 = scmp.ne.s32.totalorder %s25, %s28
    %p37 = scmp.eq.s32.totalorder %s20, 1
    %p38 = por %p36, %p37
    %p39 = scmp.ne.s32.totalorder %s28, %s29
    %p40 = scmp.eq.s32.totalorder %s20, 0
    %p41 = por %p39, %p40
    %p42 = scmp.ne.s32.totalorder %s28, %s29
    %p43 = scmp.eq.s32.totalorder %s21, 1
    %p44 = por %p42, %p43
    %p46 = scmp.ne.s32.totalorder %s29, %s45
    %p47 = scmp.eq.s32.totalorder %s21, 0
    %p48 = por %p46, %p47
    %s50 = sadd.s32 %s49, 1
    %p53 = scmp.eq.s32.totalorder %s15, 1
    %p54 = scmp.ne.s32.totalorder %s49, %s51
    %p55 = scmp.eq.s32.totalorder %s15, 0
    %p56 = por %p54, %p55
    %p57 = scmp.ne.s32.totalorder %s49, %s51
    %p58 = scmp.eq.s32.totalorder %s20, 1
    %p59 = por %p57, %p58
    %p60 = scmp.ne.s32.totalorder %s51, %s52
    %p61 = scmp.eq.s32.totalorder %s20, 0
    %p62 = por %p60, %p61
    %p63 = scmp.ne.s32.totalorder %s51, %s52
    %p64 = scmp.eq.s32.totalorder %s21, 1
    %p65 = por %p63, %p64
    %p67 = scmp.ne.s32.totalorder %s52, %s66
    %p68 = scmp.eq.s32.totalorder %s21, 0
    %p69 = por %p67, %p68
    %s71 = sadd.s32 %s70, 1
    %p74 = scmp.eq.s32.totalorder %s15, 1
    %p75 = scmp.ne.s32.totalorder %s70, %s72
    %p76 = scmp.eq.s32.totalorder %s15, 0
    %p77 = por %p75, %p76
    %p78 = scmp.ne.s32.totalorder %s70, %s72
    %p79 = scmp.eq.s32.totalorder %s20, 1
    %p80 = por %p78, %p79
    %p81 = scmp.ne.s32.totalorder %s72, %s73
    %p82 = scmp.eq.s32.totalorder %s20, 0
    %p83 = por %p81, %p82
    %p84 = scmp.ne.s32.totalorder %s72, %s73
    %p85 = scmp.eq.s32.totalorder %s21, 1
    %p86 = por %p84, %p85
    %p88 = scmp.ne.s32.totalorder %s73, %s87
    %p89 = scmp.eq.s32.totalorder %s21, 0
    %p90 = por %p88, %p89
    %s92 = sadd.s32 %s91, 1
    %p95 = scmp.eq.s32.totalorder %s15, 1
    %p96 = scmp.ne.s32.totalorder %s91, %s93
    %p97 = scmp.eq.s32.totalorder %s15, 0
    %p98 = por %p96, %p97
    %p99 = scmp.ne.s32.totalorder %s91, %s93
    %p100 = scmp.eq.s32.totalorder %s20, 1
    %p101 = por %p99, %p100
    %p102 = scmp.ne.s32.totalorder %s93, %s94
    %p103 = scmp.eq.s32.totalorder %s20, 0
    %p104 = por %p102, %p103
    %p105 = scmp.ne.s32.totalorder %s93, %s94
    %p106 = scmp.eq.s32.totalorder %s21, 1
    %p107 = por %p105, %p106
    %p109 = scmp.ne.s32.totalorder %s94, %s108
    %p110 = scmp.eq.s32.totalorder %s21, 0
    %p111 = por %p109, %p110
    %s113 = sadd.s32 %s112, 1
    %p116 = scmp.eq.s32.totalorder %s15, 1
    %p117 = scmp.ne.s32.totalorder %s112, %s114
    %p118 = scmp.eq.s32.totalorder %s15, 0
    %p119 = por %p117, %p118
    %p120 = scmp.ne.s32.totalorder %s112, %s114
    %p121 = scmp.eq.s32.totalorder %s20, 1
    %p122 = por %p120, %p121
    %p123 = scmp.ne.s32.totalorder %s114, %s115
    %p124 = scmp.eq.s32.totalorder %s20, 0
    %p125 = por %p123, %p124
    %p126 = scmp.ne.s32.totalorder %s114, %s115
    %p127 = scmp.eq.s32.totalorder %s21, 1
    %p128 = por %p126, %p127
    %p130 = scmp.ne.s32.totalorder %s115, %s129
    %p131 = scmp.eq.s32.totalorder %s21, 0
    %p132 = por %p130, %p131
    %s134 = sadd.s32 %s133, 1
    %p137 = scmp.eq.s32.totalorder %s15, 1
    %p138 = scmp.ne.s32.totalorder %s133, %s135
    %p139 = scmp.eq.s32.totalorder %s15, 0
    %p140 = por %p138, %p139
    %p141 = scmp.ne.s32.totalorder %s133, %s135
    %p142 = scmp.eq.s32.totalorder %s20, 1
    %p143 = por %p141, %p142
    %p144 = scmp.ne.s32.totalorder %s135, %s136
    %p145 = scmp.eq.s32.totalorder %s20, 0
    %p146 = por %p144, %p145
    %p147 = scmp.ne.s32.totalorder %s135, %s136
    %p148 = scmp.eq.s32.totalorder %s21, 1
    %p149 = por %p147, %p148
    %p151 = scmp.ne.s32.totalorder %s136, %s150
    %p152 = scmp.eq.s32.totalorder %s21, 0
    %p153 = por %p151, %p152
    %s155 = sadd.s32 %s154, 1
    %p158 = scmp.eq.s32.totalorder %s15, 1
    %p159 = scmp.ne.s32.totalorder %s154, %s156
    %p160 = scmp.eq.s32.totalorder %s15, 0
    %p161 = por %p159, %p160
    %p162 = scmp.ne.s32.totalorder %s154, %s156
    %p163 = scmp.eq.s32.totalorder %s20, 1
    %p164 = por %p162, %p163
    %p165 = scmp.ne.s32.totalorder %s156, %s157
    %p166 = scmp.eq.s32.totalorder %s20, 0
    %p167 = por %p165, %p166
    %p168 = scmp.ne.s32.totalorder %s156, %s157
    %p169 = scmp.eq.s32.totalorder %s21, 1
    %p170 = por %p168, %p169
    %p172 = scmp.ne.s32.totalorder %s157, %s171
    %p173 = scmp.eq.s32.totalorder %s21, 0
    %p174 = por %p172, %p173
    %s175 = ssub.s32 %s15, %s22
    %p176 = scmp.eq.s32.totalorder %s175, 0
    %s178 = sadd.s32 %s177, 1
    %s179 = scalar_select %p176, %s177, %s178
    %p182 = pneg %p176
    %p183 = scmp.eq.s32.totalorder %s15, 1
    %p184 = por %p182, %p183
    %p185 = scmp.ne.s32.totalorder %s177, %s180
    %p186 = scmp.eq.s32.totalorder %s15, 0
    %p187 = por %p185, %p186
    %p188 = scmp.ne.s32.totalorder %s177, %s180
    %p189 = scmp.eq.s32.totalorder %s20, 1
    %p190 = por %p188, %p189
    %p191 = scmp.ne.s32.totalorder %s180, %s181
    %p192 = scmp.eq.s32.totalorder %s20, 0
    %p193 = por %p191, %p192
    %p194 = scmp.ne.s32.totalorder %s180, %s181
    %p195 = scmp.eq.s32.totalorder %s21, 1
    %p196 = por %p194, %p195
    %p198 = scmp.ne.s32.totalorder %s181, %s197
    %p199 = scmp.eq.s32.totalorder %s21, 0
    %p200 = por %p198, %p199
    %s201 = ssub.s32 %s15, %s22
    %p202 = scmp.eq.s32.totalorder %s201, 0
    %s204 = sadd.s32 %s203, 1
    %s205 = scalar_select %p202, %s203, %s204
    %p208 = pneg %p202
    %p209 = scmp.eq.s32.totalorder %s15, 1
    %p210 = por %p208, %p209
    %p211 = scmp.ne.s32.totalorder %s203, %s206
    %p212 = scmp.eq.s32.totalorder %s15, 0
    %p213 = por %p211, %p212
    %p214 = scmp.ne.s32.totalorder %s203, %s206
    %p215 = scmp.eq.s32.totalorder %s20, 1
    %p216 = por %p214, %p215
    %p217 = scmp.ne.s32.totalorder %s206, %s207
    %p218 = scmp.eq.s32.totalorder %s20, 0
    %p219 = por %p217, %p218
    %p220 = scmp.ne.s32.totalorder %s206, %s207
    %p221 = scmp.eq.s32.totalorder %s21, 1
    %p222 = por %p220, %p221
    %p224 = scmp.ne.s32.totalorder %s207, %s223
    %p225 = scmp.eq.s32.totalorder %s21, 0
    %p226 = por %p224, %p225
    %p227 = scmp.le.s32.totalorder 1, %s15
    %p228 = scmp.lt.s32.totalorder %s15, 3
    %p229 = pnand %p227, %p228
    %p230 = pneg %p229
    // Predicated region
    $region9: #{encoder_s_forward.6} parent=5 // pred_check
      _
    $region10: #{encoder_s_forward.6} parent=5 // pred_check_branch
      %232 = sbr.rel (%p229) target = $region12
    $region11: #{encoder_s_forward.6} parent=5 // pred_region
      %s233 = ssub.s32 %s15, 1
      // Predicated region
      $region13: #{encoder_s_forward.6} parent=11 // pred_check
        %p234 = pneg %p62
      $region14: #{encoder_s_forward.6} parent=11 // pred_check_branch
        %236 = sbr.rel (%p234) target = $region16
      $region15: #{encoder_s_forward.6} parent=11 // pred_region
        _
      $region16: #{encoder_s_forward.6} parent=11 // pred_fallthru
        _
      // Predicated region
      $region17: #{encoder_s_forward.6} parent=11 // pred_check
        %p237 = pneg %p83
      $region18: #{encoder_s_forward.6} parent=11 // pred_check_branch
        %239 = sbr.rel (%p237) target = $region20
      $region19: #{encoder_s_forward.6} parent=11 // pred_region
        _
      $region20: #{encoder_s_forward.6} parent=11 // pred_fallthru
        _
      // Predicated region
      $region21: #{encoder_s_forward.6} parent=11 // pred_check
        %p240 = pneg %p104
      $region22: #{encoder_s_forward.6} parent=11 // pred_check_branch
        %242 = sbr.rel (%p240) target = $region24
      $region23: #{encoder_s_forward.6} parent=11 // pred_region
        _
      $region24: #{encoder_s_forward.6} parent=11 // pred_fallthru
        _
      // Predicated region
      $region25: #{encoder_s_forward.6} parent=11 // pred_check
        %p243 = pneg %p125
      $region26: #{encoder_s_forward.6} parent=11 // pred_check_branch
        %245 = sbr.rel (%p243) target = $region28
      $region27: #{encoder_s_forward.6} parent=11 // pred_region
        _
      $region28: #{encoder_s_forward.6} parent=11 // pred_fallthru
        _
      // Predicated region
      $region29: #{encoder_s_forward.6} parent=11 // pred_check
        %p246 = pneg %p146
      $region30: #{encoder_s_forward.6} parent=11 // pred_check_branch
        %248 = sbr.rel (%p246) target = $region32
      $region31: #{encoder_s_forward.6} parent=11 // pred_region
        _
      $region32: #{encoder_s_forward.6} parent=11 // pred_fallthru
        _
      // Predicated region
      $region33: #{encoder_s_forward.6} parent=11 // pred_check
        %p249 = pneg %p167
      $region34: #{encoder_s_forward.6} parent=11 // pred_check_branch
        %251 = sbr.rel (%p249) target = $region36
      $region35: #{encoder_s_forward.6} parent=11 // pred_region
        _
      $region36: #{encoder_s_forward.6} parent=11 // pred_fallthru
        _
    $region12: #{encoder_s_forward.6} parent=5 // pred_fallthru
      _
    %p252 = scmp.lt.s32.totalorder %s15, 2
    // Predicated region
    $region37: #{encoder_s_forward.6} parent=5 // pred_check
      %p253 = pneg %p252
    $region38: #{encoder_s_forward.6} parent=5 // pred_check_branch
      %255 = sbr.rel (%p253) target = $region40
    $region39: #{encoder_s_forward.6} parent=5 // pred_region
      // Predicated region
      $region41: #{encoder_s_forward.6} parent=39 // pred_check
        %p256 = pneg %p35
      $region42: #{encoder_s_forward.6} parent=39 // pred_check_branch
        %258 = sbr.rel (%p256) target = $region44
      $region43: #{encoder_s_forward.6} parent=39 // pred_region
        %p259 = scmp.lt.s32.totalorder %s15, 1
        %s260 = scalar_select %p259, %s15, 1
        %s261 = smul.addr %s260, 2
        %s262 = scalar_lea.vmem %s0, %s261
      $region44: #{encoder_s_forward.6} parent=39 // pred_fallthru
        _
    $region40: #{encoder_s_forward.6} parent=5 // pred_fallthru
      _
    %p263 = scmp.le.s32.totalorder 1, %s15
    %p264 = scmp.lt.s32.totalorder %s15, 3
    %p265 = pnand %p263, %p264
    %p266 = pneg %p265
    // Predicated region
    $region45: #{encoder_s_forward.6} parent=5 // pred_check
      _
    $region46: #{encoder_s_forward.6} parent=5 // pred_check_branch
      %268 = sbr.rel (%p265) target = $region48
    $region47: #{encoder_s_forward.6} parent=5 // pred_region
      %s269 = ssub.s32 %s15, 1
      %p270 = scmp.lt.s32.totalorder %s20, 1
      %s271 = scalar_select %p270, %s20, 1
      %s272 = smul.addr %s271, 2
      %s273 = scalar_lea.vmem %s0, %s272
      %p274 = pneg %p41
      %p275 = pneg %p38
      %p276 = pneg %p62
      %p277 = pneg %p59
      %p278 = pneg %p83
      %p279 = pneg %p80
      %p280 = pneg %p104
      %p281 = pneg %p101
      %p282 = pneg %p125
      %p283 = pneg %p122
      %p284 = pneg %p146
      %p285 = pneg %p143
      %p286 = pneg %p167
      %p287 = pneg %p164
      %p288 = pneg %p193
      %p289 = pneg %p190
      %p290 = scmp.lt.s32.totalorder %s20, 1
      %s291 = scalar_select %p290, %s20, 1
      %s292 = scalar_lea.vmem %s7, %s291
      %p293 = pneg %p219
      %p294 = pneg %p216
      %p295 = scmp.lt.s32.totalorder %s20, 1
      %s296 = scalar_select %p295, %s20, 1
      %s297 = smul.addr %s296, 2
      %s298 = scalar_lea.vmem %s8, %s297
      %p299 = scmp.lt.s32.totalorder %s20, 1
      %s300 = scalar_select %p299, %s20, 1
      %s301 = smul.addr %s300, 2
      %s302 = scalar_lea.vmem %s0, %s301
      %p303 = scmp.lt.s32.totalorder %s20, 1
      %s304 = scalar_select %p303, %s20, 1
      %s305 = scalar_lea.vmem %s7, %s304
      %p306 = scmp.lt.s32.totalorder %s20, 1
      %s307 = scalar_select %p306, %s20, 1
      %s308 = smul.addr %s307, 2
      %s309 = scalar_lea.vmem %s8, %s308
      %v311 = vld [vmem:[%s302] sm:$0x3]
      %v312 = vunpack.c.l.bf16 %v311
      %v313 = vld [vmem:[%s1] sm:$0x1]
      %v315 = vlaneseq
      %v316 = vshrl.u32 %v315, 7
      %v317 = vsub.s32 0, %v316
      %v318 = vrot.slane %v313, %v317
      %v320 = vmul.f32 %v312, %v318
      %v321 = vld [vmem:[%s2] sm:$0x1]
      %v323 = vlaneseq
      %v324 = vshrl.u32 %v323, 7
      %v325 = vsub.s32 0, %v324
      %v326 = vrot.slane %v321, %v325
      %v328 = vadd.f32 %v320, %v326
      %v329 = vpack.c.bf16 %v328, %v328
      %330 = vst [vmem:[#allocation2] sm:$0x3] %v329
      %v331 = vld [vmem:[#allocation2] sm:$0x3]
      %v332 = vld [vmem:[%s3] sm:$0xf]
      %v333 = vld [vmem:[%s3 + $0x4] sm:$0xf]
      %v334 = vld [vmem:[%s3 + $0x8] sm:$0xf]
      %v335 = vld [vmem:[%s3 + $0xc] sm:$0xf]
      %v336 = vld [vmem:[%s3 + $0x10] sm:$0xf]
      %v337 = vld [vmem:[%s3 + $0x14] sm:$0xf]
      %v338 = vld [vmem:[%s3 + $0x18] sm:$0xf]
      %v339 = vld [vmem:[%s3 + $0x1c] sm:$0xf]
      %v340 = vld [vmem:[%s3 + $0x20] sm:$0xf]
      %v341 = vld [vmem:[%s3 + $0x24] sm:$0xf]
      %v342 = vld [vmem:[%s3 + $0x28] sm:$0xf]
      %v343 = vld [vmem:[%s3 + $0x2c] sm:$0xf]
      %v344 = vld [vmem:[%s3 + $0x30] sm:$0xf]
      %v345 = vld [vmem:[%s3 + $0x34] sm:$0xf]
      %v346 = vld [vmem:[%s3 + $0x38] sm:$0xf]
      %v347 = vld [vmem:[%s3 + $0x3c] sm:$0xf]
      %v348 = vld [vmem:[%s4] sm:$0x1]
      %v350 = vlaneseq
      %v351 = vshrl.u32 %v350, 7
      %v352 = vsub.s32 0, %v351
      %v353 = vrot.slane %v348, %v352
      %v371 = vunpack.c.l.b16 %v332
      %v372 = vunpack.c.l.b16 %v333
      %v373 = vunpack.c.l.b16 %v334
      %v374 = vunpack.c.l.b16 %v335
      %v375 = vunpack.c.l.b16 %v336
      %v376 = vunpack.c.l.b16 %v337
      %v377 = vunpack.c.l.b16 %v338
      %v378 = vunpack.c.l.b16 %v339
      %v379 = vunpack.c.l.b16 %v340
      %v380 = vunpack.c.l.b16 %v341
      %v381 = vunpack.c.l.b16 %v342
      %v382 = vunpack.c.l.b16 %v343
      %v383 = vunpack.c.l.b16 %v344
      %v384 = vunpack.c.l.b16 %v345
      %v385 = vunpack.c.l.b16 %v346
      %v386 = vunpack.c.l.b16 %v347
      %v387 = vpack.c.b16 %v372, %v371
      %v388 = vpack.c.b16 %v374, %v373
      %v389 = vpack.c.b16 %v376, %v375
      %v390 = vpack.c.b16 %v378, %v377
      %v391 = vpack.c.b16 %v380, %v379
      %v392 = vpack.c.b16 %v382, %v381
      %v393 = vpack.c.b16 %v384, %v383
      %v394 = vpack.c.b16 %v386, %v385
      %403 = vmatprep.subr.bf16.mxu0 0
      %404 = vmatpush1.bf16.msra.mxu0 %v387
      %405 = vmatprep.subr.bf16.mxu0 0
      %406 = vmatpush1.bf16.msra.mxu0 %v388
      %407 = vmatprep.subr.bf16.mxu0 0
      %408 = vmatpush1.bf16.msra.mxu0 %v389
      %409 = vmatprep.subr.bf16.mxu0 0
      %410 = vmatpush1.bf16.msra.mxu0 %v390
      %411 = vmatprep.subr.bf16.mxu0 0
      %412 = vmatpush1.bf16.msra.mxu0 %v391
      %413 = vmatprep.subr.bf16.mxu0 0
      %414 = vmatpush1.bf16.msra.mxu0 %v392
      %415 = vmatprep.subr.bf16.mxu0 0
      %416 = vmatpush1.bf16.msra.mxu0 %v393
      %417 = vmatprep.subr.bf16.mxu0 0
      %418 = vmatpush1.bf16.msra.mxu0 %v394
      %419 = vmatprep.subr.bf16.mxu0 0
      %420 = vmatpush1.bf16.msra.mxu0 0
      %421 = vmatprep.subr.bf16.mxu0 0
      %422 = vmatpush1.bf16.msra.mxu0 0
      %423 = vmatprep.subr.bf16.mxu0 0
      %424 = vmatpush1.bf16.msra.mxu0 0
      %425 = vmatprep.subr.bf16.mxu0 0
      %426 = vmatpush1.bf16.msra.mxu0 0
      %427 = vmatprep.subr.bf16.mxu0 0
      %428 = vmatpush1.bf16.msra.mxu0 0
      %429 = vmatprep.subr.bf16.mxu0 0
      %430 = vmatpush1.bf16.msra.mxu0 0
      %431 = vmatprep.subr.bf16.mxu0 0
      %432 = vmatpush1.bf16.msra.mxu0 0
      %433 = vmatprep.subr.bf16.mxu0 0
      %434 = vmatpush1.bf16.msra.mxu0 0
      %435 = vmatprep.mubr.bf16.mxu0 0
      %436 = vmatmul.mubr.bf16.gmra.mrb[0].mxu0 %v331
      %v437 = vpop.f32.mrb[0].mxu0
      %v438 = vadd.f32 %v353, %v437
      %v439 = vpop.f32.mrb[0].mxu0
      %v440 = vpop.f32.mrb[0].mxu0
      %v441 = vpop.f32.mrb[0].mxu0
      %442 = vdwg.mxu0
      %v443 = vmax.f32 %v438, 0.0
      %v444 = vpack.c.bf16 %v443, %v443
      %445 = vst [vmem:[#allocation2] sm:$0x3] %v444
      %v446 = vld [vmem:[#allocation2] sm:$0x3]
      %v447 = vld [vmem:[%s5] sm:$0xf]
      %v448 = vld [vmem:[%s5 + $0x4] sm:$0xf]
      %v449 = vld [vmem:[%s5 + $0x8] sm:$0xf]
      %v450 = vld [vmem:[%s5 + $0xc] sm:$0xf]
      %v451 = vld [vmem:[%s5 + $0x10] sm:$0xf]
      %v452 = vld [vmem:[%s5 + $0x14] sm:$0xf]
      %v453 = vld [vmem:[%s5 + $0x18] sm:$0xf]
      %v454 = vld [vmem:[%s5 + $0x1c] sm:$0xf]
      %v455 = vld [vmem:[%s5 + $0x20] sm:$0xf]
      %v456 = vld [vmem:[%s5 + $0x24] sm:$0xf]
      %v457 = vld [vmem:[%s5 + $0x28] sm:$0xf]
      %v458 = vld [vmem:[%s5 + $0x2c] sm:$0xf]
      %v459 = vld [vmem:[%s5 + $0x30] sm:$0xf]
      %v460 = vld [vmem:[%s5 + $0x34] sm:$0xf]
      %v461 = vld [vmem:[%s5 + $0x38] sm:$0xf]
      %v462 = vld [vmem:[%s5 + $0x3c] sm:$0xf]
      %v463 = vld [vmem:[%s6] sm:$0x1]
      %v465 = vlaneseq
      %v466 = vshrl.u32 %v465, 7
      %v467 = vsub.s32 0, %v466
      %v468 = vrot.slane %v463, %v467
      %v486 = vunpack.c.l.b16 %v447
      %v487 = vunpack.c.l.b16 %v448
      %v488 = vunpack.c.l.b16 %v449
      %v489 = vunpack.c.l.b16 %v450
      %v490 = vunpack.c.l.b16 %v451
      %v491 = vunpack.c.l.b16 %v452
      %v492 = vunpack.c.l.b16 %v453
      %v493 = vunpack.c.l.b16 %v454
      %v494 = vunpack.c.l.b16 %v455
      %v495 = vunpack.c.l.b16 %v456
      %v496 = vunpack.c.l.b16 %v457
      %v497 = vunpack.c.l.b16 %v458
      %v498 = vunpack.c.l.b16 %v459
      %v499 = vunpack.c.l.b16 %v460
      %v500 = vunpack.c.l.b16 %v461
      %v501 = vunpack.c.l.b16 %v462
      %v502 = vpack.c.b16 %v487, %v486
      %v503 = vpack.c.b16 %v489, %v488
      %v504 = vpack.c.b16 %v491, %v490
      %v505 = vpack.c.b16 %v493, %v492
      %v506 = vpack.c.b16 %v495, %v494
      %v507 = vpack.c.b16 %v497, %v496
      %v508 = vpack.c.b16 %v499, %v498
      %v509 = vpack.c.b16 %v501, %v500
      %518 = vmatprep.subr.bf16.mxu0 0
      %519 = vmatpush1.bf16.msra.mxu0 %v502
      %520 = vmatprep.subr.bf16.mxu0 0
      %521 = vmatpush1.bf16.msra.mxu0 %v503
      %522 = vmatprep.subr.bf16.mxu0 0
      %523 = vmatpush1.bf16.msra.mxu0 %v504
      %524 = vmatprep.subr.bf16.mxu0 0
      %525 = vmatpush1.bf16.msra.mxu0 %v505
      %526 = vmatprep.subr.bf16.mxu0 0
      %527 = vmatpush1.bf16.msra.mxu0 %v506
      %528 = vmatprep.subr.bf16.mxu0 0
      %529 = vmatpush1.bf16.msra.mxu0 %v507
      %530 = vmatprep.subr.bf16.mxu0 0
      %531 = vmatpush1.bf16.msra.mxu0 %v508
      %532 = vmatprep.subr.bf16.mxu0 0
      %533 = vmatpush1.bf16.msra.mxu0 %v509
      %534 = vmatprep.subr.bf16.mxu0 0
      %535 = vmatpush1.bf16.msra.mxu0 0
      %536 = vmatprep.subr.bf16.mxu0 0
      %537 = vmatpush1.bf16.msra.mxu0 0
      %538 = vmatprep.subr.bf16.mxu0 0
      %539 = vmatpush1.bf16.msra.mxu0 0
      %540 = vmatprep.subr.bf16.mxu0 0
      %541 = vmatpush1.bf16.msra.mxu0 0
      %542 = vmatprep.subr.bf16.mxu0 0
      %543 = vmatpush1.bf16.msra.mxu0 0
      %544 = vmatprep.subr.bf16.mxu0 0
      %545 = vmatpush1.bf16.msra.mxu0 0
      %546 = vmatprep.subr.bf16.mxu0 0
      %547 = vmatpush1.bf16.msra.mxu0 0
      %548 = vmatprep.subr.bf16.mxu0 0
      %549 = vmatpush1.bf16.msra.mxu0 0
      %550 = vmatprep.mubr.bf16.mxu0 0
      %551 = vmatmul.mubr.bf16.gmra.mrb[0].mxu0 %v446
      %v552 = vpop.f32.mrb[0].mxu0
      %v553 = vadd.f32 %v468, %v552
      %v554 = vpop.f32.mrb[0].mxu0
      %v555 = vpop.f32.mrb[0].mxu0
      %v556 = vpop.f32.mrb[0].mxu0
      %557 = vdwg.mxu0
      %v558 = vmax.f32 %v553, 0.0
      %v559 = vld [vmem:[%s302] sm:$0x3]
      %v560 = vunpack.c.l.bf16 %v559
      %v561 = vld [vmem:[%s1] sm:$0x1]
      %v563 = vlaneseq
      %v564 = vshrl.u32 %v563, 7
      %v565 = vsub.s32 0, %v564
      %v566 = vrot.slane %v561, %v565
      %v568 = vmul.f32 %v560, %v566
      %v569 = vld [vmem:[%s2] sm:$0x1]
      %v571 = vlaneseq
      %v572 = vshrl.u32 %v571, 7
      %v573 = vsub.s32 0, %v572
      %v574 = vrot.slane %v569, %v573
      %v576 = vadd.f32 %v568, %v574
      %v577 = vadd.f32 %v558, %v576
      %v578 = vmax.f32 %v577, 0.0
      %579 = vst [vmem:[#allocation3] sm:$0xf] %v578
      %v580 = vld [vmem:[#allocation3] ss:$2 sm:$0x3]
      %s581 = scalar_lea.vmem [#allocation3], 1
      %v582 = vld [vmem:[%s581] ss:$2 sm:$0x3]
      %v583 = vadd.f32 %v580, %v582
      %v584 = vmul.f32 %v583, 0.5
      %v585 = vpack.c.bf16 %v584, %v584
      %586 = vst [vmem:[%s305] sm:$0x1] %v585
      %v587 = vunpack.c.l.bf16 %v585
      %vm588 = vcmask 1041408
      %v589 = vsel %vm588, %v587, 0.0
      %v590 = vrot.slane %v589, 4
      %v591 = vadd.f32 %v589, %v590
      %v592 = vrot.slane %v591, 2
      %v593 = vadd.f32 %v591, %v592
      %v594 = vrot.slane %v593, 1
      %v595 = vadd.f32 %v593, %v594
      %596 = vst [vmem:[%s309] sm:$0x1] %v595
      %v597 = vmul.f32 %v587, %v587
      %v598 = vsel %vm588, %v597, 0.0
      %v599 = vrot.slane %v598, 4
      %v600 = vadd.f32 %v598, %v599
      %v601 = vrot.slane %v600, 2
      %v602 = vadd.f32 %v600, %v601
      %v603 = vrot.slane %v602, 1
      %v604 = vadd.f32 %v602, %v603
      %605 = vst [vmem:[%s309 + $0x1] sm:$0x1] %v604
      %p606 = scmp.lt.s32.totalorder %s20, 1
      %s607 = scalar_select %p606, %s20, 1
      %s608 = scalar_lea.vmem %s7, %s607
      %p609 = scmp.lt.s32.totalorder %s20, 1
      %s610 = scalar_select %p609, %s20, 1
      %s611 = smul.addr %s610, 2
      %s612 = scalar_lea.vmem %s8, %s611
      // Predicated region
      $region49: #{encoder_s_forward.6} parent=47 // pred_check
        %p613 = pneg %p190
      $region50: #{encoder_s_forward.6} parent=47 // pred_check_branch
        %615 = sbr.rel (%p613) target = $region52
      $region51: #{encoder_s_forward.6} parent=47 // pred_region
        _
      $region52: #{encoder_s_forward.6} parent=47 // pred_fallthru
        _
      // Predicated region
      $region53: #{encoder_s_forward.6} parent=47 // pred_check
        %p616 = pneg %p216
      $region54: #{encoder_s_forward.6} parent=47 // pred_check_branch
        %618 = sbr.rel (%p616) target = $region56
      $region55: #{encoder_s_forward.6} parent=47 // pred_region
        _
      $region56: #{encoder_s_forward.6} parent=47 // pred_fallthru
        _
    $region48: #{encoder_s_forward.6} parent=5 // pred_fallthru
      _
    %p619 = scmp.le.s32.totalorder 2, %s15
    // Predicated region
    $region57: #{encoder_s_forward.6} parent=5 // pred_check
      %p620 = pneg %p619
    $region58: #{encoder_s_forward.6} parent=5 // pred_check_branch
      %622 = sbr.rel (%p620) target = $region60
    $region59: #{encoder_s_forward.6} parent=5 // pred_region
      %s623 = ssub.s32 %s15, 2
      // Predicated region
      $region61: #{encoder_s_forward.6} parent=59 // pred_check
        %p624 = pneg %p196
      $region62: #{encoder_s_forward.6} parent=59 // pred_check_branch
        %626 = sbr.rel (%p624) target = $region64
      $region63: #{encoder_s_forward.6} parent=59 // pred_region
        %p627 = scmp.lt.s32.totalorder %s21, 1
        %s628 = scalar_select %p627, %s21, 1
        %s629 = scalar_lea.vmem %s7, %s628
      $region64: #{encoder_s_forward.6} parent=59 // pred_fallthru
        _
      // Predicated region
      $region65: #{encoder_s_forward.6} parent=59 // pred_check
        %p630 = pneg %p222
      $region66: #{encoder_s_forward.6} parent=59 // pred_check_branch
        %632 = sbr.rel (%p630) target = $region68
      $region67: #{encoder_s_forward.6} parent=59 // pred_region
        %p633 = scmp.lt.s32.totalorder %s21, 1
        %s634 = scalar_select %p633, %s21, 1
        %s635 = smul.addr %s634, 2
        %s636 = scalar_lea.vmem %s8, %s635
      $region68: #{encoder_s_forward.6} parent=59 // pred_fallthru
        _
    $region60: #{encoder_s_forward.6} parent=5 // pred_fallthru
      _
  $region6: #{encoder_s_forward.6} parent=0 // loop_footer
    %s19 = sadd.s32 1, %s15
  $region7: #{encoder_s_forward.6} parent=0 // loop_footer_branch
    %14 = sbr.rel target = $region3
  $region8: #{encoder_s_forward.6} parent=0 // loop_exit
    _

// kernel: encoder_s_forward.5
$region0: #{encoder_s_forward.5}
  #allocation0 [shape = 'u32[]', space=smem, size = 0x4, offset = 0x4, fixed_abs, tag = 'smem constant byte address 0x4 - core index']
  #allocation1 [shape = 'u32[144,128]{1,0:T(1,128)}', space=vmem, size = 0x12000, scoped, tag = 'internal scratch']
  #allocation2 [shape = 'bf16[24,128]{1,0:T(8,128)(2,1)}', space=vmem, size = 0x1800, scoped, tag = 'scratch operand']
  #allocation3 [shape = 'f32[8,128]{1,0:T(8,128)}', space=vmem, size = 0x1000, scoped, tag = 'scratch operand']
  %s0 = inlined_call_operand.vmem [shape: bf16[2,8,128], index: 0, kind: input, shape index: {}]
  %s1 = inlined_call_operand.vmem [shape: f32[1,128], index: 1, kind: input, shape index: {}]
  %s2 = inlined_call_operand.vmem [shape: f32[1,128], index: 2, kind: input, shape index: {}]
  %s3 = inlined_call_operand.vmem [shape: bf16[384,128], index: 3, kind: input, shape index: {}]
  %s4 = inlined_call_operand.vmem [shape: f32[1,128], index: 4, kind: input, shape index: {}]
  %s5 = inlined_call_operand.vmem [shape: bf16[384,128], index: 5, kind: input, shape index: {}]
  %s6 = inlined_call_operand.vmem [shape: f32[1,128], index: 6, kind: input, shape index: {}]
  %s7 = inlined_call_operand.vmem [shape: bf16[2,4,128], index: 7, kind: output, shape index: {0}]
  %s8 = inlined_call_operand.vmem [shape: f32[2,2,128], index: 8, kind: output, shape index: {1}]
  %9 = xla_tuple %s7, %s8
  %s10 = sld [smem:[#allocation0]]
  $region69: #{encoder_s_forward.5} parent=0
    _
  %s12 = ssub.s32 1, %s10
  %s13 = scalar_select 0, %s12, %s10
  loop: start=0, step=1, limit=4
  $region2: #{encoder_s_forward.5} parent=0 // loop_pre_header
    _
  $region3: #{encoder_s_forward.5} parent=0 // loop_header
    %s15 = sphi 0, %s19
    %p16 = scmp.ge.s32.totalorder %s15, 4
    %s25 = sphi 0, %s27
    %s28 = sphi 0, %s25
    %s29 = sphi 0, %s28
    %s45 = sphi 0, %s29
    %s49 = sphi 0, %s49
    %s51 = sphi 0, %s49
    %s52 = sphi 0, %s51
    %s66 = sphi 0, %s52
    %s70 = sphi 0, %s70
    %s72 = sphi 0, %s70
    %s73 = sphi 0, %s72
    %s87 = sphi 0, %s73
    %s91 = sphi 0, %s91
    %s93 = sphi 0, %s91
    %s94 = sphi 0, %s93
    %s108 = sphi 0, %s94
    %s112 = sphi 0, %s112
    %s114 = sphi 0, %s112
    %s115 = sphi 0, %s114
    %s129 = sphi 0, %s115
    %s133 = sphi 0, %s133
    %s135 = sphi 0, %s133
    %s136 = sphi 0, %s135
    %s150 = sphi 0, %s136
    %s154 = sphi 0, %s154
    %s156 = sphi 0, %s154
    %s157 = sphi 0, %s156
    %s171 = sphi 0, %s157
    %s177 = sphi 0, %s179
    %s180 = sphi 0, %s177
    %s181 = sphi 0, %s180
    %s197 = sphi 0, %s181
    %s203 = sphi 0, %s205
    %s206 = sphi 0, %s203
    %s207 = sphi 0, %s206
    %s223 = sphi 0, %s207
  $region4: #{encoder_s_forward.5} parent=0 // loop_header_branch
    %18 = sbr.rel (%p16) target = $region8
  $region5: #{encoder_s_forward.5} parent=0 // loop_body
    %s20 = ssub.s32 %s15, 1
    %s21 = ssub.s32 %s15, 2
    %s22 = sadd.s32 %s15, 1
    %s23 = ssub.s32 %s15, %s22
    %p24 = scmp.eq.s32.totalorder %s23, 0
    %s26 = sadd.s32 %s25, 1
    %s27 = scalar_select %p24, %s25, %s26
    %p30 = pneg %p24
    %p31 = scmp.eq.s32.totalorder %s15, 1
    %p32 = por %p30, %p31
    %p33 = scmp.ne.s32.totalorder %s25, %s28
    %p34 = scmp.eq.s32.totalorder %s15, 0
    %p35 = por %p33, %p34
    %p36 = scmp.ne.s32.totalorder %s25, %s28
    %p37 = scmp.eq.s32.totalorder %s20, 1
    %p38 = por %p36, %p37
    %p39 = scmp.ne.s32.totalorder %s28, %s29
    %p40 = scmp.eq.s32.totalorder %s20, 0
    %p41 = por %p39, %p40
    %p42 = scmp.ne.s32.totalorder %s28, %s29
    %p43 = scmp.eq.s32.totalorder %s21, 1
    %p44 = por %p42, %p43
    %p46 = scmp.ne.s32.totalorder %s29, %s45
    %p47 = scmp.eq.s32.totalorder %s21, 0
    %p48 = por %p46, %p47
    %s50 = sadd.s32 %s49, 1
    %p53 = scmp.eq.s32.totalorder %s15, 1
    %p54 = scmp.ne.s32.totalorder %s49, %s51
    %p55 = scmp.eq.s32.totalorder %s15, 0
    %p56 = por %p54, %p55
    %p57 = scmp.ne.s32.totalorder %s49, %s51
    %p58 = scmp.eq.s32.totalorder %s20, 1
    %p59 = por %p57, %p58
    %p60 = scmp.ne.s32.totalorder %s51, %s52
    %p61 = scmp.eq.s32.totalorder %s20, 0
    %p62 = por %p60, %p61
    %p63 = scmp.ne.s32.totalorder %s51, %s52
    %p64 = scmp.eq.s32.totalorder %s21, 1
    %p65 = por %p63, %p64
    %p67 = scmp.ne.s32.totalorder %s52, %s66
    %p68 = scmp.eq.s32.totalorder %s21, 0
    %p69 = por %p67, %p68
    %s71 = sadd.s32 %s70, 1
    %p74 = scmp.eq.s32.totalorder %s15, 1
    %p75 = scmp.ne.s32.totalorder %s70, %s72
    %p76 = scmp.eq.s32.totalorder %s15, 0
    %p77 = por %p75, %p76
    %p78 = scmp.ne.s32.totalorder %s70, %s72
    %p79 = scmp.eq.s32.totalorder %s20, 1
    %p80 = por %p78, %p79
    %p81 = scmp.ne.s32.totalorder %s72, %s73
    %p82 = scmp.eq.s32.totalorder %s20, 0
    %p83 = por %p81, %p82
    %p84 = scmp.ne.s32.totalorder %s72, %s73
    %p85 = scmp.eq.s32.totalorder %s21, 1
    %p86 = por %p84, %p85
    %p88 = scmp.ne.s32.totalorder %s73, %s87
    %p89 = scmp.eq.s32.totalorder %s21, 0
    %p90 = por %p88, %p89
    %s92 = sadd.s32 %s91, 1
    %p95 = scmp.eq.s32.totalorder %s15, 1
    %p96 = scmp.ne.s32.totalorder %s91, %s93
    %p97 = scmp.eq.s32.totalorder %s15, 0
    %p98 = por %p96, %p97
    %p99 = scmp.ne.s32.totalorder %s91, %s93
    %p100 = scmp.eq.s32.totalorder %s20, 1
    %p101 = por %p99, %p100
    %p102 = scmp.ne.s32.totalorder %s93, %s94
    %p103 = scmp.eq.s32.totalorder %s20, 0
    %p104 = por %p102, %p103
    %p105 = scmp.ne.s32.totalorder %s93, %s94
    %p106 = scmp.eq.s32.totalorder %s21, 1
    %p107 = por %p105, %p106
    %p109 = scmp.ne.s32.totalorder %s94, %s108
    %p110 = scmp.eq.s32.totalorder %s21, 0
    %p111 = por %p109, %p110
    %s113 = sadd.s32 %s112, 1
    %p116 = scmp.eq.s32.totalorder %s15, 1
    %p117 = scmp.ne.s32.totalorder %s112, %s114
    %p118 = scmp.eq.s32.totalorder %s15, 0
    %p119 = por %p117, %p118
    %p120 = scmp.ne.s32.totalorder %s112, %s114
    %p121 = scmp.eq.s32.totalorder %s20, 1
    %p122 = por %p120, %p121
    %p123 = scmp.ne.s32.totalorder %s114, %s115
    %p124 = scmp.eq.s32.totalorder %s20, 0
    %p125 = por %p123, %p124
    %p126 = scmp.ne.s32.totalorder %s114, %s115
    %p127 = scmp.eq.s32.totalorder %s21, 1
    %p128 = por %p126, %p127
    %p130 = scmp.ne.s32.totalorder %s115, %s129
    %p131 = scmp.eq.s32.totalorder %s21, 0
    %p132 = por %p130, %p131
    %s134 = sadd.s32 %s133, 1
    %p137 = scmp.eq.s32.totalorder %s15, 1
    %p138 = scmp.ne.s32.totalorder %s133, %s135
    %p139 = scmp.eq.s32.totalorder %s15, 0
    %p140 = por %p138, %p139
    %p141 = scmp.ne.s32.totalorder %s133, %s135
    %p142 = scmp.eq.s32.totalorder %s20, 1
    %p143 = por %p141, %p142
    %p144 = scmp.ne.s32.totalorder %s135, %s136
    %p145 = scmp.eq.s32.totalorder %s20, 0
    %p146 = por %p144, %p145
    %p147 = scmp.ne.s32.totalorder %s135, %s136
    %p148 = scmp.eq.s32.totalorder %s21, 1
    %p149 = por %p147, %p148
    %p151 = scmp.ne.s32.totalorder %s136, %s150
    %p152 = scmp.eq.s32.totalorder %s21, 0
    %p153 = por %p151, %p152
    %s155 = sadd.s32 %s154, 1
    %p158 = scmp.eq.s32.totalorder %s15, 1
    %p159 = scmp.ne.s32.totalorder %s154, %s156
    %p160 = scmp.eq.s32.totalorder %s15, 0
    %p161 = por %p159, %p160
    %p162 = scmp.ne.s32.totalorder %s154, %s156
    %p163 = scmp.eq.s32.totalorder %s20, 1
    %p164 = por %p162, %p163
    %p165 = scmp.ne.s32.totalorder %s156, %s157
    %p166 = scmp.eq.s32.totalorder %s20, 0
    %p167 = por %p165, %p166
    %p168 = scmp.ne.s32.totalorder %s156, %s157
    %p169 = scmp.eq.s32.totalorder %s21, 1
    %p170 = por %p168, %p169
    %p172 = scmp.ne.s32.totalorder %s157, %s171
    %p173 = scmp.eq.s32.totalorder %s21, 0
    %p174 = por %p172, %p173
    %s175 = ssub.s32 %s15, %s22
    %p176 = scmp.eq.s32.totalorder %s175, 0
    %s178 = sadd.s32 %s177, 1
    %s179 = scalar_select %p176, %s177, %s178
    %p182 = pneg %p176
    %p183 = scmp.eq.s32.totalorder %s15, 1
    %p184 = por %p182, %p183
    %p185 = scmp.ne.s32.totalorder %s177, %s180
    %p186 = scmp.eq.s32.totalorder %s15, 0
    %p187 = por %p185, %p186
    %p188 = scmp.ne.s32.totalorder %s177, %s180
    %p189 = scmp.eq.s32.totalorder %s20, 1
    %p190 = por %p188, %p189
    %p191 = scmp.ne.s32.totalorder %s180, %s181
    %p192 = scmp.eq.s32.totalorder %s20, 0
    %p193 = por %p191, %p192
    %p194 = scmp.ne.s32.totalorder %s180, %s181
    %p195 = scmp.eq.s32.totalorder %s21, 1
    %p196 = por %p194, %p195
    %p198 = scmp.ne.s32.totalorder %s181, %s197
    %p199 = scmp.eq.s32.totalorder %s21, 0
    %p200 = por %p198, %p199
    %s201 = ssub.s32 %s15, %s22
    %p202 = scmp.eq.s32.totalorder %s201, 0
    %s204 = sadd.s32 %s203, 1
    %s205 = scalar_select %p202, %s203, %s204
    %p208 = pneg %p202
    %p209 = scmp.eq.s32.totalorder %s15, 1
    %p210 = por %p208, %p209
    %p211 = scmp.ne.s32.totalorder %s203, %s206
    %p212 = scmp.eq.s32.totalorder %s15, 0
    %p213 = por %p211, %p212
    %p214 = scmp.ne.s32.totalorder %s203, %s206
    %p215 = scmp.eq.s32.totalorder %s20, 1
    %p216 = por %p214, %p215
    %p217 = scmp.ne.s32.totalorder %s206, %s207
    %p218 = scmp.eq.s32.totalorder %s20, 0
    %p219 = por %p217, %p218
    %p220 = scmp.ne.s32.totalorder %s206, %s207
    %p221 = scmp.eq.s32.totalorder %s21, 1
    %p222 = por %p220, %p221
    %p224 = scmp.ne.s32.totalorder %s207, %s223
    %p225 = scmp.eq.s32.totalorder %s21, 0
    %p226 = por %p224, %p225
    %p227 = scmp.le.s32.totalorder 1, %s15
    %p228 = scmp.lt.s32.totalorder %s15, 3
    %p229 = pnand %p227, %p228
    %p230 = pneg %p229
    // Predicated region
    $region9: #{encoder_s_forward.5} parent=5 // pred_check
      _
    $region10: #{encoder_s_forward.5} parent=5 // pred_check_branch
      %232 = sbr.rel (%p229) target = $region12
    $region11: #{encoder_s_forward.5} parent=5 // pred_region
      %s233 = ssub.s32 %s15, 1
      // Predicated region
      $region13: #{encoder_s_forward.5} parent=11 // pred_check
        %p234 = pneg %p62
      $region14: #{encoder_s_forward.5} parent=11 // pred_check_branch
        %236 = sbr.rel (%p234) target = $region16
      $region15: #{encoder_s_forward.5} parent=11 // pred_region
        _
      $region16: #{encoder_s_forward.5} parent=11 // pred_fallthru
        _
      // Predicated region
      $region17: #{encoder_s_forward.5} parent=11 // pred_check
        %p237 = pneg %p83
      $region18: #{encoder_s_forward.5} parent=11 // pred_check_branch
        %239 = sbr.rel (%p237) target = $region20
      $region19: #{encoder_s_forward.5} parent=11 // pred_region
        _
      $region20: #{encoder_s_forward.5} parent=11 // pred_fallthru
        _
      // Predicated region
      $region21: #{encoder_s_forward.5} parent=11 // pred_check
        %p240 = pneg %p104
      $region22: #{encoder_s_forward.5} parent=11 // pred_check_branch
        %242 = sbr.rel (%p240) target = $region24
      $region23: #{encoder_s_forward.5} parent=11 // pred_region
        _
      $region24: #{encoder_s_forward.5} parent=11 // pred_fallthru
        _
      // Predicated region
      $region25: #{encoder_s_forward.5} parent=11 // pred_check
        %p243 = pneg %p125
      $region26: #{encoder_s_forward.5} parent=11 // pred_check_branch
        %245 = sbr.rel (%p243) target = $region28
      $region27: #{encoder_s_forward.5} parent=11 // pred_region
        _
      $region28: #{encoder_s_forward.5} parent=11 // pred_fallthru
        _
      // Predicated region
      $region29: #{encoder_s_forward.5} parent=11 // pred_check
        %p246 = pneg %p146
      $region30: #{encoder_s_forward.5} parent=11 // pred_check_branch
        %248 = sbr.rel (%p246) target = $region32
      $region31: #{encoder_s_forward.5} parent=11 // pred_region
        _
      $region32: #{encoder_s_forward.5} parent=11 // pred_fallthru
        _
      // Predicated region
      $region33: #{encoder_s_forward.5} parent=11 // pred_check
        %p249 = pneg %p167
      $region34: #{encoder_s_forward.5} parent=11 // pred_check_branch
        %251 = sbr.rel (%p249) target = $region36
      $region35: #{encoder_s_forward.5} parent=11 // pred_region
        _
      $region36: #{encoder_s_forward.5} parent=11 // pred_fallthru
        _
    $region12: #{encoder_s_forward.5} parent=5 // pred_fallthru
      _
    %p252 = scmp.lt.s32.totalorder %s15, 2
    // Predicated region
    $region37: #{encoder_s_forward.5} parent=5 // pred_check
      %p253 = pneg %p252
    $region38: #{encoder_s_forward.5} parent=5 // pred_check_branch
      %255 = sbr.rel (%p253) target = $region40
    $region39: #{encoder_s_forward.5} parent=5 // pred_region
      // Predicated region
      $region41: #{encoder_s_forward.5} parent=39 // pred_check
        %p256 = pneg %p35
      $region42: #{encoder_s_forward.5} parent=39 // pred_check_branch
        %258 = sbr.rel (%p256) target = $region44
      $region43: #{encoder_s_forward.5} parent=39 // pred_region
        %p259 = scmp.lt.s32.totalorder %s15, 1
        %s260 = scalar_select %p259, %s15, 1
        %s261 = smul.addr %s260, 4
        %s262 = scalar_lea.vmem %s0, %s261
      $region44: #{encoder_s_forward.5} parent=39 // pred_fallthru
        _
    $region40: #{encoder_s_forward.5} parent=5 // pred_fallthru
      _
    %p263 = scmp.le.s32.totalorder 1, %s15
    %p264 = scmp.lt.s32.totalorder %s15, 3
    %p265 = pnand %p263, %p264
    %p266 = pneg %p265
    // Predicated region
    $region45: #{encoder_s_forward.5} parent=5 // pred_check
      _
    $region46: #{encoder_s_forward.5} parent=5 // pred_check_branch
      %268 = sbr.rel (%p265) target = $region48
    $region47: #{encoder_s_forward.5} parent=5 // pred_region
      %s269 = ssub.s32 %s15, 1
      %p270 = scmp.lt.s32.totalorder %s20, 1
      %s271 = scalar_select %p270, %s20, 1
      %s272 = smul.addr %s271, 4
      %s273 = scalar_lea.vmem %s0, %s272
      %p274 = pneg %p41
      %p275 = pneg %p38
      %p276 = pneg %p62
      %p277 = pneg %p59
      %p278 = pneg %p83
      %p279 = pneg %p80
      %p280 = pneg %p104
      %p281 = pneg %p101
      %p282 = pneg %p125
      %p283 = pneg %p122
      %p284 = pneg %p146
      %p285 = pneg %p143
      %p286 = pneg %p167
      %p287 = pneg %p164
      %p288 = pneg %p193
      %p289 = pneg %p190
      %p290 = scmp.lt.s32.totalorder %s20, 1
      %s291 = scalar_select %p290, %s20, 1
      %s292 = smul.addr %s291, 2
      %s293 = scalar_lea.vmem %s7, %s292
      %p294 = pneg %p219
      %p295 = pneg %p216
      %p296 = scmp.lt.s32.totalorder %s20, 1
      %s297 = scalar_select %p296, %s20, 1
      %s298 = smul.addr %s297, 2
      %s299 = scalar_lea.vmem %s8, %s298
      %p300 = scmp.lt.s32.totalorder %s20, 1
      %s301 = scalar_select %p300, %s20, 1
      %s302 = smul.addr %s301, 4
      %s303 = scalar_lea.vmem %s0, %s302
      %p304 = scmp.lt.s32.totalorder %s20, 1
      %s305 = scalar_select %p304, %s20, 1
      %s306 = smul.addr %s305, 2
      %s307 = scalar_lea.vmem %s7, %s306
      %p308 = scmp.lt.s32.totalorder %s20, 1
      %s309 = scalar_select %p308, %s20, 1
      %s310 = smul.addr %s309, 2
      %s311 = scalar_lea.vmem %s8, %s310
      %313 = vst [vmem:[#allocation2] sm:$0xf] 0
      %314 = vst [vmem:[#allocation2 + $0x4] sm:$0xf] 0
      %v315 = vld [vmem:[%s303] sm:$0xf]
      %v316 = vunpack.c.l.bf16 %v315
      %v317 = vld [vmem:[%s1] sm:$0x1]
      %v319 = vlaneseq
      %v320 = vshrl.u32 %v319, 7
      %v321 = vsub.s32 0, %v320
      %v322 = vrot.slane %v317, %v321
      %v324 = vmul.f32 %v316, %v322
      %v325 = vld [vmem:[%s2] sm:$0x1]
      %v327 = vlaneseq
      %v328 = vshrl.u32 %v327, 7
      %v329 = vsub.s32 0, %v328
      %v330 = vrot.slane %v325, %v329
      %v332 = vadd.f32 %v324, %v330
      %v333 = vpack.c.bf16 %v332, %v332
      %334 = vst [vmem:[#allocation2 + $0x8] sm:$0xf] %v333
      %v335 = vld [vmem:[#allocation2 + $0x4] sm:$0xc]
      %v336 = vld [vmem:[#allocation2 + $0x8] sm:$0x3]
      %v337 = vld [vmem:[#allocation2 + $0x4] sm:$0x8]
      %v338 = vld [vmem:[#allocation2 + $0x8] sm:$0x7]
      %v339 = vld [vmem:[#allocation2 + $0x8] sm:$0xf]
      %v342 = vunpack.c.l.b16 %v335
      %v343 = vunpack.c.l.b16 %v336
      %v344 = vpack.c.b16 %v343, %v342
      %v347 = vunpack.c.l.b16 %v337
      %v348 = vunpack.c.l.b16 %v338
      %v349 = vpack.c.b16 %v348, %v347
      %v350 = vrot.slane %v349, 1
      %v352 = vunpack.c.l.b16 %v339
      %v353 = vpack.c.b16 %v352, %v352
      %v354 = vrot.slane %v353, 6
      %v355 = vld [vmem:[%s3] sm:$0xf]
      %v356 = vld [vmem:[%s3 + $0x4] sm:$0xf]
      %v357 = vld [vmem:[%s3 + $0x8] sm:$0xf]
      %v358 = vld [vmem:[%s3 + $0xc] sm:$0xf]
      %v359 = vld [vmem:[%s3 + $0x10] sm:$0xf]
      %v360 = vld [vmem:[%s3 + $0x14] sm:$0xf]
      %v361 = vld [vmem:[%s3 + $0x18] sm:$0xf]
      %v362 = vld [vmem:[%s3 + $0x1c] sm:$0xf]
      %v363 = vld [vmem:[%s3 + $0x20] sm:$0xf]
      %v364 = vld [vmem:[%s3 + $0x24] sm:$0xf]
      %v365 = vld [vmem:[%s3 + $0x28] sm:$0xf]
      %v366 = vld [vmem:[%s3 + $0x2c] sm:$0xf]
      %v367 = vld [vmem:[%s3 + $0x30] sm:$0xf]
      %v368 = vld [vmem:[%s3 + $0x34] sm:$0xf]
      %v369 = vld [vmem:[%s3 + $0x38] sm:$0xf]
      %v370 = vld [vmem:[%s3 + $0x3c] sm:$0xf]
      %v371 = vld [vmem:[%s3 + $0x40] sm:$0xf]
      %v372 = vld [vmem:[%s3 + $0x44] sm:$0xf]
      %v373 = vld [vmem:[%s3 + $0x48] sm:$0xf]
      %v374 = vld [vmem:[%s3 + $0x4c] sm:$0xf]
      %v375 = vld [vmem:[%s3 + $0x50] sm:$0xf]
      %v376 = vld [vmem:[%s3 + $0x54] sm:$0xf]
      %v377 = vld [vmem:[%s3 + $0x58] sm:$0xf]
      %v378 = vld [vmem:[%s3 + $0x5c] sm:$0xf]
      %v379 = vld [vmem:[%s3 + $0x60] sm:$0xf]
      %v380 = vld [vmem:[%s3 + $0x64] sm:$0xf]
      %v381 = vld [vmem:[%s3 + $0x68] sm:$0xf]
      %v382 = vld [vmem:[%s3 + $0x6c] sm:$0xf]
      %v383 = vld [vmem:[%s3 + $0x70] sm:$0xf]
      %v384 = vld [vmem:[%s3 + $0x74] sm:$0xf]
      %v385 = vld [vmem:[%s3 + $0x78] sm:$0xf]
      %v386 = vld [vmem:[%s3 + $0x7c] sm:$0xf]
      %v387 = vld [vmem:[%s3 + $0x80] sm:$0xf]
      %v388 = vld [vmem:[%s3 + $0x84] sm:$0xf]
      %v389 = vld [vmem:[%s3 + $0x88] sm:$0xf]
      %v390 = vld [vmem:[%s3 + $0x8c] sm:$0xf]
      %v391 = vld [vmem:[%s3 + $0x90] sm:$0xf]
      %v392 = vld [vmem:[%s3 + $0x94] sm:$0xf]
      %v393 = vld [vmem:[%s3 + $0x98] sm:$0xf]
      %v394 = vld [vmem:[%s3 + $0x9c] sm:$0xf]
      %v395 = vld [vmem:[%s3 + $0xa0] sm:$0xf]
      %v396 = vld [vmem:[%s3 + $0xa4] sm:$0xf]
      %v397 = vld [vmem:[%s3 + $0xa8] sm:$0xf]
      %v398 = vld [vmem:[%s3 + $0xac] sm:$0xf]
      %v399 = vld [vmem:[%s3 + $0xb0] sm:$0xf]
      %v400 = vld [vmem:[%s3 + $0xb4] sm:$0xf]
      %v401 = vld [vmem:[%s3 + $0xb8] sm:$0xf]
      %v402 = vld [vmem:[%s3 + $0xbc] sm:$0xf]
      %v403 = vld [vmem:[%s4] sm:$0x1]
      %v405 = vlaneseq
      %v406 = vshrl.u32 %v405, 7
      %v407 = vsub.s32 0, %v406
      %v408 = vrot.slane %v403, %v407
      %v410 = vrot.slane %v344, 2
      %v411 = vrot.slane %v350, 2
      %v412 = vrot.slane %v354, 2
      %v464 = vunpack.c.l.b16 %v355
      %v465 = vunpack.c.l.b16 %v356
      %v466 = vunpack.c.l.b16 %v357
      %v467 = vunpack.c.l.b16 %v358
      %v468 = vunpack.c.l.b16 %v359
      %v469 = vunpack.c.l.b16 %v360
      %v470 = vunpack.c.l.b16 %v361
      %v471 = vunpack.c.l.b16 %v362
      %v472 = vunpack.c.l.b16 %v363
      %v473 = vunpack.c.l.b16 %v364
      %v474 = vunpack.c.l.b16 %v365
      %v475 = vunpack.c.l.b16 %v366
      %v476 = vunpack.c.l.b16 %v367
      %v477 = vunpack.c.l.b16 %v368
      %v478 = vunpack.c.l.b16 %v369
      %v479 = vunpack.c.l.b16 %v370
      %v480 = vunpack.c.l.b16 %v371
      %v481 = vunpack.c.l.b16 %v372
      %v482 = vunpack.c.l.b16 %v373
      %v483 = vunpack.c.l.b16 %v374
      %v484 = vunpack.c.l.b16 %v375
      %v485 = vunpack.c.l.b16 %v376
      %v486 = vunpack.c.l.b16 %v377
      %v487 = vunpack.c.l.b16 %v378
      %v488 = vunpack.c.l.b16 %v379
      %v489 = vunpack.c.l.b16 %v380
      %v490 = vunpack.c.l.b16 %v381
      %v491 = vunpack.c.l.b16 %v382
      %v492 = vunpack.c.l.b16 %v383
      %v493 = vunpack.c.l.b16 %v384
      %v494 = vunpack.c.l.b16 %v385
      %v495 = vunpack.c.l.b16 %v386
      %v496 = vunpack.c.l.b16 %v387
      %v497 = vunpack.c.l.b16 %v388
      %v498 = vunpack.c.l.b16 %v389
      %v499 = vunpack.c.l.b16 %v390
      %v500 = vunpack.c.l.b16 %v391
      %v501 = vunpack.c.l.b16 %v392
      %v502 = vunpack.c.l.b16 %v393
      %v503 = vunpack.c.l.b16 %v394
      %v504 = vunpack.c.l.b16 %v395
      %v505 = vunpack.c.l.b16 %v396
      %v506 = vunpack.c.l.b16 %v397
      %v507 = vunpack.c.l.b16 %v398
      %v508 = vunpack.c.l.b16 %v399
      %v509 = vunpack.c.l.b16 %v400
      %v510 = vunpack.c.l.b16 %v401
      %v511 = vunpack.c.l.b16 %v402
      %v512 = vpack.c.b16 %v465, %v464
      %v513 = vpack.c.b16 %v467, %v466
      %v514 = vpack.c.b16 %v469, %v468
      %v515 = vpack.c.b16 %v471, %v470
      %v516 = vpack.c.b16 %v473, %v472
      %v517 = vpack.c.b16 %v475, %v474
      %v518 = vpack.c.b16 %v477, %v476
      %v519 = vpack.c.b16 %v479, %v478
      %v520 = vpack.c.b16 %v481, %v480
      %v521 = vpack.c.b16 %v483, %v482
      %v522 = vpack.c.b16 %v485, %v484
      %v523 = vpack.c.b16 %v487, %v486
      %v524 = vpack.c.b16 %v489, %v488
      %v525 = vpack.c.b16 %v491, %v490
      %v526 = vpack.c.b16 %v493, %v492
      %v527 = vpack.c.b16 %v495, %v494
      %v528 = vpack.c.b16 %v497, %v496
      %v529 = vpack.c.b16 %v499, %v498
      %v530 = vpack.c.b16 %v501, %v500
      %v531 = vpack.c.b16 %v503, %v502
      %v532 = vpack.c.b16 %v505, %v504
      %v533 = vpack.c.b16 %v507, %v506
      %v534 = vpack.c.b16 %v509, %v508
      %v535 = vpack.c.b16 %v511, %v510
      %560 = vmatprep.subr.bf16.mxu0 0
      %561 = vmatpush1.bf16.msra.mxu0 %v512
      %562 = vmatprep.subr.bf16.mxu0 0
      %563 = vmatpush1.bf16.msra.mxu0 %v513
      %564 = vmatprep.subr.bf16.mxu0 0
      %565 = vmatpush1.bf16.msra.mxu0 %v514
      %566 = vmatprep.subr.bf16.mxu0 0
      %567 = vmatpush1.bf16.msra.mxu0 %v515
      %568 = vmatprep.subr.bf16.mxu0 0
      %569 = vmatpush1.bf16.msra.mxu0 %v516
      %570 = vmatprep.subr.bf16.mxu0 0
      %571 = vmatpush1.bf16.msra.mxu0 %v517
      %572 = vmatprep.subr.bf16.mxu0 0
      %573 = vmatpush1.bf16.msra.mxu0 %v518
      %574 = vmatprep.subr.bf16.mxu0 0
      %575 = vmatpush1.bf16.msra.mxu0 %v519
      %576 = vmatprep.subr.bf16.mxu0 0
      %577 = vmatpush1.bf16.msra.mxu0 %v520
      %578 = vmatprep.subr.bf16.mxu0 0
      %579 = vmatpush1.bf16.msra.mxu0 %v521
      %580 = vmatprep.subr.bf16.mxu0 0
      %581 = vmatpush1.bf16.msra.mxu0 %v522
      %582 = vmatprep.subr.bf16.mxu0 0
      %583 = vmatpush1.bf16.msra.mxu0 %v523
      %584 = vmatprep.subr.bf16.mxu0 0
      %585 = vmatpush1.bf16.msra.mxu0 %v524
      %586 = vmatprep.subr.bf16.mxu0 0
      %587 = vmatpush1.bf16.msra.mxu0 %v525
      %588 = vmatprep.subr.bf16.mxu0 0
      %589 = vmatpush1.bf16.msra.mxu0 %v526
      %590 = vmatprep.subr.bf16.mxu0 0
      %591 = vmatpush1.bf16.msra.mxu0 %v527
      %592 = vmatprep.mubr.bf16.mxu0 %v411
      %593 = vmatmul.mubr.bf16.gmra.mrb[0].mxu0 %v410
      %v594 = vpop.f32.mrb[0].mxu0
      %v595 = vadd.f32 %v408, %v594
      %v596 = vpop.f32.mrb[0].mxu0
      %v597 = vpop.f32.mrb[0].mxu0
      %v598 = vpop.f32.mrb[0].mxu0
      %599 = vdwg.mxu0
      %600 = vmatprep.subr.bf16.mxu0 0
      %601 = vmatpush1.bf16.msra.mxu0 %v528
      %602 = vmatprep.subr.bf16.mxu0 0
      %603 = vmatpush1.bf16.msra.mxu0 %v529
      %604 = vmatprep.subr.bf16.mxu0 0
      %605 = vmatpush1.bf16.msra.mxu0 %v530
      %606 = vmatprep.subr.bf16.mxu0 0
      %607 = vmatpush1.bf16.msra.mxu0 %v531
      %608 = vmatprep.subr.bf16.mxu0 0
      %609 = vmatpush1.bf16.msra.mxu0 %v532
      %610 = vmatprep.subr.bf16.mxu0 0
      %611 = vmatpush1.bf16.msra.mxu0 %v533
      %612 = vmatprep.subr.bf16.mxu0 0
      %613 = vmatpush1.bf16.msra.mxu0 %v534
      %614 = vmatprep.subr.bf16.mxu0 0
      %615 = vmatpush1.bf16.msra.mxu0 %v535
      %616 = vmatprep.subr.bf16.mxu0 0
      %617 = vmatpush1.bf16.msra.mxu0 0
      %618 = vmatprep.subr.bf16.mxu0 0
      %619 = vmatpush1.bf16.msra.mxu0 0
      %620 = vmatprep.subr.bf16.mxu0 0
      %621 = vmatpush1.bf16.msra.mxu0 0
      %622 = vmatprep.subr.bf16.mxu0 0
      %623 = vmatpush1.bf16.msra.mxu0 0
      %624 = vmatprep.subr.bf16.mxu0 0
      %625 = vmatpush1.bf16.msra.mxu0 0
      %626 = vmatprep.subr.bf16.mxu0 0
      %627 = vmatpush1.bf16.msra.mxu0 0
      %628 = vmatprep.subr.bf16.mxu0 0
      %629 = vmatpush1.bf16.msra.mxu0 0
      %630 = vmatprep.subr.bf16.mxu0 0
      %631 = vmatpush1.bf16.msra.mxu0 0
      %632 = vmatprep.mubr.bf16.mxu0 0
      %633 = vmatmul.mubr.bf16.gmra.mrb[0].mxu0 %v412
      %v634 = vpop.f32.mrb[0].mxu0
      %v635 = vadd.f32 %v595, %v634
      %v636 = vpop.f32.mrb[0].mxu0
      %v637 = vpop.f32.mrb[0].mxu0
      %v638 = vpop.f32.mrb[0].mxu0
      %639 = vdwg.mxu0
      %v640 = vmax.f32 %v635, 0.0
      %v641 = vpack.c.bf16 %v640, %v640
      %642 = vst [vmem:[#allocation2 + $0x8] sm:$0xf] %v641
      %v643 = vld [vmem:[#allocation2 + $0x4] sm:$0xc]
      %v644 = vld [vmem:[#allocation2 + $0x8] sm:$0x3]
      %v645 = vld [vmem:[#allocation2 + $0x4] sm:$0x8]
      %v646 = vld [vmem:[#allocation2 + $0x8] sm:$0x7]
      %v647 = vld [vmem:[#allocation2 + $0x8] sm:$0xf]
      %v650 = vunpack.c.l.b16 %v643
      %v651 = vunpack.c.l.b16 %v644
      %v652 = vpack.c.b16 %v651, %v650
      %v655 = vunpack.c.l.b16 %v645
      %v656 = vunpack.c.l.b16 %v646
      %v657 = vpack.c.b16 %v656, %v655
      %v658 = vrot.slane %v657, 1
      %v660 = vunpack.c.l.b16 %v647
      %v661 = vpack.c.b16 %v660, %v660
      %v662 = vrot.slane %v661, 6
      %v663 = vld [vmem:[%s5] sm:$0xf]
      %v664 = vld [vmem:[%s5 + $0x4] sm:$0xf]
      %v665 = vld [vmem:[%s5 + $0x8] sm:$0xf]
      %v666 = vld [vmem:[%s5 + $0xc] sm:$0xf]
      %v667 = vld [vmem:[%s5 + $0x10] sm:$0xf]
      %v668 = vld [vmem:[%s5 + $0x14] sm:$0xf]
      %v669 = vld [vmem:[%s5 + $0x18] sm:$0xf]
      %v670 = vld [vmem:[%s5 + $0x1c] sm:$0xf]
      %v671 = vld [vmem:[%s5 + $0x20] sm:$0xf]
      %v672 = vld [vmem:[%s5 + $0x24] sm:$0xf]
      %v673 = vld [vmem:[%s5 + $0x28] sm:$0xf]
      %v674 = vld [vmem:[%s5 + $0x2c] sm:$0xf]
      %v675 = vld [vmem:[%s5 + $0x30] sm:$0xf]
      %v676 = vld [vmem:[%s5 + $0x34] sm:$0xf]
      %v677 = vld [vmem:[%s5 + $0x38] sm:$0xf]
      %v678 = vld [vmem:[%s5 + $0x3c] sm:$0xf]
      %v679 = vld [vmem:[%s5 + $0x40] sm:$0xf]
      %v680 = vld [vmem:[%s5 + $0x44] sm:$0xf]
      %v681 = vld [vmem:[%s5 + $0x48] sm:$0xf]
      %v682 = vld [vmem:[%s5 + $0x4c] sm:$0xf]
      %v683 = vld [vmem:[%s5 + $0x50] sm:$0xf]
      %v684 = vld [vmem:[%s5 + $0x54] sm:$0xf]
      %v685 = vld [vmem:[%s5 + $0x58] sm:$0xf]
      %v686 = vld [vmem:[%s5 + $0x5c] sm:$0xf]
      %v687 = vld [vmem:[%s5 + $0x60] sm:$0xf]
      %v688 = vld [vmem:[%s5 + $0x64] sm:$0xf]
      %v689 = vld [vmem:[%s5 + $0x68] sm:$0xf]
      %v690 = vld [vmem:[%s5 + $0x6c] sm:$0xf]
      %v691 = vld [vmem:[%s5 + $0x70] sm:$0xf]
      %v692 = vld [vmem:[%s5 + $0x74] sm:$0xf]
      %v693 = vld [vmem:[%s5 + $0x78] sm:$0xf]
      %v694 = vld [vmem:[%s5 + $0x7c] sm:$0xf]
      %v695 = vld [vmem:[%s5 + $0x80] sm:$0xf]
      %v696 = vld [vmem:[%s5 + $0x84] sm:$0xf]
      %v697 = vld [vmem:[%s5 + $0x88] sm:$0xf]
      %v698 = vld [vmem:[%s5 + $0x8c] sm:$0xf]
      %v699 = vld [vmem:[%s5 + $0x90] sm:$0xf]
      %v700 = vld [vmem:[%s5 + $0x94] sm:$0xf]
      %v701 = vld [vmem:[%s5 + $0x98] sm:$0xf]
      %v702 = vld [vmem:[%s5 + $0x9c] sm:$0xf]
      %v703 = vld [vmem:[%s5 + $0xa0] sm:$0xf]
      %v704 = vld [vmem:[%s5 + $0xa4] sm:$0xf]
      %v705 = vld [vmem:[%s5 + $0xa8] sm:$0xf]
      %v706 = vld [vmem:[%s5 + $0xac] sm:$0xf]
      %v707 = vld [vmem:[%s5 + $0xb0] sm:$0xf]
      %v708 = vld [vmem:[%s5 + $0xb4] sm:$0xf]
      %v709 = vld [vmem:[%s5 + $0xb8] sm:$0xf]
      %v710 = vld [vmem:[%s5 + $0xbc] sm:$0xf]
      %v711 = vld [vmem:[%s6] sm:$0x1]
      %v713 = vlaneseq
      %v714 = vshrl.u32 %v713, 7
      %v715 = vsub.s32 0, %v714
      %v716 = vrot.slane %v711, %v715
      %v718 = vrot.slane %v652, 2
      %v719 = vrot.slane %v658, 2
      %v720 = vrot.slane %v662, 2
      %v772 = vunpack.c.l.b16 %v663
      %v773 = vunpack.c.l.b16 %v664
      %v774 = vunpack.c.l.b16 %v665
      %v775 = vunpack.c.l.b16 %v666
      %v776 = vunpack.c.l.b16 %v667
      %v777 = vunpack.c.l.b16 %v668
      %v778 = vunpack.c.l.b16 %v669
      %v779 = vunpack.c.l.b16 %v670
      %v780 = vunpack.c.l.b16 %v671
      %v781 = vunpack.c.l.b16 %v672
      %v782 = vunpack.c.l.b16 %v673
      %v783 = vunpack.c.l.b16 %v674
      %v784 = vunpack.c.l.b16 %v675
      %v785 = vunpack.c.l.b16 %v676
      %v786 = vunpack.c.l.b16 %v677
      %v787 = vunpack.c.l.b16 %v678
      %v788 = vunpack.c.l.b16 %v679
      %v789 = vunpack.c.l.b16 %v680
      %v790 = vunpack.c.l.b16 %v681
      %v791 = vunpack.c.l.b16 %v682
      %v792 = vunpack.c.l.b16 %v683
      %v793 = vunpack.c.l.b16 %v684
      %v794 = vunpack.c.l.b16 %v685
      %v795 = vunpack.c.l.b16 %v686
      %v796 = vunpack.c.l.b16 %v687
      %v797 = vunpack.c.l.b16 %v688
      %v798 = vunpack.c.l.b16 %v689
      %v799 = vunpack.c.l.b16 %v690
      %v800 = vunpack.c.l.b16 %v691
      %v801 = vunpack.c.l.b16 %v692
      %v802 = vunpack.c.l.b16 %v693
      %v803 = vunpack.c.l.b16 %v694
      %v804 = vunpack.c.l.b16 %v695
      %v805 = vunpack.c.l.b16 %v696
      %v806 = vunpack.c.l.b16 %v697
      %v807 = vunpack.c.l.b16 %v698
      %v808 = vunpack.c.l.b16 %v699
      %v809 = vunpack.c.l.b16 %v700
      %v810 = vunpack.c.l.b16 %v701
      %v811 = vunpack.c.l.b16 %v702
      %v812 = vunpack.c.l.b16 %v703
      %v813 = vunpack.c.l.b16 %v704
      %v814 = vunpack.c.l.b16 %v705
      %v815 = vunpack.c.l.b16 %v706
      %v816 = vunpack.c.l.b16 %v707
      %v817 = vunpack.c.l.b16 %v708
      %v818 = vunpack.c.l.b16 %v709
      %v819 = vunpack.c.l.b16 %v710
      %v820 = vpack.c.b16 %v773, %v772
      %v821 = vpack.c.b16 %v775, %v774
      %v822 = vpack.c.b16 %v777, %v776
      %v823 = vpack.c.b16 %v779, %v778
      %v824 = vpack.c.b16 %v781, %v780
      %v825 = vpack.c.b16 %v783, %v782
      %v826 = vpack.c.b16 %v785, %v784
      %v827 = vpack.c.b16 %v787, %v786
      %v828 = vpack.c.b16 %v789, %v788
      %v829 = vpack.c.b16 %v791, %v790
      %v830 = vpack.c.b16 %v793, %v792
      %v831 = vpack.c.b16 %v795, %v794
      %v832 = vpack.c.b16 %v797, %v796
      %v833 = vpack.c.b16 %v799, %v798
      %v834 = vpack.c.b16 %v801, %v800
      %v835 = vpack.c.b16 %v803, %v802
      %v836 = vpack.c.b16 %v805, %v804
      %v837 = vpack.c.b16 %v807, %v806
      %v838 = vpack.c.b16 %v809, %v808
      %v839 = vpack.c.b16 %v811, %v810
      %v840 = vpack.c.b16 %v813, %v812
      %v841 = vpack.c.b16 %v815, %v814
      %v842 = vpack.c.b16 %v817, %v816
      %v843 = vpack.c.b16 %v819, %v818
      %868 = vmatprep.subr.bf16.mxu0 0
      %869 = vmatpush1.bf16.msra.mxu0 %v820
      %870 = vmatprep.subr.bf16.mxu0 0
      %871 = vmatpush1.bf16.msra.mxu0 %v821
      %872 = vmatprep.subr.bf16.mxu0 0
      %873 = vmatpush1.bf16.msra.mxu0 %v822
      %874 = vmatprep.subr.bf16.mxu0 0
      %875 = vmatpush1.bf16.msra.mxu0 %v823
      %876 = vmatprep.subr.bf16.mxu0 0
      %877 = vmatpush1.bf16.msra.mxu0 %v824
      %878 = vmatprep.subr.bf16.mxu0 0
      %879 = vmatpush1.bf16.msra.mxu0 %v825
      %880 = vmatprep.subr.bf16.mxu0 0
      %881 = vmatpush1.bf16.msra.mxu0 %v826
      %882 = vmatprep.subr.bf16.mxu0 0
      %883 = vmatpush1.bf16.msra.mxu0 %v827
      %884 = vmatprep.subr.bf16.mxu0 0
      %885 = vmatpush1.bf16.msra.mxu0 %v828
      %886 = vmatprep.subr.bf16.mxu0 0
      %887 = vmatpush1.bf16.msra.mxu0 %v829
      %888 = vmatprep.subr.bf16.mxu0 0
      %889 = vmatpush1.bf16.msra.mxu0 %v830
      %890 = vmatprep.subr.bf16.mxu0 0
      %891 = vmatpush1.bf16.msra.mxu0 %v831
      %892 = vmatprep.subr.bf16.mxu0 0
      %893 = vmatpush1.bf16.msra.mxu0 %v832
      %894 = vmatprep.subr.bf16.mxu0 0
      %895 = vmatpush1.bf16.msra.mxu0 %v833
      %896 = vmatprep.subr.bf16.mxu0 0
      %897 = vmatpush1.bf16.msra.mxu0 %v834
      %898 = vmatprep.subr.bf16.mxu0 0
      %899 = vmatpush1.bf16.msra.mxu0 %v835
      %900 = vmatprep.mubr.bf16.mxu0 %v719
      %901 = vmatmul.mubr.bf16.gmra.mrb[0].mxu0 %v718
      %v902 = vpop.f32.mrb[0].mxu0
      %v903 = vadd.f32 %v716, %v902
      %v904 = vpop.f32.mrb[0].mxu0
      %v905 = vpop.f32.mrb[0].mxu0
      %v906 = vpop.f32.mrb[0].mxu0
      %907 = vdwg.mxu0
      %908 = vmatprep.subr.bf16.mxu0 0
      %909 = vmatpush1.bf16.msra.mxu0 %v836
      %910 = vmatprep.subr.bf16.mxu0 0
      %911 = vmatpush1.bf16.msra.mxu0 %v837
      %912 = vmatprep.subr.bf16.mxu0 0
      %913 = vmatpush1.bf16.msra.mxu0 %v838
      %914 = vmatprep.subr.bf16.mxu0 0
      %915 = vmatpush1.bf16.msra.mxu0 %v839
      %916 = vmatprep.subr.bf16.mxu0 0
      %917 = vmatpush1.bf16.msra.mxu0 %v840
      %918 = vmatprep.subr.bf16.mxu0 0
      %919 = vmatpush1.bf16.msra.mxu0 %v841
      %920 = vmatprep.subr.bf16.mxu0 0
      %921 = vmatpush1.bf16.msra.mxu0 %v842
      %922 = vmatprep.subr.bf16.mxu0 0
      %923 = vmatpush1.bf16.msra.mxu0 %v843
      %924 = vmatprep.subr.bf16.mxu0 0
      %925 = vmatpush1.bf16.msra.mxu0 0
      %926 = vmatprep.subr.bf16.mxu0 0
      %927 = vmatpush1.bf16.msra.mxu0 0
      %928 = vmatprep.subr.bf16.mxu0 0
      %929 = vmatpush1.bf16.msra.mxu0 0
      %930 = vmatprep.subr.bf16.mxu0 0
      %931 = vmatpush1.bf16.msra.mxu0 0
      %932 = vmatprep.subr.bf16.mxu0 0
      %933 = vmatpush1.bf16.msra.mxu0 0
      %934 = vmatprep.subr.bf16.mxu0 0
      %935 = vmatpush1.bf16.msra.mxu0 0
      %936 = vmatprep.subr.bf16.mxu0 0
      %937 = vmatpush1.bf16.msra.mxu0 0
      %938 = vmatprep.subr.bf16.mxu0 0
      %939 = vmatpush1.bf16.msra.mxu0 0
      %940 = vmatprep.mubr.bf16.mxu0 0
      %941 = vmatmul.mubr.bf16.gmra.mrb[0].mxu0 %v720
      %v942 = vpop.f32.mrb[0].mxu0
      %v943 = vadd.f32 %v903, %v942
      %v944 = vpop.f32.mrb[0].mxu0
      %v945 = vpop.f32.mrb[0].mxu0
      %v946 = vpop.f32.mrb[0].mxu0
      %947 = vdwg.mxu0
      %v948 = vmax.f32 %v943, 0.0
      %v949 = vld [vmem:[%s303] sm:$0xf]
      %v950 = vunpack.c.l.bf16 %v949
      %v951 = vld [vmem:[%s1] sm:$0x1]
      %v953 = vlaneseq
      %v954 = vshrl.u32 %v953, 7
      %v955 = vsub.s32 0, %v954
      %v956 = vrot.slane %v951, %v955
      %v958 = vmul.f32 %v950, %v956
      %v959 = vld [vmem:[%s2] sm:$0x1]
      %v961 = vlaneseq
      %v962 = vshrl.u32 %v961, 7
      %v963 = vsub.s32 0, %v962
      %v964 = vrot.slane %v959, %v963
      %v966 = vadd.f32 %v958, %v964
      %v967 = vadd.f32 %v948, %v966
      %v968 = vmax.f32 %v967, 0.0
      %969 = vst [vmem:[#allocation3] sm:$0xff] %v968
      %v970 = vld [vmem:[#allocation3] ss:$2 sm:$0xf]
      %s971 = scalar_lea.vmem [#allocation3], 1
      %v972 = vld [vmem:[%s971] ss:$2 sm:$0xf]
      %v973 = vadd.f32 %v970, %v972
      %v974 = vmul.f32 %v973, 0.5
      %v975 = vpack.c.bf16 %v974, %v974
      %976 = vst [vmem:[%s307] sm:$0x3] %v975
      %v977 = vunpack.c.l.bf16 %v975
      %vm978 = vcmask 1043456
      %v979 = vsel %vm978, %v977, 0.0
      %v980 = vrot.slane %v979, 4
      %v981 = vadd.f32 %v979, %v980
      %v982 = vrot.slane %v981, 2
      %v983 = vadd.f32 %v981, %v982
      %v984 = vrot.slane %v983, 1
      %v985 = vadd.f32 %v983, %v984
      %986 = vst [vmem:[%s311] sm:$0x1] %v985
      %v987 = vmul.f32 %v977, %v977
      %v988 = vsel %vm978, %v987, 0.0
      %v989 = vrot.slane %v988, 4
      %v990 = vadd.f32 %v988, %v989
      %v991 = vrot.slane %v990, 2
      %v992 = vadd.f32 %v990, %v991
      %v993 = vrot.slane %v992, 1
      %v994 = vadd.f32 %v992, %v993
      %995 = vst [vmem:[%s311 + $0x1] sm:$0x1] %v994
      %p996 = scmp.lt.s32.totalorder %s20, 1
      %s997 = scalar_select %p996, %s20, 1
      %s998 = smul.addr %s997, 2
      %s999 = scalar_lea.vmem %s7, %s998
      %p1000 = scmp.lt.s32.totalorder %s20, 1
      %s1001 = scalar_select %p1000, %s20, 1
      %s1002 = smul.addr %s1001, 2
      %s1003 = scalar_lea.vmem %s8, %s1002
      // Predicated region
      $region49: #{encoder_s_forward.5} parent=47 // pred_check
        %p1004 = pneg %p190
      $region50: #{encoder_s_forward.5} parent=47 // pred_check_branch
        %1006 = sbr.rel (%p1004) target = $region52
      $region51: #{encoder_s_forward.5} parent=47 // pred_region
        _
      $region52: #{encoder_s_forward.5} parent=47 // pred_fallthru
        _
      // Predicated region
      $region53: #{encoder_s_forward.5} parent=47 // pred_check
        %p1007 = pneg %p216
      $region54: #{encoder_s_forward.5} parent=47 // pred_check_branch
        %1009 = sbr.rel (%p1007) target = $region56
      $region55: #{encoder_s_forward.5} parent=47 // pred_region
        _
      $region56: #{encoder_s_forward.5} parent=47 // pred_fallthru
        _
    $region48: #{encoder_s_forward.5} parent=5 // pred_fallthru
      _
    %p1010 = scmp.le.s32.totalorder 2, %s15
    // Predicated region
    $region57: #{encoder_s_forward.5} parent=5 // pred_check
      %p1011 = pneg %p1010
    $region58: #{encoder_s_forward.5} parent=5 // pred_check_branch
      %1013 = sbr.rel (%p1011) target = $region60
    $region59: #{encoder_s_forward.5} parent=5 // pred_region
      %s1014 = ssub.s32 %s15, 2
      // Predicated region
      $region61: #{encoder_s_forward.5} parent=59 // pred_check
        %p1015 = pneg %p196
      $region62: #{encoder_s_forward.5} parent=59 // pred_check_branch
        %1017 = sbr.rel (%p1015) target = $region64
      $region63: #{encoder_s_forward.5} parent=59 // pred_region
        %p1018 = scmp.lt.s32.totalorder %s21, 1
        %s1019 = scalar_select %p1018, %s21, 1
        %s1020 = smul.addr %s1019, 2
        %s1021 = scalar_lea.vmem %s7, %s1020
      $region64: #{encoder_s_forward.5} parent=59 // pred_fallthru
        _
      // Predicated region
      $region65: #{encoder_s_forward.5} parent=59 // pred_check
        %p1022 = pneg %p222
      $region66: #{encoder_s_forward.5} parent=59 // pred_check_branch
        %1024 = sbr.rel (%p1022) target = $region68
      $region67: #{encoder_s_forward.5} parent=59 // pred_region
        %p1025 = scmp.lt.s32.totalorder %s21, 1
        %s1026 = scalar_select %p1025, %s21, 1
        %s1027 = smul.addr %s1026, 2
        %s1028 = scalar_lea.vmem %s8, %s1027
      $region68: #{encoder_s_forward.5} parent=59 // pred_fallthru
        _
    $region60: #{encoder_s_forward.5} parent=5 // pred_fallthru
      _
  $region6: #{encoder_s_forward.5} parent=0 // loop_footer
    %s19 = sadd.s32 1, %s15
  $region7: #{encoder_s_forward.5} parent=0 // loop_footer_branch
    %14 = sbr.rel target = $region3
  $region8: #{encoder_s_forward.5} parent=0 // loop_exit
    _

// kernel: encoder_s_forward.4
$region0: #{encoder_s_forward.4}
  #allocation0 [shape = 'u32[]', space=smem, size = 0x4, offset = 0x4, fixed_abs, tag = 'smem constant byte address 0x4 - core index']
  #allocation1 [shape = 'u32[144,128]{1,0:T(1,128)}', space=vmem, size = 0x12000, scoped, tag = 'internal scratch']
  #allocation2 [shape = 'f32[18,128]{1,0:T(8,128)}', space=vmem, size = 0x3000, scoped, tag = 'scratch operand']
  %s0 = inlined_call_operand.vmem [shape: bf16[2,16,128], index: 0, kind: input, shape index: {}]
  %s1 = inlined_call_operand.vmem [shape: f32[1,128], index: 1, kind: input, shape index: {}]
  %s2 = inlined_call_operand.vmem [shape: f32[1,128], index: 2, kind: input, shape index: {}]
  %s3 = inlined_call_operand.hbm [shape: bf16[384,128], index: 3, kind: input, shape index: {}]
  %s4 = inlined_call_operand.vmem [shape: f32[1,128], index: 4, kind: input, shape index: {}]
  %s5 = inlined_call_operand.hbm [shape: bf16[384,128], index: 5, kind: input, shape index: {}]
  %s6 = inlined_call_operand.vmem [shape: f32[1,128], index: 6, kind: input, shape index: {}]
  %s7 = inlined_call_operand.vmem [shape: bf16[128,128], index: 7, kind: input, shape index: {}]
  %s8 = inlined_call_operand.vmem [shape: f32[1,128], index: 8, kind: input, shape index: {}]
  %s9 = inlined_call_operand.vmem [shape: bf16[2,8,128], index: 9, kind: output, shape index: {0}]
  %s10 = inlined_call_operand.vmem [shape: f32[2,2,128], index: 10, kind: output, shape index: {1}]
  %11 = xla_tuple %s9, %s10
  %s12 = sld [smem:[#allocation0]]
  $region85: #{encoder_s_forward.4} parent=0
    _
  %s14 = ssub.s32 1, %s12
  %s15 = scalar_select 0, %s14, %s12
  $region1: #{encoder_s_forward.4} parent=0
    #allocation3 [shape = 'u8[98304]{0}', space=vmem, size = 0x18000, scoped, tag = 'input window, operand 3, single buffered']
    #allocation4 [shape = 's32[2]{0}', space=sflag, size = 0x8, scoped, tag = 'scoped memory for encoder_s_forward.4']
    #allocation5 [shape = 'u8[98304]{0}', space=vmem, size = 0x18000, scoped, tag = 'input window, operand 5, single buffered']
    #allocation6 [shape = 's32[1]{0}', space=sflag, size = 0x4, scoped, tag = 'scoped memory for encoder_s_forward.4']
    %16 = vsyncpa [#allocation4], 0
    %17 = vsyncpa [#allocation6], 0
    loop: start=0, step=1, limit=4
    $region2: #{encoder_s_forward.4} parent=1 // loop_pre_header
      _
    $region3: #{encoder_s_forward.4} parent=1 // loop_header
      %s19 = sphi 0, %s23
      %p20 = scmp.ge.s32.totalorder %s19, 4
      %s29 = sphi 0, %s31
      %s32 = sphi 0, %s29
      %s33 = sphi 0, %s32
      %s49 = sphi 0, %s33
      %s53 = sphi 0, %s53
      %s55 = sphi 0, %s53
      %s56 = sphi 0, %s55
      %s70 = sphi 0, %s56
      %s74 = sphi 0, %s74
      %s76 = sphi 0, %s74
      %s77 = sphi 0, %s76
      %s91 = sphi 0, %s77
      %s95 = sphi 0, %s95
      %s97 = sphi 0, %s95
      %s98 = sphi 0, %s97
      %s112 = sphi 0, %s98
      %s116 = sphi 0, %s116
      %s118 = sphi 0, %s116
      %s119 = sphi 0, %s118
      %s133 = sphi 0, %s119
      %s137 = sphi 0, %s137
      %s139 = sphi 0, %s137
      %s140 = sphi 0, %s139
      %s154 = sphi 0, %s140
      %s158 = sphi 0, %s158
      %s160 = sphi 0, %s158
      %s161 = sphi 0, %s160
      %s175 = sphi 0, %s161
      %s179 = sphi 0, %s179
      %s181 = sphi 0, %s179
      %s182 = sphi 0, %s181
      %s196 = sphi 0, %s182
      %s200 = sphi 0, %s200
      %s202 = sphi 0, %s200
      %s203 = sphi 0, %s202
      %s217 = sphi 0, %s203
      %s223 = sphi 0, %s225
      %s226 = sphi 0, %s223
      %s227 = sphi 0, %s226
      %s243 = sphi 0, %s227
      %s249 = sphi 0, %s251
      %s252 = sphi 0, %s249
      %s253 = sphi 0, %s252
      %s269 = sphi 0, %s253
    $region4: #{encoder_s_forward.4} parent=1 // loop_header_branch
      %22 = sbr.rel (%p20) target = $region8
    $region5: #{encoder_s_forward.4} parent=1 // loop_body
      %s24 = ssub.s32 %s19, 1
      %s25 = ssub.s32 %s19, 2
      %s26 = sadd.s32 %s19, 1
      %s27 = ssub.s32 %s19, %s26
      %p28 = scmp.eq.s32.totalorder %s27, 0
      %s30 = sadd.s32 %s29, 1
      %s31 = scalar_select %p28, %s29, %s30
      %p34 = pneg %p28
      %p35 = scmp.eq.s32.totalorder %s19, 1
      %p36 = por %p34, %p35
      %p37 = scmp.ne.s32.totalorder %s29, %s32
      %p38 = scmp.eq.s32.totalorder %s19, 0
      %p39 = por %p37, %p38
      %p40 = scmp.ne.s32.totalorder %s29, %s32
      %p41 = scmp.eq.s32.totalorder %s24, 1
      %p42 = por %p40, %p41
      %p43 = scmp.ne.s32.totalorder %s32, %s33
      %p44 = scmp.eq.s32.totalorder %s24, 0
      %p45 = por %p43, %p44
      %p46 = scmp.ne.s32.totalorder %s32, %s33
      %p47 = scmp.eq.s32.totalorder %s25, 1
      %p48 = por %p46, %p47
      %p50 = scmp.ne.s32.totalorder %s33, %s49
      %p51 = scmp.eq.s32.totalorder %s25, 0
      %p52 = por %p50, %p51
      %s54 = sadd.s32 %s53, 1
      %p57 = scmp.eq.s32.totalorder %s19, 1
      %p58 = scmp.ne.s32.totalorder %s53, %s55
      %p59 = scmp.eq.s32.totalorder %s19, 0
      %p60 = por %p58, %p59
      %p61 = scmp.ne.s32.totalorder %s53, %s55
      %p62 = scmp.eq.s32.totalorder %s24, 1
      %p63 = por %p61, %p62
      %p64 = scmp.ne.s32.totalorder %s55, %s56
      %p65 = scmp.eq.s32.totalorder %s24, 0
      %p66 = por %p64, %p65
      %p67 = scmp.ne.s32.totalorder %s55, %s56
      %p68 = scmp.eq.s32.totalorder %s25, 1
      %p69 = por %p67, %p68
      %p71 = scmp.ne.s32.totalorder %s56, %s70
      %p72 = scmp.eq.s32.totalorder %s25, 0
      %p73 = por %p71, %p72
      %s75 = sadd.s32 %s74, 1
      %p78 = scmp.eq.s32.totalorder %s19, 1
      %p79 = scmp.ne.s32.totalorder %s74, %s76
      %p80 = scmp.eq.s32.totalorder %s19, 0
      %p81 = por %p79, %p80
      %p82 = scmp.ne.s32.totalorder %s74, %s76
      %p83 = scmp.eq.s32.totalorder %s24, 1
      %p84 = por %p82, %p83
      %p85 = scmp.ne.s32.totalorder %s76, %s77
      %p86 = scmp.eq.s32.totalorder %s24, 0
      %p87 = por %p85, %p86
      %p88 = scmp.ne.s32.totalorder %s76, %s77
      %p89 = scmp.eq.s32.totalorder %s25, 1
      %p90 = por %p88, %p89
      %p92 = scmp.ne.s32.totalorder %s77, %s91
      %p93 = scmp.eq.s32.totalorder %s25, 0
      %p94 = por %p92, %p93
      %s96 = sadd.s32 %s95, 1
      %p99 = scmp.eq.s32.totalorder %s19, 1
      %p100 = scmp.ne.s32.totalorder %s95, %s97
      %p101 = scmp.eq.s32.totalorder %s19, 0
      %p102 = por %p100, %p101
      %p103 = scmp.ne.s32.totalorder %s95, %s97
      %p104 = scmp.eq.s32.totalorder %s24, 1
      %p105 = por %p103, %p104
      %p106 = scmp.ne.s32.totalorder %s97, %s98
      %p107 = scmp.eq.s32.totalorder %s24, 0
      %p108 = por %p106, %p107
      %p109 = scmp.ne.s32.totalorder %s97, %s98
      %p110 = scmp.eq.s32.totalorder %s25, 1
      %p111 = por %p109, %p110
      %p113 = scmp.ne.s32.totalorder %s98, %s112
      %p114 = scmp.eq.s32.totalorder %s25, 0
      %p115 = por %p113, %p114
      %s117 = sadd.s32 %s116, 1
      %p120 = scmp.eq.s32.totalorder %s19, 1
      %p121 = scmp.ne.s32.totalorder %s116, %s118
      %p122 = scmp.eq.s32.totalorder %s19, 0
      %p123 = por %p121, %p122
      %p124 = scmp.ne.s32.totalorder %s116, %s118
      %p125 = scmp.eq.s32.totalorder %s24, 1
      %p126 = por %p124, %p125
      %p127 = scmp.ne.s32.totalorder %s118, %s119
      %p128 = scmp.eq.s32.totalorder %s24, 0
      %p129 = por %p127, %p128
      %p130 = scmp.ne.s32.totalorder %s118, %s119
      %p131 = scmp.eq.s32.totalorder %s25, 1
      %p132 = por %p130, %p131
      %p134 = scmp.ne.s32.totalorder %s119, %s133
      %p135 = scmp.eq.s32.totalorder %s25, 0
      %p136 = por %p134, %p135
      %s138 = sadd.s32 %s137, 1
      %p141 = scmp.eq.s32.totalorder %s19, 1
      %p142 = scmp.ne.s32.totalorder %s137, %s139
      %p143 = scmp.eq.s32.totalorder %s19, 0
      %p144 = por %p142, %p143
      %p145 = scmp.ne.s32.totalorder %s137, %s139
      %p146 = scmp.eq.s32.totalorder %s24, 1
      %p147 = por %p145, %p146
      %p148 = scmp.ne.s32.totalorder %s139, %s140
      %p149 = scmp.eq.s32.totalorder %s24, 0
      %p150 = por %p148, %p149
      %p151 = scmp.ne.s32.totalorder %s139, %s140
      %p152 = scmp.eq.s32.totalorder %s25, 1
      %p153 = por %p151, %p152
      %p155 = scmp.ne.s32.totalorder %s140, %s154
      %p156 = scmp.eq.s32.totalorder %s25, 0
      %p157 = por %p155, %p156
      %s159 = sadd.s32 %s158, 1
      %p162 = scmp.eq.s32.totalorder %s19, 1
      %p163 = scmp.ne.s32.totalorder %s158, %s160
      %p164 = scmp.eq.s32.totalorder %s19, 0
      %p165 = por %p163, %p164
      %p166 = scmp.ne.s32.totalorder %s158, %s160
      %p167 = scmp.eq.s32.totalorder %s24, 1
      %p168 = por %p166, %p167
      %p169 = scmp.ne.s32.totalorder %s160, %s161
      %p170 = scmp.eq.s32.totalorder %s24, 0
      %p171 = por %p169, %p170
      %p172 = scmp.ne.s32.totalorder %s160, %s161
      %p173 = scmp.eq.s32.totalorder %s25, 1
      %p174 = por %p172, %p173
      %p176 = scmp.ne.s32.totalorder %s161, %s175
      %p177 = scmp.eq.s32.totalorder %s25, 0
      %p178 = por %p176, %p177
      %s180 = sadd.s32 %s179, 1
      %p183 = scmp.eq.s32.totalorder %s19, 1
      %p184 = scmp.ne.s32.totalorder %s179, %s181
      %p185 = scmp.eq.s32.totalorder %s19, 0
      %p186 = por %p184, %p185
      %p187 = scmp.ne.s32.totalorder %s179, %s181
      %p188 = scmp.eq.s32.totalorder %s24, 1
      %p189 = por %p187, %p188
      %p190 = scmp.ne.s32.totalorder %s181, %s182
      %p191 = scmp.eq.s32.totalorder %s24, 0
      %p192 = por %p190, %p191
      %p193 = scmp.ne.s32.totalorder %s181, %s182
      %p194 = scmp.eq.s32.totalorder %s25, 1
      %p195 = por %p193, %p194
      %p197 = scmp.ne.s32.totalorder %s182, %s196
      %p198 = scmp.eq.s32.totalorder %s25, 0
      %p199 = por %p197, %p198
      %s201 = sadd.s32 %s200, 1
      %p204 = scmp.eq.s32.totalorder %s19, 1
      %p205 = scmp.ne.s32.totalorder %s200, %s202
      %p206 = scmp.eq.s32.totalorder %s19, 0
      %p207 = por %p205, %p206
      %p208 = scmp.ne.s32.totalorder %s200, %s202
      %p209 = scmp.eq.s32.totalorder %s24, 1
      %p210 = por %p208, %p209
      %p211 = scmp.ne.s32.totalorder %s202, %s203
      %p212 = scmp.eq.s32.totalorder %s24, 0
      %p213 = por %p211, %p212
      %p214 = scmp.ne.s32.totalorder %s202, %s203
      %p215 = scmp.eq.s32.totalorder %s25, 1
      %p216 = por %p214, %p215
      %p218 = scmp.ne.s32.totalorder %s203, %s217
      %p219 = scmp.eq.s32.totalorder %s25, 0
      %p220 = por %p218, %p219
      %s221 = ssub.s32 %s19, %s26
      %p222 = scmp.eq.s32.totalorder %s221, 0
      %s224 = sadd.s32 %s223, 1
      %s225 = scalar_select %p222, %s223, %s224
      %p228 = pneg %p222
      %p229 = scmp.eq.s32.totalorder %s19, 1
      %p230 = por %p228, %p229
      %p231 = scmp.ne.s32.totalorder %s223, %s226
      %p232 = scmp.eq.s32.totalorder %s19, 0
      %p233 = por %p231, %p232
      %p234 = scmp.ne.s32.totalorder %s223, %s226
      %p235 = scmp.eq.s32.totalorder %s24, 1
      %p236 = por %p234, %p235
      %p237 = scmp.ne.s32.totalorder %s226, %s227
      %p238 = scmp.eq.s32.totalorder %s24, 0
      %p239 = por %p237, %p238
      %p240 = scmp.ne.s32.totalorder %s226, %s227
      %p241 = scmp.eq.s32.totalorder %s25, 1
      %p242 = por %p240, %p241
      %p244 = scmp.ne.s32.totalorder %s227, %s243
      %p245 = scmp.eq.s32.totalorder %s25, 0
      %p246 = por %p244, %p245
      %s247 = ssub.s32 %s19, %s26
      %p248 = scmp.eq.s32.totalorder %s247, 0
      %s250 = sadd.s32 %s249, 1
      %s251 = scalar_select %p248, %s249, %s250
      %p254 = pneg %p248
      %p255 = scmp.eq.s32.totalorder %s19, 1
      %p256 = por %p254, %p255
      %p257 = scmp.ne.s32.totalorder %s249, %s252
      %p258 = scmp.eq.s32.totalorder %s19, 0
      %p259 = por %p257, %p258
      %p260 = scmp.ne.s32.totalorder %s249, %s252
      %p261 = scmp.eq.s32.totalorder %s24, 1
      %p262 = por %p260, %p261
      %p263 = scmp.ne.s32.totalorder %s252, %s253
      %p264 = scmp.eq.s32.totalorder %s24, 0
      %p265 = por %p263, %p264
      %p266 = scmp.ne.s32.totalorder %s252, %s253
      %p267 = scmp.eq.s32.totalorder %s25, 1
      %p268 = por %p266, %p267
      %p270 = scmp.ne.s32.totalorder %s253, %s269
      %p271 = scmp.eq.s32.totalorder %s25, 0
      %p272 = por %p270, %p271
      %p273 = scmp.le.s32.totalorder 1, %s19
      %p274 = scmp.lt.s32.totalorder %s19, 3
      %p275 = pnand %p273, %p274
      %p276 = pneg %p275
      // Predicated region
      $region9: #{encoder_s_forward.4} parent=5 // pred_check
        _
      $region10: #{encoder_s_forward.4} parent=5 // pred_check_branch
        %278 = sbr.rel (%p275) target = $region12
      $region11: #{encoder_s_forward.4} parent=5 // pred_region
        %s279 = ssub.s32 %s19, 1
        // Predicated region
        $region13: #{encoder_s_forward.4} parent=11 // pred_check
          %p280 = pneg %p66
        $region14: #{encoder_s_forward.4} parent=11 // pred_check_branch
          %282 = sbr.rel (%p280) target = $region16
        $region15: #{encoder_s_forward.4} parent=11 // pred_region
          _
        $region16: #{encoder_s_forward.4} parent=11 // pred_fallthru
          _
        // Predicated region
        $region17: #{encoder_s_forward.4} parent=11 // pred_check
          %p283 = pneg %p87
        $region18: #{encoder_s_forward.4} parent=11 // pred_check_branch
          %285 = sbr.rel (%p283) target = $region20
        $region19: #{encoder_s_forward.4} parent=11 // pred_region
          _
        $region20: #{encoder_s_forward.4} parent=11 // pred_fallthru
          _
        // Predicated region
        $region21: #{encoder_s_forward.4} parent=11 // pred_check
          %p286 = pneg %p108
        $region22: #{encoder_s_forward.4} parent=11 // pred_check_branch
          %288 = sbr.rel (%p286) target = $region24
        $region23: #{encoder_s_forward.4} parent=11 // pred_region
          %s290 = ssub.s32 3072, 3072
          %291 = vsyncadd [#allocation4], %s290
          %s292 = sshll.u32 [#allocation3], 4
          %s293 = int_to_ptr.vmem [resolvable:$true] %s292
          %298 = dma.hbm_to_vmem [thread:$0]  %s3, 3072, %s293, [#allocation4], 64, 64, 4
        $region24: #{encoder_s_forward.4} parent=11 // pred_fallthru
          _
        // Predicated region
        $region25: #{encoder_s_forward.4} parent=11 // pred_check
          %p299 = pneg %p129
        $region26: #{encoder_s_forward.4} parent=11 // pred_check_branch
          %301 = sbr.rel (%p299) target = $region28
        $region27: #{encoder_s_forward.4} parent=11 // pred_region
          _
        $region28: #{encoder_s_forward.4} parent=11 // pred_fallthru
          _
        // Predicated region
        $region29: #{encoder_s_forward.4} parent=11 // pred_check
          %p302 = pneg %p150
        $region30: #{encoder_s_forward.4} parent=11 // pred_check_branch
          %304 = sbr.rel (%p302) target = $region32
        $region31: #{encoder_s_forward.4} parent=11 // pred_region
          %s306 = ssub.s32 3072, 3072
          %307 = vsyncadd [#allocation6], %s306
          %s308 = sshll.u32 [#allocation5], 4
          %s309 = int_to_ptr.vmem [resolvable:$true] %s308
          %314 = dma.hbm_to_vmem [thread:$0]  %s5, 3072, %s309, [#allocation6], 64, 64, 4
        $region32: #{encoder_s_forward.4} parent=11 // pred_fallthru
          _
        // Predicated region
        $region33: #{encoder_s_forward.4} parent=11 // pred_check
          %p315 = pneg %p171
        $region34: #{encoder_s_forward.4} parent=11 // pred_check_branch
          %317 = sbr.rel (%p315) target = $region36
        $region35: #{encoder_s_forward.4} parent=11 // pred_region
          _
        $region36: #{encoder_s_forward.4} parent=11 // pred_fallthru
          _
        // Predicated region
        $region37: #{encoder_s_forward.4} parent=11 // pred_check
          %p318 = pneg %p192
        $region38: #{encoder_s_forward.4} parent=11 // pred_check_branch
          %320 = sbr.rel (%p318) target = $region40
        $region39: #{encoder_s_forward.4} parent=11 // pred_region
          _
        $region40: #{encoder_s_forward.4} parent=11 // pred_fallthru
          _
        // Predicated region
        $region41: #{encoder_s_forward.4} parent=11 // pred_check
          %p321 = pneg %p213
        $region42: #{encoder_s_forward.4} parent=11 // pred_check_branch
          %323 = sbr.rel (%p321) target = $region44
        $region43: #{encoder_s_forward.4} parent=11 // pred_region
          _
        $region44: #{encoder_s_forward.4} parent=11 // pred_fallthru
          _
      $region12: #{encoder_s_forward.4} parent=5 // pred_fallthru
        _
      %p324 = scmp.lt.s32.totalorder %s19, 2
      // Predicated region
      $region45: #{encoder_s_forward.4} parent=5 // pred_check
        %p325 = pneg %p324
      $region46: #{encoder_s_forward.4} parent=5 // pred_check_branch
        %327 = sbr.rel (%p325) target = $region48
      $region47: #{encoder_s_forward.4} parent=5 // pred_region
        // Predicated region
        $region49: #{encoder_s_forward.4} parent=47 // pred_check
          %p328 = pneg %p39
        $region50: #{encoder_s_forward.4} parent=47 // pred_check_branch
          %330 = sbr.rel (%p328) target = $region52
        $region51: #{encoder_s_forward.4} parent=47 // pred_region
          %p331 = scmp.lt.s32.totalorder %s19, 1
          %s332 = scalar_select %p331, %s19, 1
          %s333 = smul.addr %s332, 2
          %s334 = smul.addr %s333, 4
          %s335 = scalar_lea.vmem %s0, %s334
        $region52: #{encoder_s_forward.4} parent=47 // pred_fallthru
          _
      $region48: #{encoder_s_forward.4} parent=5 // pred_fallthru
        _
      %p336 = scmp.le.s32.totalorder 1, %s19
      %p337 = scmp.lt.s32.totalorder %s19, 3
      %p338 = pnand %p336, %p337
      %p339 = pneg %p338
      // Predicated region
      $region53: #{encoder_s_forward.4} parent=5 // pred_check
        _
      $region54: #{encoder_s_forward.4} parent=5 // pred_check_branch
        %341 = sbr.rel (%p338) target = $region56
      $region55: #{encoder_s_forward.4} parent=5 // pred_region
        %s342 = ssub.s32 %s19, 1
        // Predicated region
        $region57: #{encoder_s_forward.4} parent=55 // pred_check
          %p343 = pneg %p108
        $region58: #{encoder_s_forward.4} parent=55 // pred_check_branch
          %345 = sbr.rel (%p343) target = $region60
        $region59: #{encoder_s_forward.4} parent=55 // pred_region
          %346 = dma.done [#allocation4], 3072
        $region60: #{encoder_s_forward.4} parent=55 // pred_fallthru
          _
        // Predicated region
        $region61: #{encoder_s_forward.4} parent=55 // pred_check
          %p347 = pneg %p150
        $region62: #{encoder_s_forward.4} parent=55 // pred_check_branch
          %349 = sbr.rel (%p347) target = $region64
        $region63: #{encoder_s_forward.4} parent=55 // pred_region
          %350 = dma.done [#allocation6], 3072
        $region64: #{encoder_s_forward.4} parent=55 // pred_fallthru
          _
        %p351 = scmp.lt.s32.totalorder %s24, 1
        %s352 = scalar_select %p351, %s24, 1
        %s353 = smul.addr %s352, 2
        %s354 = smul.addr %s353, 4
        %s355 = scalar_lea.vmem %s0, %s354
        %p356 = pneg %p45
        %p357 = pneg %p42
        %p358 = pneg %p66
        %p359 = pneg %p63
        %p360 = pneg %p87
        %p361 = pneg %p84
        %p362 = pneg %p108
        %p363 = pneg %p105
        %p364 = pneg %p129
        %p365 = pneg %p126
        %p366 = pneg %p150
        %p367 = pneg %p147
        %p368 = pneg %p171
        %p369 = pneg %p168
        %p370 = pneg %p192
        %p371 = pneg %p189
        %p372 = pneg %p213
        %p373 = pneg %p210
        %p374 = pneg %p239
        %p375 = pneg %p236
        %p376 = scmp.lt.s32.totalorder %s24, 1
        %s377 = scalar_select %p376, %s24, 1
        %s378 = smul.addr %s377, 4
        %s379 = scalar_lea.vmem %s9, %s378
        %p380 = pneg %p265
        %p381 = pneg %p262
        %p382 = scmp.lt.s32.totalorder %s24, 1
        %s383 = scalar_select %p382, %s24, 1
        %s384 = smul.addr %s383, 2
        %s385 = scalar_lea.vmem %s10, %s384
        %p386 = scmp.lt.s32.totalorder %s24, 1
        %s387 = scalar_select %p386, %s24, 1
        %s388 = smul.addr %s387, 2
        %s389 = smul.addr %s388, 4
        %s390 = scalar_lea.vmem %s0, %s389
        %p391 = scmp.lt.s32.totalorder %s24, 1
        %s392 = scalar_select %p391, %s24, 1
        %s393 = smul.addr %s392, 4
        %s394 = scalar_lea.vmem %s9, %s393
        %p395 = scmp.lt.s32.totalorder %s24, 1
        %s396 = scalar_select %p395, %s24, 1
        %s397 = smul.addr %s396, 2
        %s398 = scalar_lea.vmem %s10, %s397
        %400 = vst [vmem:[#allocation2] sm:$0x3] 0.0
        %v401 = vld [vmem:[%s390] sm:$0xf]
        %v402 = vld [vmem:[%s390 + $0x4] sm:$0xf]
        %v403 = vunpack.c.l.bf16 %v401
        %v404 = vunpack.c.l.bf16 %v402
        %v405 = vld [vmem:[%s1] sm:$0x1]
        %v407 = vlaneseq
        %v408 = vshrl.u32 %v407, 7
        %v409 = vsub.s32 0, %v408
        %v410 = vrot.slane %v405, %v409
        %v412 = vmul.f32 %v403, %v410
        %v413 = vmul.f32 %v404, %v410
        %v414 = vld [vmem:[%s2] sm:$0x1]
        %v416 = vlaneseq
        %v417 = vshrl.u32 %v416, 7
        %v418 = vsub.s32 0, %v417
        %v419 = vrot.slane %v414, %v418
        %v421 = vadd.f32 %v412, %v419
        %v422 = vadd.f32 %v413, %v419
        %v423 = vpack.c.bf16 %v422, %v421
        %v424 = vld [vmem:[%s7] sm:$0xf]
        %v425 = vld [vmem:[%s7 + $0x4] sm:$0xf]
        %v426 = vld [vmem:[%s7 + $0x8] sm:$0xf]
        %v427 = vld [vmem:[%s7 + $0xc] sm:$0xf]
        %v428 = vld [vmem:[%s7 + $0x10] sm:$0xf]
        %v429 = vld [vmem:[%s7 + $0x14] sm:$0xf]
        %v430 = vld [vmem:[%s7 + $0x18] sm:$0xf]
        %v431 = vld [vmem:[%s7 + $0x1c] sm:$0xf]
        %v432 = vld [vmem:[%s7 + $0x20] sm:$0xf]
        %v433 = vld [vmem:[%s7 + $0x24] sm:$0xf]
        %v434 = vld [vmem:[%s7 + $0x28] sm:$0xf]
        %v435 = vld [vmem:[%s7 + $0x2c] sm:$0xf]
        %v436 = vld [vmem:[%s7 + $0x30] sm:$0xf]
        %v437 = vld [vmem:[%s7 + $0x34] sm:$0xf]
        %v438 = vld [vmem:[%s7 + $0x38] sm:$0xf]
        %v439 = vld [vmem:[%s7 + $0x3c] sm:$0xf]
        %v440 = vld [vmem:[%s8] sm:$0x1]
        %v442 = vlaneseq
        %v443 = vshrl.u32 %v442, 7
        %v444 = vsub.s32 0, %v443
        %v445 = vrot.slane %v440, %v444
        %v463 = vunpack.c.l.b16 %v424
        %v464 = vunpack.c.l.b16 %v425
        %v465 = vunpack.c.l.b16 %v426
        %v466 = vunpack.c.l.b16 %v427
        %v467 = vunpack.c.l.b16 %v428
        %v468 = vunpack.c.l.b16 %v429
        %v469 = vunpack.c.l.b16 %v430
        %v470 = vunpack.c.l.b16 %v431
        %v471 = vunpack.c.l.b16 %v432
        %v472 = vunpack.c.l.b16 %v433
        %v473 = vunpack.c.l.b16 %v434
        %v474 = vunpack.c.l.b16 %v435
        %v475 = vunpack.c.l.b16 %v436
        %v476 = vunpack.c.l.b16 %v437
        %v477 = vunpack.c.l.b16 %v438
        %v478 = vunpack.c.l.b16 %v439
        %v479 = vpack.c.b16 %v464, %v463
        %v480 = vpack.c.b16 %v466, %v465
        %v481 = vpack.c.b16 %v468, %v467
        %v482 = vpack.c.b16 %v470, %v469
        %v483 = vpack.c.b16 %v472, %v471
        %v484 = vpack.c.b16 %v474, %v473
        %v485 = vpack.c.b16 %v476, %v475
        %v486 = vpack.c.b16 %v478, %v477
        %495 = vmatprep.subr.bf16.mxu0 0
        %496 = vmatpush1.bf16.msra.mxu0 %v479
        %497 = vmatprep.subr.bf16.mxu0 0
        %498 = vmatpush1.bf16.msra.mxu0 %v480
        %499 = vmatprep.subr.bf16.mxu0 0
        %500 = vmatpush1.bf16.msra.mxu0 %v481
        %501 = vmatprep.subr.bf16.mxu0 0
        %502 = vmatpush1.bf16.msra.mxu0 %v482
        %503 = vmatprep.subr.bf16.mxu0 0
        %504 = vmatpush1.bf16.msra.mxu0 %v483
        %505 = vmatprep.subr.bf16.mxu0 0
        %506 = vmatpush1.bf16.msra.mxu0 %v484
        %507 = vmatprep.subr.bf16.mxu0 0
        %508 = vmatpush1.bf16.msra.mxu0 %v485
        %509 = vmatprep.subr.bf16.mxu0 0
        %510 = vmatpush1.bf16.msra.mxu0 %v486
        %511 = vmatprep.subr.bf16.mxu0 0
        %512 = vmatpush1.bf16.msra.mxu0 0
        %513 = vmatprep.subr.bf16.mxu0 0
        %514 = vmatpush1.bf16.msra.mxu0 0
        %515 = vmatprep.subr.bf16.mxu0 0
        %516 = vmatpush1.bf16.msra.mxu0 0
        %517 = vmatprep.subr.bf16.mxu0 0
        %518 = vmatpush1.bf16.msra.mxu0 0
        %519 = vmatprep.subr.bf16.mxu0 0
        %520 = vmatpush1.bf16.msra.mxu0 0
        %521 = vmatprep.subr.bf16.mxu0 0
        %522 = vmatpush1.bf16.msra.mxu0 0
        %523 = vmatprep.subr.bf16.mxu0 0
        %524 = vmatpush1.bf16.msra.mxu0 0
        %525 = vmatprep.subr.bf16.mxu0 0
        %526 = vmatpush1.bf16.msra.mxu0 0
        %527 = vmatprep.mubr.bf16.mxu0 0
        %528 = vmatmul.mubr.bf16.gmra.mrb[0].mxu0 %v423
        %v529 = vpop.f32.mrb[0].mxu0
        %v530 = vadd.f32 %v445, %v529
        %v531 = vpop.f32.mrb[0].mxu0
        %v532 = vpop.f32.mrb[0].mxu0
        %v533 = vadd.f32 %v445, %v532
        %v534 = vpop.f32.mrb[0].mxu0
        %535 = vdwg.mxu0
        %536 = vst [vmem:[#allocation2 + $0x2] sm:$0xff] %v421
        %537 = vst [vmem:[#allocation2 + $0xa] sm:$0xff] %v422
        %v538 = vld [vmem:[#allocation2] sm:$0xff]
        %v539 = vld [vmem:[#allocation2 + $0x8] sm:$0xff]
        %v540 = vld [vmem:[#allocation2 + $0x1] sm:$0xff]
        %v541 = vld [vmem:[#allocation2 + $0x9] sm:$0xff]
        %v542 = vld [vmem:[#allocation2 + $0x2] sm:$0xff]
        %v543 = vld [vmem:[#allocation2 + $0xa] sm:$0xff]
        %v544 = vpack.c.bf16 %v539, %v538
        %v545 = vpack.c.bf16 %v541, %v540
        %v546 = vpack.c.bf16 %v543, %v542
        %v547 = vld [vmem:[#allocation3] sm:$0xf]
        %v548 = vld [vmem:[#allocation3 + $0x4] sm:$0xf]
        %v549 = vld [vmem:[#allocation3 + $0x8] sm:$0xf]
        %v550 = vld [vmem:[#allocation3 + $0xc] sm:$0xf]
        %v551 = vld [vmem:[#allocation3 + $0x10] sm:$0xf]
        %v552 = vld [vmem:[#allocation3 + $0x14] sm:$0xf]
        %v553 = vld [vmem:[#allocation3 + $0x18] sm:$0xf]
        %v554 = vld [vmem:[#allocation3 + $0x1c] sm:$0xf]
        %v555 = vld [vmem:[#allocation3 + $0x20] sm:$0xf]
        %v556 = vld [vmem:[#allocation3 + $0x24] sm:$0xf]
        %v557 = vld [vmem:[#allocation3 + $0x28] sm:$0xf]
        %v558 = vld [vmem:[#allocation3 + $0x2c] sm:$0xf]
        %v559 = vld [vmem:[#allocation3 + $0x30] sm:$0xf]
        %v560 = vld [vmem:[#allocation3 + $0x34] sm:$0xf]
        %v561 = vld [vmem:[#allocation3 + $0x38] sm:$0xf]
        %v562 = vld [vmem:[#allocation3 + $0x3c] sm:$0xf]
        %v563 = vld [vmem:[#allocation3 + $0x40] sm:$0xf]
        %v564 = vld [vmem:[#allocation3 + $0x44] sm:$0xf]
        %v565 = vld [vmem:[#allocation3 + $0x48] sm:$0xf]
        %v566 = vld [vmem:[#allocation3 + $0x4c] sm:$0xf]
        %v567 = vld [vmem:[#allocation3 + $0x50] sm:$0xf]
        %v568 = vld [vmem:[#allocation3 + $0x54] sm:$0xf]
        %v569 = vld [vmem:[#allocation3 + $0x58] sm:$0xf]
        %v570 = vld [vmem:[#allocation3 + $0x5c] sm:$0xf]
        %v571 = vld [vmem:[#allocation3 + $0x60] sm:$0xf]
        %v572 = vld [vmem:[#allocation3 + $0x64] sm:$0xf]
        %v573 = vld [vmem:[#allocation3 + $0x68] sm:$0xf]
        %v574 = vld [vmem:[#allocation3 + $0x6c] sm:$0xf]
        %v575 = vld [vmem:[#allocation3 + $0x70] sm:$0xf]
        %v576 = vld [vmem:[#allocation3 + $0x74] sm:$0xf]
        %v577 = vld [vmem:[#allocation3 + $0x78] sm:$0xf]
        %v578 = vld [vmem:[#allocation3 + $0x7c] sm:$0xf]
        %v579 = vld [vmem:[#allocation3 + $0x80] sm:$0xf]
        %v580 = vld [vmem:[#allocation3 + $0x84] sm:$0xf]
        %v581 = vld [vmem:[#allocation3 + $0x88] sm:$0xf]
        %v582 = vld [vmem:[#allocation3 + $0x8c] sm:$0xf]
        %v583 = vld [vmem:[#allocation3 + $0x90] sm:$0xf]
        %v584 = vld [vmem:[#allocation3 + $0x94] sm:$0xf]
        %v585 = vld [vmem:[#allocation3 + $0x98] sm:$0xf]
        %v586 = vld [vmem:[#allocation3 + $0x9c] sm:$0xf]
        %v587 = vld [vmem:[#allocation3 + $0xa0] sm:$0xf]
        %v588 = vld [vmem:[#allocation3 + $0xa4] sm:$0xf]
        %v589 = vld [vmem:[#allocation3 + $0xa8] sm:$0xf]
        %v590 = vld [vmem:[#allocation3 + $0xac] sm:$0xf]
        %v591 = vld [vmem:[#allocation3 + $0xb0] sm:$0xf]
        %v592 = vld [vmem:[#allocation3 + $0xb4] sm:$0xf]
        %v593 = vld [vmem:[#allocation3 + $0xb8] sm:$0xf]
        %v594 = vld [vmem:[#allocation3 + $0xbc] sm:$0xf]
        %v595 = vld [vmem:[%s4] sm:$0x1]
        %v597 = vlaneseq
        %v598 = vshrl.u32 %v597, 7
        %v599 = vsub.s32 0, %v598
        %v600 = vrot.slane %v595, %v599
        %v650 = vunpack.c.l.b16 %v547
        %v651 = vunpack.c.l.b16 %v548
        %v652 = vunpack.c.l.b16 %v549
        %v653 = vunpack.c.l.b16 %v550
        %v654 = vunpack.c.l.b16 %v551
        %v655 = vunpack.c.l.b16 %v552
        %v656 = vunpack.c.l.b16 %v553
        %v657 = vunpack.c.l.b16 %v554
        %v658 = vunpack.c.l.b16 %v555
        %v659 = vunpack.c.l.b16 %v556
        %v660 = vunpack.c.l.b16 %v557
        %v661 = vunpack.c.l.b16 %v558
        %v662 = vunpack.c.l.b16 %v559
        %v663 = vunpack.c.l.b16 %v560
        %v664 = vunpack.c.l.b16 %v561
        %v665 = vunpack.c.l.b16 %v562
        %v666 = vunpack.c.l.b16 %v563
        %v667 = vunpack.c.l.b16 %v564
        %v668 = vunpack.c.l.b16 %v565
        %v669 = vunpack.c.l.b16 %v566
        %v670 = vunpack.c.l.b16 %v567
        %v671 = vunpack.c.l.b16 %v568
        %v672 = vunpack.c.l.b16 %v569
        %v673 = vunpack.c.l.b16 %v570
        %v674 = vunpack.c.l.b16 %v571
        %v675 = vunpack.c.l.b16 %v572
        %v676 = vunpack.c.l.b16 %v573
        %v677 = vunpack.c.l.b16 %v574
        %v678 = vunpack.c.l.b16 %v575
        %v679 = vunpack.c.l.b16 %v576
        %v680 = vunpack.c.l.b16 %v577
        %v681 = vunpack.c.l.b16 %v578
        %v682 = vunpack.c.l.b16 %v579
        %v683 = vunpack.c.l.b16 %v580
        %v684 = vunpack.c.l.b16 %v581
        %v685 = vunpack.c.l.b16 %v582
        %v686 = vunpack.c.l.b16 %v583
        %v687 = vunpack.c.l.b16 %v584
        %v688 = vunpack.c.l.b16 %v585
        %v689 = vunpack.c.l.b16 %v586
        %v690 = vunpack.c.l.b16 %v587
        %v691 = vunpack.c.l.b16 %v588
        %v692 = vunpack.c.l.b16 %v589
        %v693 = vunpack.c.l.b16 %v590
        %v694 = vunpack.c.l.b16 %v591
        %v695 = vunpack.c.l.b16 %v592
        %v696 = vunpack.c.l.b16 %v593
        %v697 = vunpack.c.l.b16 %v594
        %v698 = vpack.c.b16 %v651, %v650
        %v699 = vpack.c.b16 %v653, %v652
        %v700 = vpack.c.b16 %v655, %v654
        %v701 = vpack.c.b16 %v657, %v656
        %v702 = vpack.c.b16 %v659, %v658
        %v703 = vpack.c.b16 %v661, %v660
        %v704 = vpack.c.b16 %v663, %v662
        %v705 = vpack.c.b16 %v665, %v664
        %v706 = vpack.c.b16 %v667, %v666
        %v707 = vpack.c.b16 %v669, %v668
        %v708 = vpack.c.b16 %v671, %v670
        %v709 = vpack.c.b16 %v673, %v672
        %v710 = vpack.c.b16 %v675, %v674
        %v711 = vpack.c.b16 %v677, %v676
        %v712 = vpack.c.b16 %v679, %v678
        %v713 = vpack.c.b16 %v681, %v680
        %v714 = vpack.c.b16 %v683, %v682
        %v715 = vpack.c.b16 %v685, %v684
        %v716 = vpack.c.b16 %v687, %v686
        %v717 = vpack.c.b16 %v689, %v688
        %v718 = vpack.c.b16 %v691, %v690
        %v719 = vpack.c.b16 %v693, %v692
        %v720 = vpack.c.b16 %v695, %v694
        %v721 = vpack.c.b16 %v697, %v696
        %746 = vmatprep.subr.bf16.mxu0 0
        %747 = vmatpush1.bf16.msra.mxu0 %v698
        %748 = vmatprep.subr.bf16.mxu0 0
        %749 = vmatpush1.bf16.msra.mxu0 %v699
        %750 = vmatprep.subr.bf16.mxu0 0
        %751 = vmatpush1.bf16.msra.mxu0 %v700
        %752 = vmatprep.subr.bf16.mxu0 0
        %753 = vmatpush1.bf16.msra.mxu0 %v701
        %754 = vmatprep.subr.bf16.mxu0 0
        %755 = vmatpush1.bf16.msra.mxu0 %v702
        %756 = vmatprep.subr.bf16.mxu0 0
        %757 = vmatpush1.bf16.msra.mxu0 %v703
        %758 = vmatprep.subr.bf16.mxu0 0
        %759 = vmatpush1.bf16.msra.mxu0 %v704
        %760 = vmatprep.subr.bf16.mxu0 0
        %761 = vmatpush1.bf16.msra.mxu0 %v705
        %762 = vmatprep.subr.bf16.mxu0 0
        %763 = vmatpush1.bf16.msra.mxu0 %v706
        %764 = vmatprep.subr.bf16.mxu0 0
        %765 = vmatpush1.bf16.msra.mxu0 %v707
        %766 = vmatprep.subr.bf16.mxu0 0
        %767 = vmatpush1.bf16.msra.mxu0 %v708
        %768 = vmatprep.subr.bf16.mxu0 0
        %769 = vmatpush1.bf16.msra.mxu0 %v709
        %770 = vmatprep.subr.bf16.mxu0 0
        %771 = vmatpush1.bf16.msra.mxu0 %v710
        %772 = vmatprep.subr.bf16.mxu0 0
        %773 = vmatpush1.bf16.msra.mxu0 %v711
        %774 = vmatprep.subr.bf16.mxu0 0
        %775 = vmatpush1.bf16.msra.mxu0 %v712
        %776 = vmatprep.subr.bf16.mxu0 0
        %777 = vmatpush1.bf16.msra.mxu0 %v713
        %778 = vmatprep.mubr.bf16.mxu0 %v545
        %779 = vmatmul.mubr.bf16.gmra.mrb[0].mxu0 %v544
        %v780 = vpop.f32.mrb[0].mxu0
        %v781 = vadd.f32 %v600, %v780
        %v782 = vpop.f32.mrb[0].mxu0
        %v783 = vpop.f32.mrb[0].mxu0
        %v784 = vadd.f32 %v600, %v783
        %v785 = vpop.f32.mrb[0].mxu0
        %786 = vdwg.mxu0
        %787 = vmatprep.subr.bf16.mxu0 0
        %788 = vmatpush1.bf16.msra.mxu0 %v714
        %789 = vmatprep.subr.bf16.mxu0 0
        %790 = vmatpush1.bf16.msra.mxu0 %v715
        %791 = vmatprep.subr.bf16.mxu0 0
        %792 = vmatpush1.bf16.msra.mxu0 %v716
        %793 = vmatprep.subr.bf16.mxu0 0
        %794 = vmatpush1.bf16.msra.mxu0 %v717
        %795 = vmatprep.subr.bf16.mxu0 0
        %796 = vmatpush1.bf16.msra.mxu0 %v718
        %797 = vmatprep.subr.bf16.mxu0 0
        %798 = vmatpush1.bf16.msra.mxu0 %v719
        %799 = vmatprep.subr.bf16.mxu0 0
        %800 = vmatpush1.bf16.msra.mxu0 %v720
        %801 = vmatprep.subr.bf16.mxu0 0
        %802 = vmatpush1.bf16.msra.mxu0 %v721
        %803 = vmatprep.subr.bf16.mxu0 0
        %804 = vmatpush1.bf16.msra.mxu0 0
        %805 = vmatprep.subr.bf16.mxu0 0
        %806 = vmatpush1.bf16.msra.mxu0 0
        %807 = vmatprep.subr.bf16.mxu0 0
        %808 = vmatpush1.bf16.msra.mxu0 0
        %809 = vmatprep.subr.bf16.mxu0 0
        %810 = vmatpush1.bf16.msra.mxu0 0
        %811 = vmatprep.subr.bf16.mxu0 0
        %812 = vmatpush1.bf16.msra.mxu0 0
        %813 = vmatprep.subr.bf16.mxu0 0
        %814 = vmatpush1.bf16.msra.mxu0 0
        %815 = vmatprep.subr.bf16.mxu0 0
        %816 = vmatpush1.bf16.msra.mxu0 0
        %817 = vmatprep.subr.bf16.mxu0 0
        %818 = vmatpush1.bf16.msra.mxu0 0
        %819 = vmatprep.mubr.bf16.mxu0 0
        %820 = vmatmul.mubr.bf16.gmra.mrb[0].mxu0 %v546
        %v821 = vpop.f32.mrb[0].mxu0
        %v822 = vadd.f32 %v781, %v821
        %v823 = vpop.f32.mrb[0].mxu0
        %v824 = vpop.f32.mrb[0].mxu0
        %v825 = vadd.f32 %v784, %v824
        %v826 = vpop.f32.mrb[0].mxu0
        %827 = vdwg.mxu0
        %v828 = vmax.f32 %v822, 0.0
        %v829 = vmax.f32 %v825, 0.0
        %830 = vst [vmem:[#allocation2 + $0x2] sm:$0xff] %v828
        %831 = vst [vmem:[#allocation2 + $0xa] sm:$0xff] %v829
        %v832 = vld [vmem:[#allocation2] sm:$0xff]
        %v833 = vld [vmem:[#allocation2 + $0x8] sm:$0xff]
        %v834 = vld [vmem:[#allocation2 + $0x1] sm:$0xff]
        %v835 = vld [vmem:[#allocation2 + $0x9] sm:$0xff]
        %v836 = vld [vmem:[#allocation2 + $0x2] sm:$0xff]
        %v837 = vld [vmem:[#allocation2 + $0xa] sm:$0xff]
        %v838 = vpack.c.bf16 %v833, %v832
        %v839 = vpack.c.bf16 %v835, %v834
        %v840 = vpack.c.bf16 %v837, %v836
        %v841 = vld [vmem:[#allocation5] sm:$0xf]
        %v842 = vld [vmem:[#allocation5 + $0x4] sm:$0xf]
        %v843 = vld [vmem:[#allocation5 + $0x8] sm:$0xf]
        %v844 = vld [vmem:[#allocation5 + $0xc] sm:$0xf]
        %v845 = vld [vmem:[#allocation5 + $0x10] sm:$0xf]
        %v846 = vld [vmem:[#allocation5 + $0x14] sm:$0xf]
        %v847 = vld [vmem:[#allocation5 + $0x18] sm:$0xf]
        %v848 = vld [vmem:[#allocation5 + $0x1c] sm:$0xf]
        %v849 = vld [vmem:[#allocation5 + $0x20] sm:$0xf]
        %v850 = vld [vmem:[#allocation5 + $0x24] sm:$0xf]
        %v851 = vld [vmem:[#allocation5 + $0x28] sm:$0xf]
        %v852 = vld [vmem:[#allocation5 + $0x2c] sm:$0xf]
        %v853 = vld [vmem:[#allocation5 + $0x30] sm:$0xf]
        %v854 = vld [vmem:[#allocation5 + $0x34] sm:$0xf]
        %v855 = vld [vmem:[#allocation5 + $0x38] sm:$0xf]
        %v856 = vld [vmem:[#allocation5 + $0x3c] sm:$0xf]
        %v857 = vld [vmem:[#allocation5 + $0x40] sm:$0xf]
        %v858 = vld [vmem:[#allocation5 + $0x44] sm:$0xf]
        %v859 = vld [vmem:[#allocation5 + $0x48] sm:$0xf]
        %v860 = vld [vmem:[#allocation5 + $0x4c] sm:$0xf]
        %v861 = vld [vmem:[#allocation5 + $0x50] sm:$0xf]
        %v862 = vld [vmem:[#allocation5 + $0x54] sm:$0xf]
        %v863 = vld [vmem:[#allocation5 + $0x58] sm:$0xf]
        %v864 = vld [vmem:[#allocation5 + $0x5c] sm:$0xf]
        %v865 = vld [vmem:[#allocation5 + $0x60] sm:$0xf]
        %v866 = vld [vmem:[#allocation5 + $0x64] sm:$0xf]
        %v867 = vld [vmem:[#allocation5 + $0x68] sm:$0xf]
        %v868 = vld [vmem:[#allocation5 + $0x6c] sm:$0xf]
        %v869 = vld [vmem:[#allocation5 + $0x70] sm:$0xf]
        %v870 = vld [vmem:[#allocation5 + $0x74] sm:$0xf]
        %v871 = vld [vmem:[#allocation5 + $0x78] sm:$0xf]
        %v872 = vld [vmem:[#allocation5 + $0x7c] sm:$0xf]
        %v873 = vld [vmem:[#allocation5 + $0x80] sm:$0xf]
        %v874 = vld [vmem:[#allocation5 + $0x84] sm:$0xf]
        %v875 = vld [vmem:[#allocation5 + $0x88] sm:$0xf]
        %v876 = vld [vmem:[#allocation5 + $0x8c] sm:$0xf]
        %v877 = vld [vmem:[#allocation5 + $0x90] sm:$0xf]
        %v878 = vld [vmem:[#allocation5 + $0x94] sm:$0xf]
        %v879 = vld [vmem:[#allocation5 + $0x98] sm:$0xf]
        %v880 = vld [vmem:[#allocation5 + $0x9c] sm:$0xf]
        %v881 = vld [vmem:[#allocation5 + $0xa0] sm:$0xf]
        %v882 = vld [vmem:[#allocation5 + $0xa4] sm:$0xf]
        %v883 = vld [vmem:[#allocation5 + $0xa8] sm:$0xf]
        %v884 = vld [vmem:[#allocation5 + $0xac] sm:$0xf]
        %v885 = vld [vmem:[#allocation5 + $0xb0] sm:$0xf]
        %v886 = vld [vmem:[#allocation5 + $0xb4] sm:$0xf]
        %v887 = vld [vmem:[#allocation5 + $0xb8] sm:$0xf]
        %v888 = vld [vmem:[#allocation5 + $0xbc] sm:$0xf]
        %v889 = vld [vmem:[%s6] sm:$0x1]
        %v891 = vlaneseq
        %v892 = vshrl.u32 %v891, 7
        %v893 = vsub.s32 0, %v892
        %v894 = vrot.slane %v889, %v893
        %v944 = vunpack.c.l.b16 %v841
        %v945 = vunpack.c.l.b16 %v842
        %v946 = vunpack.c.l.b16 %v843
        %v947 = vunpack.c.l.b16 %v844
        %v948 = vunpack.c.l.b16 %v845
        %v949 = vunpack.c.l.b16 %v846
        %v950 = vunpack.c.l.b16 %v847
        %v951 = vunpack.c.l.b16 %v848
        %v952 = vunpack.c.l.b16 %v849
        %v953 = vunpack.c.l.b16 %v850
        %v954 = vunpack.c.l.b16 %v851
        %v955 = vunpack.c.l.b16 %v852
        %v956 = vunpack.c.l.b16 %v853
        %v957 = vunpack.c.l.b16 %v854
        %v958 = vunpack.c.l.b16 %v855
        %v959 = vunpack.c.l.b16 %v856
        %v960 = vunpack.c.l.b16 %v857
        %v961 = vunpack.c.l.b16 %v858
        %v962 = vunpack.c.l.b16 %v859
        %v963 = vunpack.c.l.b16 %v860
        %v964 = vunpack.c.l.b16 %v861
        %v965 = vunpack.c.l.b16 %v862
        %v966 = vunpack.c.l.b16 %v863
        %v967 = vunpack.c.l.b16 %v864
        %v968 = vunpack.c.l.b16 %v865
        %v969 = vunpack.c.l.b16 %v866
        %v970 = vunpack.c.l.b16 %v867
        %v971 = vunpack.c.l.b16 %v868
        %v972 = vunpack.c.l.b16 %v869
        %v973 = vunpack.c.l.b16 %v870
        %v974 = vunpack.c.l.b16 %v871
        %v975 = vunpack.c.l.b16 %v872
        %v976 = vunpack.c.l.b16 %v873
        %v977 = vunpack.c.l.b16 %v874
        %v978 = vunpack.c.l.b16 %v875
        %v979 = vunpack.c.l.b16 %v876
        %v980 = vunpack.c.l.b16 %v877
        %v981 = vunpack.c.l.b16 %v878
        %v982 = vunpack.c.l.b16 %v879
        %v983 = vunpack.c.l.b16 %v880
        %v984 = vunpack.c.l.b16 %v881
        %v985 = vunpack.c.l.b16 %v882
        %v986 = vunpack.c.l.b16 %v883
        %v987 = vunpack.c.l.b16 %v884
        %v988 = vunpack.c.l.b16 %v885
        %v989 = vunpack.c.l.b16 %v886
        %v990 = vunpack.c.l.b16 %v887
        %v991 = vunpack.c.l.b16 %v888
        %v992 = vpack.c.b16 %v945, %v944
        %v993 = vpack.c.b16 %v947, %v946
        %v994 = vpack.c.b16 %v949, %v948
        %v995 = vpack.c.b16 %v951, %v950
        %v996 = vpack.c.b16 %v953, %v952
        %v997 = vpack.c.b16 %v955, %v954
        %v998 = vpack.c.b16 %v957, %v956
        %v999 = vpack.c.b16 %v959, %v958
        %v1000 = vpack.c.b16 %v961, %v960
        %v1001 = vpack.c.b16 %v963, %v962
        %v1002 = vpack.c.b16 %v965, %v964
        %v1003 = vpack.c.b16 %v967, %v966
        %v1004 = vpack.c.b16 %v969, %v968
        %v1005 = vpack.c.b16 %v971, %v970
        %v1006 = vpack.c.b16 %v973, %v972
        %v1007 = vpack.c.b16 %v975, %v974
        %v1008 = vpack.c.b16 %v977, %v976
        %v1009 = vpack.c.b16 %v979, %v978
        %v1010 = vpack.c.b16 %v981, %v980
        %v1011 = vpack.c.b16 %v983, %v982
        %v1012 = vpack.c.b16 %v985, %v984
        %v1013 = vpack.c.b16 %v987, %v986
        %v1014 = vpack.c.b16 %v989, %v988
        %v1015 = vpack.c.b16 %v991, %v990
        %1040 = vmatprep.subr.bf16.mxu0 0
        %1041 = vmatpush1.bf16.msra.mxu0 %v992
        %1042 = vmatprep.subr.bf16.mxu0 0
        %1043 = vmatpush1.bf16.msra.mxu0 %v993
        %1044 = vmatprep.subr.bf16.mxu0 0
        %1045 = vmatpush1.bf16.msra.mxu0 %v994
        %1046 = vmatprep.subr.bf16.mxu0 0
        %1047 = vmatpush1.bf16.msra.mxu0 %v995
        %1048 = vmatprep.subr.bf16.mxu0 0
        %1049 = vmatpush1.bf16.msra.mxu0 %v996
        %1050 = vmatprep.subr.bf16.mxu0 0
        %1051 = vmatpush1.bf16.msra.mxu0 %v997
        %1052 = vmatprep.subr.bf16.mxu0 0
        %1053 = vmatpush1.bf16.msra.mxu0 %v998
        %1054 = vmatprep.subr.bf16.mxu0 0
        %1055 = vmatpush1.bf16.msra.mxu0 %v999
        %1056 = vmatprep.subr.bf16.mxu0 0
        %1057 = vmatpush1.bf16.msra.mxu0 %v1000
        %1058 = vmatprep.subr.bf16.mxu0 0
        %1059 = vmatpush1.bf16.msra.mxu0 %v1001
        %1060 = vmatprep.subr.bf16.mxu0 0
        %1061 = vmatpush1.bf16.msra.mxu0 %v1002
        %1062 = vmatprep.subr.bf16.mxu0 0
        %1063 = vmatpush1.bf16.msra.mxu0 %v1003
        %1064 = vmatprep.subr.bf16.mxu0 0
        %1065 = vmatpush1.bf16.msra.mxu0 %v1004
        %1066 = vmatprep.subr.bf16.mxu0 0
        %1067 = vmatpush1.bf16.msra.mxu0 %v1005
        %1068 = vmatprep.subr.bf16.mxu0 0
        %1069 = vmatpush1.bf16.msra.mxu0 %v1006
        %1070 = vmatprep.subr.bf16.mxu0 0
        %1071 = vmatpush1.bf16.msra.mxu0 %v1007
        %1072 = vmatprep.mubr.bf16.mxu0 %v839
        %1073 = vmatmul.mubr.bf16.gmra.mrb[0].mxu0 %v838
        %v1074 = vpop.f32.mrb[0].mxu0
        %v1075 = vadd.f32 %v894, %v1074
        %v1076 = vpop.f32.mrb[0].mxu0
        %v1077 = vpop.f32.mrb[0].mxu0
        %v1078 = vadd.f32 %v894, %v1077
        %v1079 = vpop.f32.mrb[0].mxu0
        %1080 = vdwg.mxu0
        %1081 = vmatprep.subr.bf16.mxu0 0
        %1082 = vmatpush1.bf16.msra.mxu0 %v1008
        %1083 = vmatprep.subr.bf16.mxu0 0
        %1084 = vmatpush1.bf16.msra.mxu0 %v1009
        %1085 = vmatprep.subr.bf16.mxu0 0
        %1086 = vmatpush1.bf16.msra.mxu0 %v1010
        %1087 = vmatprep.subr.bf16.mxu0 0
        %1088 = vmatpush1.bf16.msra.mxu0 %v1011
        %1089 = vmatprep.subr.bf16.mxu0 0
        %1090 = vmatpush1.bf16.msra.mxu0 %v1012
        %1091 = vmatprep.subr.bf16.mxu0 0
        %1092 = vmatpush1.bf16.msra.mxu0 %v1013
        %1093 = vmatprep.subr.bf16.mxu0 0
        %1094 = vmatpush1.bf16.msra.mxu0 %v1014
        %1095 = vmatprep.subr.bf16.mxu0 0
        %1096 = vmatpush1.bf16.msra.mxu0 %v1015
        %1097 = vmatprep.subr.bf16.mxu0 0
        %1098 = vmatpush1.bf16.msra.mxu0 0
        %1099 = vmatprep.subr.bf16.mxu0 0
        %1100 = vmatpush1.bf16.msra.mxu0 0
        %1101 = vmatprep.subr.bf16.mxu0 0
        %1102 = vmatpush1.bf16.msra.mxu0 0
        %1103 = vmatprep.subr.bf16.mxu0 0
        %1104 = vmatpush1.bf16.msra.mxu0 0
        %1105 = vmatprep.subr.bf16.mxu0 0
        %1106 = vmatpush1.bf16.msra.mxu0 0
        %1107 = vmatprep.subr.bf16.mxu0 0
        %1108 = vmatpush1.bf16.msra.mxu0 0
        %1109 = vmatprep.subr.bf16.mxu0 0
        %1110 = vmatpush1.bf16.msra.mxu0 0
        %1111 = vmatprep.subr.bf16.mxu0 0
        %1112 = vmatpush1.bf16.msra.mxu0 0
        %1113 = vmatprep.mubr.bf16.mxu0 0
        %1114 = vmatmul.mubr.bf16.gmra.mrb[0].mxu0 %v840
        %v1115 = vpop.f32.mrb[0].mxu0
        %v1116 = vadd.f32 %v1075, %v1115
        %v1117 = vpop.f32.mrb[0].mxu0
        %v1118 = vpop.f32.mrb[0].mxu0
        %v1119 = vadd.f32 %v1078, %v1118
        %v1120 = vpop.f32.mrb[0].mxu0
        %1121 = vdwg.mxu0
        %v1122 = vmax.f32 %v1116, 0.0
        %v1123 = vmax.f32 %v1119, 0.0
        %v1124 = vadd.f32 %v1122, %v530
        %v1125 = vadd.f32 %v1123, %v533
        %v1126 = vmax.f32 %v1124, 0.0
        %v1127 = vmax.f32 %v1125, 0.0
        %1128 = vst [vmem:[#allocation2 + $0x2] sm:$0xff] %v1126
        %1129 = vst [vmem:[#allocation2 + $0xa] sm:$0xff] %v1127
        %s1130 = scalar_lea.vmem [#allocation2], 2
        %v1131 = vld [vmem:[%s1130] ss:$2 sm:$0xff]
        %s1132 = scalar_lea.vmem [#allocation2], 3
        %v1133 = vld [vmem:[%s1132] ss:$2 sm:$0xff]
        %v1134 = vadd.f32 %v1131, %v1133
        %v1135 = vmul.f32 %v1134, 0.5
        %v1136 = vpack.c.bf16 %v1135, %v1135
        %1137 = vst [vmem:[%s394] sm:$0xf] %v1136
        %v1138 = vunpack.c.l.bf16 %v1136
        %v1139 = vrot.slane %v1138, 4
        %v1140 = vadd.f32 %v1138, %v1139
        %v1141 = vrot.slane %v1140, 2
        %v1142 = vadd.f32 %v1140, %v1141
        %v1143 = vrot.slane %v1142, 1
        %v1144 = vadd.f32 %v1142, %v1143
        %1145 = vst [vmem:[%s398] sm:$0x1] %v1144
        %v1146 = vmul.f32 %v1138, %v1138
        %v1147 = vrot.slane %v1146, 4
        %v1148 = vadd.f32 %v1146, %v1147
        %v1149 = vrot.slane %v1148, 2
        %v1150 = vadd.f32 %v1148, %v1149
        %v1151 = vrot.slane %v1150, 1
        %v1152 = vadd.f32 %v1150, %v1151
        %1153 = vst [vmem:[%s398 + $0x1] sm:$0x1] %v1152
        %p1154 = scmp.lt.s32.totalorder %s24, 1
        %s1155 = scalar_select %p1154, %s24, 1
        %s1156 = smul.addr %s1155, 4
        %s1157 = scalar_lea.vmem %s9, %s1156
        %p1158 = scmp.lt.s32.totalorder %s24, 1
        %s1159 = scalar_select %p1158, %s24, 1
        %s1160 = smul.addr %s1159, 2
        %s1161 = scalar_lea.vmem %s10, %s1160
        // Predicated region
        $region65: #{encoder_s_forward.4} parent=55 // pred_check
          %p1162 = pneg %p236
        $region66: #{encoder_s_forward.4} parent=55 // pred_check_branch
          %1164 = sbr.rel (%p1162) target = $region68
        $region67: #{encoder_s_forward.4} parent=55 // pred_region
          _
        $region68: #{encoder_s_forward.4} parent=55 // pred_fallthru
          _
        // Predicated region
        $region69: #{encoder_s_forward.4} parent=55 // pred_check
          %p1165 = pneg %p262
        $region70: #{encoder_s_forward.4} parent=55 // pred_check_branch
          %1167 = sbr.rel (%p1165) target = $region72
        $region71: #{encoder_s_forward.4} parent=55 // pred_region
          _
        $region72: #{encoder_s_forward.4} parent=55 // pred_fallthru
          _
      $region56: #{encoder_s_forward.4} parent=5 // pred_fallthru
        _
      %p1168 = scmp.le.s32.totalorder 2, %s19
      // Predicated region
      $region73: #{encoder_s_forward.4} parent=5 // pred_check
        %p1169 = pneg %p1168
      $region74: #{encoder_s_forward.4} parent=5 // pred_check_branch
        %1171 = sbr.rel (%p1169) target = $region76
      $region75: #{encoder_s_forward.4} parent=5 // pred_region
        %s1172 = ssub.s32 %s19, 2
        // Predicated region
        $region77: #{encoder_s_forward.4} parent=75 // pred_check
          %p1173 = pneg %p242
        $region78: #{encoder_s_forward.4} parent=75 // pred_check_branch
          %1175 = sbr.rel (%p1173) target = $region80
        $region79: #{encoder_s_forward.4} parent=75 // pred_region
          %p1176 = scmp.lt.s32.totalorder %s25, 1
          %s1177 = scalar_select %p1176, %s25, 1
          %s1178 = smul.addr %s1177, 4
          %s1179 = scalar_lea.vmem %s9, %s1178
        $region80: #{encoder_s_forward.4} parent=75 // pred_fallthru
          _
        // Predicated region
        $region81: #{encoder_s_forward.4} parent=75 // pred_check
          %p1180 = pneg %p268
        $region82: #{encoder_s_forward.4} parent=75 // pred_check_branch
          %1182 = sbr.rel (%p1180) target = $region84
        $region83: #{encoder_s_forward.4} parent=75 // pred_region
          %p1183 = scmp.lt.s32.totalorder %s25, 1
          %s1184 = scalar_select %p1183, %s25, 1
          %s1185 = smul.addr %s1184, 2
          %s1186 = scalar_lea.vmem %s10, %s1185
        $region84: #{encoder_s_forward.4} parent=75 // pred_fallthru
          _
      $region76: #{encoder_s_forward.4} parent=5 // pred_fallthru
        _
    $region6: #{encoder_s_forward.4} parent=1 // loop_footer
      %s23 = sadd.s32 1, %s19
    $region7: #{encoder_s_forward.4} parent=1 // loop_footer_branch
      %18 = sbr.rel target = $region3
    $region8: #{encoder_s_forward.4} parent=1 // loop_exit
      _
    %1187 = vsyncpa [#allocation4], 1
    %s1188 = scalar_lea.sflag [#allocation4], 1
    %1189 = vsyncpa %s1188, 1
    %1190 = vsyncpa [#allocation6], 1

</llo_original>
